<compile_context>
chip_gen: v6e
topology: v6e:2x2x1
jax: 0.10.0
libtpu: 0.0.40
codegen_flags: <defaults>
</compile_context>

<pallas_src>
import math
import jax
import jax.numpy as jnp
from jax.experimental import pallas as pl
from jax.experimental.pallas import tpu as pltpu

# ---- small, deterministic config (stands in for RobertaConfig / args) ----
B, S, H, NH, FF, L = 2, 16, 32, 4, 64, 2   # batch, seq, hidden, heads, ffn, layers
DH = H // NH
VOCAB = 50
NCLS = 4          # clss.size(1): number of sentence slots
NTOPIC = 8        # args.ntopic

# lane-dense packed output slab layout (each section padded to a 128-lane boundary)
SENT_W = NCLS * H                                   # 128
DOC_OFF = ((SENT_W + 127) // 128) * 128             # 128
REC_OFF = DOC_OFF + 128                             # 256
SCORE_OFF = REC_OFF + 128                           # 384
OUT_W = SCORE_OFF + 128                             # 512
AUX_W = 128                                         # [mask(S) | mask_cls(NCLS) | pad]


def _layer_norm(x, g, b, eps=1e-5):
    mu = jnp.mean(x, axis=-1, keepdims=True)
    var = jnp.mean((x - mu) ** 2, axis=-1, keepdims=True)
    return (x - mu) * jax.lax.rsqrt(var + eps) * g + b


# --------------------------------------------------------------------------
# The fused kernel: one grid step = one (document, encoder layer);
# epilogue (pooling + NTM + classifier) runs after the last layer.
# --------------------------------------------------------------------------
def summarizer_kernel(emb_ref, aux_ref, clss_ref, embg_ref, embb_ref,
                      wqkv_ref, bqkv_ref, wo_ref, bo_ref, g1_ref, be1_ref,
                      w1_ref, b1_ref, w2_ref, b2_ref, g2_ref, be2_ref,
                      whid_ref, bhid_ref, topic_ref, wcls_ref, bcls_ref,
                      out_ref, h_ref):
    l = pl.program_id(1)

    # ---- Bert embedding layernorm: initialise the resident activation at layer 0 ----
    @pl.when(l == 0)
    def _():
        h_ref[...] = _layer_norm(emb_ref[0], embg_ref[...], embb_ref[...])    # (S, H)

    aux = aux_ref[0]                                  # (1, AUX_W): [mask | mask_cls | pad]
    neg = (aux[:, 0:S] - 1.0) * 1e9                   # (1, S) additive key-pad mask (hoisted)

    h = h_ref[...]                                    # (S, H) f32, VMEM-resident
    hb = h.astype(jnp.bfloat16)

    # fused Q/K/V projection (1/sqrt(DH) folded into wq host-side); bf16 MXU, f32 accumulate
    qkv = jnp.dot(hb, wqkv_ref[0], preferred_element_type=jnp.float32) + bqkv_ref[0]   # (S,3H)

    ctx_heads = []
    for hd in range(NH):                              # NH=4, static unroll (2-D MXU dots)
        c0 = hd * DH
        q_h = qkv[:, c0:c0 + DH].astype(jnp.bfloat16)
        k_h = qkv[:, H + c0:H + c0 + DH].astype(jnp.bfloat16)
        v_h = qkv[:, 2 * H + c0:2 * H + c0 + DH].astype(jnp.bfloat16)
        sc = jnp.einsum('qd,kd->qk', q_h, k_h, preferred_element_type=jnp.float32) + neg
        sc = sc - jnp.max(sc, axis=-1, keepdims=True)
        p = jnp.exp(sc)
        p = p * pl.reciprocal(jnp.sum(p, axis=-1, keepdims=True), approx=True)
        ctx_heads.append(jnp.dot(p.astype(jnp.bfloat16), v_h,
                                 preferred_element_type=jnp.float32))          # (S, DH)
    ctx = jnp.concatenate(ctx_heads, axis=-1)          # (S, H): free lane concat (H <= 128)
    attn = jnp.dot(ctx.astype(jnp.bfloat16), wo_ref[0],
                   preferred_element_type=jnp.float32) + bo_ref[0]             # ONE (S,H)x(H,H)

    h1 = _layer_norm(h + attn, g1_ref[0], be1_ref[0])
    ff = jnp.dot(h1.astype(jnp.bfloat16), w1_ref[0],
                 preferred_element_type=jnp.float32) + b1_ref[0]
    ff = jax.nn.gelu(ff, approximate=True)
    ff = jnp.dot(ff.astype(jnp.bfloat16), w2_ref[0],
                 preferred_element_type=jnp.float32) + b2_ref[0]
    h_new = _layer_norm(h1 + ff, g2_ref[0], be2_ref[0])
    h_ref[...] = h_new

    # ---- epilogue after the last layer: pooling + NTM + classifier, packed lane-dense ----
    @pl.when(l == L - 1)
    def _():
        top = h_new                                    # (S, H) top_vec of this document
        clss = clss_ref[0]                             # (1, NCLS) int32
        s_col = jax.lax.broadcasted_iota(jnp.int32, (S, 1), 0)   # token positions (sublanes)

        # get_mean_doc: literal torch semantics -- slice length is the last nonzero *index*
        # of clss[i] + 1 (x[i, :nonzero(clss[i])[-1] + 1]), not the token position.
        idx_row = jax.lax.broadcasted_iota(jnp.int32, (1, NCLS), 1)
        k_last = jnp.max(jnp.where(clss != 0, idx_row, -1), axis=1, keepdims=True)   # (1,1)
        doc_mask = (s_col <= k_last).astype(jnp.float32)                             # (S,1)
        doc_cnt = jnp.maximum(k_last + 1, 1).astype(jnp.float32)
        mean_doc = jnp.sum(top * doc_mask, axis=0, keepdims=True) / doc_cnt          # (1,H)

        # NeuralTopicModel: softmax(hid_layer(mean_doc)) @ topic_embeddings
        logits = jnp.dot(mean_doc, whid_ref[...],
                         preferred_element_type=jnp.float32) + bhid_ref[...]
        logits = logits - jnp.max(logits, axis=-1, keepdims=True)
        theta = jnp.exp(logits)
        theta = theta * pl.reciprocal(jnp.sum(theta, axis=-1, keepdims=True), approx=True)
        rec = jnp.dot(theta, topic_ref[...], preferred_element_type=jnp.float32)     # (1,H)

        # get_mean_sent (segment means + the reference loop's break rule) + classifier
        last_c = clss[:, NCLS - 1:NCLS]
        active = jnp.ones((1, 1), jnp.float32)
        sent_vecs, score_cols = [], []
        for c in range(NCLS):                          # NCLS=4, static unroll
            end_c = clss[:, c:c + 1]
            start_c = (clss[:, c - 1:c] + 1) if c > 0 else jnp.zeros((1, 1), jnp.int32)
            seg = ((s_col >= start_c) & (s_col <= end_c)).astype(jnp.float32)        # (S,1)
            cnt = jnp.maximum(end_c - start_c + 1, 1).astype(jnp.float32)
            ms_c = active * jnp.sum(top * seg, axis=0, keepdims=True) / cnt          # (1,H)
            sent_vecs.append(ms_c)
            # TODO(synk): exact topic-aware Classifier body (mean_sent, mask_cls, topic_vecs)
            # is not in the provided source; using the PreSumm baseline sigmoid(Linear(H,1)).
            score_cols.append(jnp.sum(ms_c * wcls_ref[...], axis=-1, keepdims=True)
                              + bcls_ref[...])                                       # (1,1)
            if c < NCLS - 1:
                brk = (end_c == last_c) | (clss[:, c + 1:c + 2] == 0)
                active = active * (1.0 - brk.astype(jnp.float32))

        mean_sent = jnp.concatenate(sent_vecs, axis=-1)                              # (1,NCLS*H)
        mcls = aux[:, S:S + NCLS]                                                    # (1,NCLS)
        scores = jax.nn.sigmoid(jnp.concatenate(score_cols, axis=-1)) * mcls         # (1,NCLS)

        pieces = [mean_sent]
        if DOC_OFF > SENT_W:
            pieces.append(jnp.zeros((1, DOC_OFF - SENT_W), jnp.float32))
        pieces += [mean_doc, jnp.zeros((1, REC_OFF - DOC_OFF - H), jnp.float32),
                   rec, jnp.zeros((1, SCORE_OFF - REC_OFF - H), jnp.float32),
                   scores, jnp.zeros((1, OUT_W - SCORE_OFF - NCLS), jnp.float32)]
        out_ref[0] = jnp.concatenate(pieces, axis=-1)                                # (1,OUT_W)


# --------------------------------------------------------------------------
# pallas_call wrapper
# --------------------------------------------------------------------------
def _bcast_spec(shape):
    nd = len(shape)
    return pl.BlockSpec(tuple(shape), lambda b, l: (0,) * nd)


def _batch_spec(shape):      # arrays with leading B axis, one document per grid step
    nd = len(shape)
    return pl.BlockSpec((1,) + tuple(shape[1:]), lambda b, l: (b,) + (0,) * (nd - 1))


def _layer_spec(shape):      # per-layer stacked weights: streamed along the layer grid axis
    nd = len(shape)
    return pl.BlockSpec((1,) + tuple(shape[1:]), lambda b, l: (l,) + (0,) * (nd - 1))


def summarizer_pallas(packed, emb, aux, clss_i):
    ins = [emb, aux, clss_i, packed["emb_g"], packed["emb_b"],
           packed["wqkv"], packed["bqkv"], packed["wo"], packed["bo"],
           packed["g1"], packed["be1"], packed["w1"], packed["b1"],
           packed["w2"], packed["b2"], packed["g2"], packed["be2"],
           packed["w_hid"], packed["b_hid"], packed["topic_emb"],
           packed["w_cls"], packed["b_cls"]]
    in_specs = (
        [_batch_spec(emb.shape), _batch_spec(aux.shape), _batch_spec(clss_i.shape),
         _bcast_spec(packed["emb_g"].shape), _bcast_spec(packed["emb_b"].shape)]
        + [_layer_spec(packed[k].shape) for k in
           ("wqkv", "bqkv", "wo", "bo", "g1", "be1", "w1", "b1",
            "w2", "b2", "g2", "be2")]
        + [_bcast_spec(packed[k].shape) for k in
           ("w_hid", "b_hid", "topic_emb", "w_cls", "b_cls")])

    out = pl.pallas_call(
        summarizer_kernel,
        out_shape=jax.ShapeDtypeStruct((B, 1, OUT_W), jnp.float32),
        grid=(B, L),
        in_specs=in_specs,
        out_specs=pl.BlockSpec((1, 1, OUT_W), lambda b, l: (b, 0, 0)),
        scratch_shapes=[pltpu.VMEM((S, H), jnp.float32)],      # resident activation
        compiler_params=pltpu.CompilerParams(
            dimension_semantics=("parallel", "arbitrary")),
    )(*ins)
    return out.reshape(B, OUT_W)


# --------------------------------------------------------------------------
# Parameters (deterministic, synthetic — no checkpoint loading)
# --------------------------------------------------------------------------
def init_params(key):
    ks = jax.random.split(key, 8 + L)

    def nrm(k, shape, scale=0.02):
        return (scale * jax.random.normal(k, shape)).astype(jnp.float32)

    params = {
        "word_emb": nrm(ks[0], (VOCAB, H)),
        "pos_emb": nrm(ks[1], (S, H)),
        "emb_g": jnp.ones((H,), jnp.float32),
        "emb_b": jnp.zeros((H,), jnp.float32),
        # NeuralTopicModel: hid_layer = Linear(H, NTOPIC) (pre-transposed), topic embeddings
        "w_hid": nrm(ks[2], (H, NTOPIC), 0.1),
        "b_hid": jnp.zeros((1, NTOPIC), jnp.float32),
        "topic_emb": nrm(ks[3], (NTOPIC, H), math.sqrt(2.0 / (NTOPIC + H))),
        # Classifier: Linear(H, 1) stored as a row vector + scalar bias
        "w_cls": nrm(ks[4], (1, H), 0.1),
        "b_cls": jnp.zeros((1, 1), jnp.float32),
        "layers": [],
    }
    for l in range(L):
        lk = jax.random.split(ks[5 + l], 6)
        params["layers"].append({
            "wq": nrm(lk[0], (H, H)), "bq": jnp.zeros((1, H), jnp.float32),
            "wk": nrm(lk[1], (H, H)), "bk": jnp.zeros((1, H), jnp.float32),
            "wv": nrm(lk[2], (H, H)), "bv": jnp.zeros((1, H), jnp.float32),
            "wo": nrm(lk[3], (H, H)), "bo": jnp.zeros((1, H), jnp.float32),
            "g1": jnp.ones((1, H), jnp.float32), "be1": jnp.zeros((1, H), jnp.float32),
            "w1": nrm(lk[4], (H, FF)), "b1": jnp.zeros((1, FF), jnp.float32),
            "w2": nrm(lk[5], (FF, H)), "b2": jnp.zeros((1, H), jnp.float32),
            "g2": jnp.ones((1, H), jnp.float32), "be2": jnp.zeros((1, H), jnp.float32),
        })
    return params


def pack_params(p):
    """Host-side packing: stack per-layer weights on a leading L axis, fuse QKV,
    fold 1/sqrt(DH) into Q, and cast MXU weight operands to bf16."""
    scale = jnp.float32(1.0 / math.sqrt(DH))
    layers = p["layers"]

    def stk(name, dtype=jnp.float32):
        return jnp.stack([lp[name] for lp in layers], axis=0).astype(dtype)

    return {
        "word_emb": p["word_emb"], "pos_emb": p["pos_emb"],
        "emb_g": p["emb_g"].reshape(1, H), "emb_b": p["emb_b"].reshape(1, H),
        "wqkv": jnp.stack([jnp.concatenate([lp["wq"] * scale, lp["wk"], lp["wv"]], axis=1)
                           for lp in layers], axis=0).astype(jnp.bfloat16),   # (L, H, 3H)
        "bqkv": jnp.stack([jnp.concatenate([lp["bq"] * scale, lp["bk"], lp["bv"]], axis=1)
                           for lp in layers], axis=0),                        # (L, 1, 3H) f32
        "wo": stk("wo", jnp.bfloat16), "bo": stk("bo"),
        "g1": stk("g1"), "be1": stk("be1"),
        "w1": stk("w1", jnp.bfloat16), "b1": stk("b1"),
        "w2": stk("w2", jnp.bfloat16), "b2": stk("b2"),
        "g2": stk("g2"), "be2": stk("be2"),
        "w_hid": p["w_hid"], "b_hid": p["b_hid"],
        "topic_emb": p["topic_emb"], "w_cls": p["w_cls"], "b_cls": p["b_cls"],
    }


# --------------------------------------------------------------------------
# Summarizer.forward  (args.encoder == 'classifier' branch)
# --------------------------------------------------------------------------
def summarizer_forward(packed, x, clss, labels, tgt, mask, mask_tgt, mask_cls):
    # Embedding gather is plain-JAX glue; everything else runs in the fused Pallas kernel.
    emb = packed["word_emb"][x] + packed["pos_emb"][None, : x.shape[1], :]
    # fold the small f32 inputs into one lane-dense aux array: [mask | mask_cls | pad]
    aux = jnp.zeros((B, 1, AUX_W), jnp.float32)
    aux = aux.at[:, 0, 0:S].set(mask.astype(jnp.float32))
    aux = aux.at[:, 0, S:S + NCLS].set(mask_cls.astype(jnp.float32))
    clss_i = clss.astype(jnp.int32).reshape(B, 1, NCLS)

    slab = summarizer_pallas(packed, emb, aux, clss_i)            # (B, OUT_W) lane-dense
    mean_sent = slab[:, :SENT_W].reshape(B, NCLS, H)
    mean_doc = slab[:, DOC_OFF:DOC_OFF + H]
    rec_emb = slab[:, REC_OFF:REC_OFF + H]
    sent_scores = slab[:, SCORE_OFF:SCORE_OFF + NCLS]
    ntm_output = (rec_emb, packed["topic_emb"])
    return sent_scores, mask_cls, mean_doc, mean_sent, ntm_output


if __name__ == "__main__":
    key = jax.random.PRNGKey(0)
    pkey, xkey = jax.random.split(key)
    packed = pack_params(init_params(pkey))

    x = jax.random.randint(xkey, (B, S), 1, VOCAB, dtype=jnp.int32)
    clss = jnp.array([[3, 7, 11, 15], [4, 9, 13, 0]], dtype=jnp.int32)
    mask = jnp.array([[1.0] * S, [1.0] * 14 + [0.0, 0.0]], dtype=jnp.float32)
    mask_cls = jnp.array([[True, True, True, True], [True, True, True, False]])
    labels = jnp.zeros((B, NCLS), jnp.float32)   # unused by forward
    tgt = jnp.zeros((B, 8), jnp.int32)           # unused by forward
    mask_tgt = jnp.zeros((B, 8), jnp.float32)    # unused by forward

    fwd = jax.jit(summarizer_forward)
    outs = fwd(packed, x, clss, labels, tgt, mask, mask_tgt, mask_cls)
    jax.block_until_ready(outs)
    print("KERNEL_OK")
</pallas_src>

<mosaic_0001>
module attributes {stable_mosaic.version = 11 : i64} {
  func.func @summarizer_kernel(%arg0: i32, %arg1: i32, %arg2: memref<1x16x32xf32, #tpu.memory_space<vmem>>, %arg3: memref<1x1x128xf32, #tpu.memory_space<vmem>>, %arg4: memref<1x1x4xi32, #tpu.memory_space<vmem>>, %arg5: memref<1x32xf32, #tpu.memory_space<vmem>>, %arg6: memref<1x32xf32, #tpu.memory_space<vmem>>, %arg7: memref<1x32x96xbf16, #tpu.memory_space<vmem>>, %arg8: memref<1x1x96xf32, #tpu.memory_space<vmem>>, %arg9: memref<1x32x32xbf16, #tpu.memory_space<vmem>>, %arg10: memref<1x1x32xf32, #tpu.memory_space<vmem>>, %arg11: memref<1x1x32xf32, #tpu.memory_space<vmem>>, %arg12: memref<1x1x32xf32, #tpu.memory_space<vmem>>, %arg13: memref<1x32x64xbf16, #tpu.memory_space<vmem>>, %arg14: memref<1x1x64xf32, #tpu.memory_space<vmem>>, %arg15: memref<1x64x32xbf16, #tpu.memory_space<vmem>>, %arg16: memref<1x1x32xf32, #tpu.memory_space<vmem>>, %arg17: memref<1x1x32xf32, #tpu.memory_space<vmem>>, %arg18: memref<1x1x32xf32, #tpu.memory_space<vmem>>, %arg19: memref<32x8xf32, #tpu.memory_space<vmem>>, %arg20: memref<1x8xf32, #tpu.memory_space<vmem>>, %arg21: memref<8x32xf32, #tpu.memory_space<vmem>>, %arg22: memref<1x32xf32, #tpu.memory_space<vmem>>, %arg23: memref<1x1xf32, #tpu.memory_space<vmem>>, %arg24: memref<1x1x512xf32, #tpu.memory_space<vmem>>, %arg25: memref<16x32xf32, #tpu.memory_space<vmem>>) attributes {dimension_semantics = [#tpu.dimension_semantics<parallel>, #tpu.dimension_semantics<arbitrary>], iteration_bounds = array<i64: 2, 2>, scalar_prefetch = 0 : i64, scratch_operands = 1 : i64, tpu.core_type = #tpu.core_type<tc>, window_params = [{transform_indices = @transform_0, window_bounds = array<i64: 1, 16, 32>}, {transform_indices = @transform_1, window_bounds = array<i64: 1, 1, 128>}, {transform_indices = @transform_2, window_bounds = array<i64: 1, 1, 4>}, {pipeline_mode = #tpu.pipeline_mode<synchronous>, transform_indices = @transform_3, window_bounds = array<i64: 1, 32>}, {pipeline_mode = #tpu.pipeline_mode<synchronous>, transform_indices = @transform_4, window_bounds = array<i64: 1, 32>}, {transform_indices = @transform_5, window_bounds = array<i64: 1, 32, 96>}, {transform_indices = @transform_6, window_bounds = array<i64: 1, 1, 96>}, {transform_indices = @transform_7, window_bounds = array<i64: 1, 32, 32>}, {transform_indices = @transform_8, window_bounds = array<i64: 1, 1, 32>}, {transform_indices = @transform_9, window_bounds = array<i64: 1, 1, 32>}, {transform_indices = @transform_10, window_bounds = array<i64: 1, 1, 32>}, {transform_indices = @transform_11, window_bounds = array<i64: 1, 32, 64>}, {transform_indices = @transform_12, window_bounds = array<i64: 1, 1, 64>}, {transform_indices = @transform_13, window_bounds = array<i64: 1, 64, 32>}, {transform_indices = @transform_14, window_bounds = array<i64: 1, 1, 32>}, {transform_indices = @transform_15, window_bounds = array<i64: 1, 1, 32>}, {transform_indices = @transform_16, window_bounds = array<i64: 1, 1, 32>}, {pipeline_mode = #tpu.pipeline_mode<synchronous>, transform_indices = @transform_17, window_bounds = array<i64: 32, 8>}, {pipeline_mode = #tpu.pipeline_mode<synchronous>, transform_indices = @transform_18, window_bounds = array<i64: 1, 8>}, {pipeline_mode = #tpu.pipeline_mode<synchronous>, transform_indices = @transform_19, window_bounds = array<i64: 8, 32>}, {pipeline_mode = #tpu.pipeline_mode<synchronous>, transform_indices = @transform_20, window_bounds = array<i64: 1, 32>}, {pipeline_mode = #tpu.pipeline_mode<synchronous>, transform_indices = @transform_21, window_bounds = array<i64: 1, 1>}, {transform_indices = @transform_22, window_bounds = array<i64: 1, 1, 512>}]} {
    %c0_i32 = arith.constant 0 : i32
    %0 = arith.cmpi eq, %arg1, %c0_i32 : i32
    %1 = arith.extui %0 : i1 to i32
    %c0_i32_0 = arith.constant 0 : i32
    %2 = arith.cmpi ne, %1, %c0_i32_0 : i32
    scf.if %2 {
      %c0_79 = arith.constant 0 : index
      %c0_80 = arith.constant 0 : index
      %c0_81 = arith.constant 0 : index
      %199 = vector.load %arg2[%c0_79, %c0_80, %c0_81] : memref<1x16x32xf32, #tpu.memory_space<vmem>>, vector<1x16x32xf32>
      %200 = vector.shape_cast %199 : vector<1x16x32xf32> to vector<16x32xf32>
      %c0_82 = arith.constant 0 : index
      %c0_83 = arith.constant 0 : index
      %201 = vector.load %arg5[%c0_82, %c0_83] : memref<1x32xf32, #tpu.memory_space<vmem>>, vector<1x32xf32>
      %c0_84 = arith.constant 0 : index
      %c0_85 = arith.constant 0 : index
      %202 = vector.load %arg6[%c0_84, %c0_85] : memref<1x32xf32, #tpu.memory_space<vmem>>, vector<1x32xf32>
      %cst_86 = arith.constant dense<0.000000e+00> : vector<16xf32>
      %203 = vector.multi_reduction <add>, %200, %cst_86 [1] : vector<16x32xf32> to vector<16xf32>
      %204 = vector.shape_cast %203 : vector<16xf32> to vector<16x1xf32>
      %cst_87 = arith.constant 3.200000e+01 : f32
      %205 = vector.broadcast %cst_87 : f32 to vector<16x1xf32>
      %206 = arith.divf %204, %205 : vector<16x1xf32>
      %207 = vector.broadcast %206 : vector<16x1xf32> to vector<16x32xf32>
      %208 = arith.subf %200, %207 : vector<16x32xf32>
      %209 = arith.mulf %208, %208 : vector<16x32xf32>
      %cst_88 = arith.constant dense<0.000000e+00> : vector<16xf32>
      %210 = vector.multi_reduction <add>, %209, %cst_88 [1] : vector<16x32xf32> to vector<16xf32>
      %211 = vector.shape_cast %210 : vector<16xf32> to vector<16x1xf32>
      %cst_89 = arith.constant 3.200000e+01 : f32
      %212 = vector.broadcast %cst_89 : f32 to vector<16x1xf32>
      %213 = arith.divf %211, %212 : vector<16x1xf32>
      %214 = vector.broadcast %206 : vector<16x1xf32> to vector<16x32xf32>
      %215 = arith.subf %200, %214 : vector<16x32xf32>
      %cst_90 = arith.constant 9.99999974E-6 : f32
      %216 = vector.broadcast %cst_90 : f32 to vector<16x1xf32>
      %217 = arith.addf %213, %216 : vector<16x1xf32>
      %218 = math.rsqrt %217 : vector<16x1xf32>
      %219 = vector.broadcast %218 : vector<16x1xf32> to vector<16x32xf32>
      %220 = arith.mulf %215, %219 : vector<16x32xf32>
      %221 = vector.broadcast %201 : vector<1x32xf32> to vector<16x32xf32>
      %222 = arith.mulf %220, %221 : vector<16x32xf32>
      %223 = vector.broadcast %202 : vector<1x32xf32> to vector<16x32xf32>
      %224 = arith.addf %222, %223 : vector<16x32xf32>
      %c0_91 = arith.constant 0 : index
      %c0_92 = arith.constant 0 : index
      %225 = vector.load %arg25[%c0_91, %c0_92] : memref<16x32xf32, #tpu.memory_space<vmem>>, vector<16x32xf32>
      tpu.vector_store %arg25[%c0_91, %c0_92], %224 {strides = array<i32>} : memref<16x32xf32, #tpu.memory_space<vmem>>, vector<16x32xf32>,
    } else {
    }
    %c0 = arith.constant 0 : index
    %c0_1 = arith.constant 0 : index
    %c0_2 = arith.constant 0 : index
    %3 = vector.load %arg3[%c0, %c0_1, %c0_2] : memref<1x1x128xf32, #tpu.memory_space<vmem>>, vector<1x1x128xf32>
    %4 = vector.shape_cast %3 : vector<1x1x128xf32> to vector<1x128xf32>
    %5 = vector.extract_strided_slice %4 {offsets = [0, 0], sizes = [1, 16], strides = [1, 1]} : vector<1x128xf32> to vector<1x16xf32>
    %cst = arith.constant 1.000000e+00 : f32
    %6 = vector.broadcast %cst : f32 to vector<1x16xf32>
    %7 = arith.subf %5, %6 : vector<1x16xf32>
    %cst_3 = arith.constant 1.000000e+09 : f32
    %8 = vector.broadcast %cst_3 : f32 to vector<1x16xf32>
    %9 = arith.mulf %7, %8 : vector<1x16xf32>
    %c0_4 = arith.constant 0 : index
    %c0_5 = arith.constant 0 : index
    %10 = vector.load %arg25[%c0_4, %c0_5] : memref<16x32xf32, #tpu.memory_space<vmem>>, vector<16x32xf32>
    %11 = arith.truncf %10 : vector<16x32xf32> to vector<16x32xbf16>
    %c0_6 = arith.constant 0 : index
    %c0_7 = arith.constant 0 : index
    %c0_8 = arith.constant 0 : index
    %12 = vector.load %arg7[%c0_6, %c0_7, %c0_8] : memref<1x32x96xbf16, #tpu.memory_space<vmem>>, vector<1x32x96xbf16>
    %13 = vector.shape_cast %12 : vector<1x32x96xbf16> to vector<32x96xbf16>
    %cst_9 = arith.constant dense<0.000000e+00> : vector<16x96xf32>
    %14 = tpu.matmul %11, %13, %cst_9 {dimension_numbers = #tpu.dot_dimension_numbers<[1], [0], [0], [1], [0, 0, 1, 1], [], []>} : vector<16x32xbf16>, vector<32x96xbf16>, vector<16x96xf32> -> vector<16x96xf32>
    %c0_10 = arith.constant 0 : index
    %c0_11 = arith.constant 0 : index
    %c0_12 = arith.constant 0 : index
    %15 = vector.load %arg8[%c0_10, %c0_11, %c0_12] : memref<1x1x96xf32, #tpu.memory_space<vmem>>, vector<1x1x96xf32>
    %16 = vector.shape_cast %15 : vector<1x1x96xf32> to vector<1x96xf32>
    %17 = vector.broadcast %16 : vector<1x96xf32> to vector<16x96xf32>
    %18 = arith.addf %14, %17 : vector<16x96xf32>
    %19 = vector.extract_strided_slice %18 {offsets = [0, 0], sizes = [16, 8], strides = [1, 1]} : vector<16x96xf32> to vector<16x8xf32>
    %20 = arith.truncf %19 : vector<16x8xf32> to vector<16x8xbf16>
    %21 = vector.extract_strided_slice %18 {offsets = [0, 32], sizes = [16, 8], strides = [1, 1]} : vector<16x96xf32> to vector<16x8xf32>
    %22 = arith.truncf %21 : vector<16x8xf32> to vector<16x8xbf16>
    %23 = vector.extract_strided_slice %18 {offsets = [0, 64], sizes = [16, 8], strides = [1, 1]} : vector<16x96xf32> to vector<16x8xf32>
    %24 = arith.truncf %23 : vector<16x8xf32> to vector<16x8xbf16>
    "tpu.trace_start"() <{level = 10 : i32, message = "qd,kd->qk"}> : () -> ()
    %cst_13 = arith.constant dense<0.000000e+00> : vector<16x16xf32>
    %25 = tpu.matmul %20, %22, %cst_13 {dimension_numbers = #tpu.dot_dimension_numbers<[1], [1], [0], [0], [0, 0, 1, 0], [], []>} : vector<16x8xbf16>, vector<16x8xbf16>, vector<16x16xf32> -> vector<16x16xf32>
    "tpu.trace_stop"() : () -> ()
    %26 = vector.broadcast %9 : vector<1x16xf32> to vector<16x16xf32>
    %27 = arith.addf %25, %26 : vector<16x16xf32>
    %cst_14 = arith.constant dense<0xFF800000> : vector<16xf32>
    %28 = vector.multi_reduction <maximumf>, %27, %cst_14 [1] : vector<16x16xf32> to vector<16xf32>
    %29 = vector.shape_cast %28 : vector<16xf32> to vector<16x1xf32>
    %30 = vector.broadcast %29 : vector<16x1xf32> to vector<16x16xf32>
    %31 = arith.subf %27, %30 : vector<16x16xf32>
    %32 = math.exp %31 : vector<16x16xf32>
    %cst_15 = arith.constant dense<0.000000e+00> : vector<16xf32>
    %33 = vector.multi_reduction <add>, %32, %cst_15 [1] : vector<16x16xf32> to vector<16xf32>
    %34 = vector.shape_cast %33 : vector<16xf32> to vector<16x1xf32>
    %35 = tpu.reciprocal %34 {approx = true} : vector<16x1xf32> -> vector<16x1xf32>
    %36 = vector.broadcast %35 : vector<16x1xf32> to vector<16x16xf32>
    %37 = arith.mulf %32, %36 : vector<16x16xf32>
    %38 = arith.truncf %37 : vector<16x16xf32> to vector<16x16xbf16>
    %cst_16 = arith.constant dense<0.000000e+00> : vector<16x8xf32>
    %39 = tpu.matmul %38, %24, %cst_16 {dimension_numbers = #tpu.dot_dimension_numbers<[1], [0], [0], [1], [0, 0, 1, 1], [], []>} : vector<16x16xbf16>, vector<16x8xbf16>, vector<16x8xf32> -> vector<16x8xf32>
    %40 = vector.extract_strided_slice %18 {offsets = [0, 8], sizes = [16, 8], strides = [1, 1]} : vector<16x96xf32> to vector<16x8xf32>
    %41 = arith.truncf %40 : vector<16x8xf32> to vector<16x8xbf16>
    %42 = vector.extract_strided_slice %18 {offsets = [0, 40], sizes = [16, 8], strides = [1, 1]} : vector<16x96xf32> to vector<16x8xf32>
    %43 = arith.truncf %42 : vector<16x8xf32> to vector<16x8xbf16>
    %44 = vector.extract_strided_slice %18 {offsets = [0, 72], sizes = [16, 8], strides = [1, 1]} : vector<16x96xf32> to vector<16x8xf32>
    %45 = arith.truncf %44 : vector<16x8xf32> to vector<16x8xbf16>
    "tpu.trace_start"() <{level = 10 : i32, message = "qd,kd->qk"}> : () -> ()
    %cst_17 = arith.constant dense<0.000000e+00> : vector<16x16xf32>
    %46 = tpu.matmul %41, %43, %cst_17 {dimension_numbers = #tpu.dot_dimension_numbers<[1], [1], [0], [0], [0, 0, 1, 0], [], []>} : vector<16x8xbf16>, vector<16x8xbf16>, vector<16x16xf32> -> vector<16x16xf32>
    "tpu.trace_stop"() : () -> ()
    %47 = vector.broadcast %9 : vector<1x16xf32> to vector<16x16xf32>
    %48 = arith.addf %46, %47 : vector<16x16xf32>
    %cst_18 = arith.constant dense<0xFF800000> : vector<16xf32>
    %49 = vector.multi_reduction <maximumf>, %48, %cst_18 [1] : vector<16x16xf32> to vector<16xf32>
    %50 = vector.shape_cast %49 : vector<16xf32> to vector<16x1xf32>
    %51 = vector.broadcast %50 : vector<16x1xf32> to vector<16x16xf32>
    %52 = arith.subf %48, %51 : vector<16x16xf32>
    %53 = math.exp %52 : vector<16x16xf32>
    %cst_19 = arith.constant dense<0.000000e+00> : vector<16xf32>
    %54 = vector.multi_reduction <add>, %53, %cst_19 [1] : vector<16x16xf32> to vector<16xf32>
    %55 = vector.shape_cast %54 : vector<16xf32> to vector<16x1xf32>
    %56 = tpu.reciprocal %55 {approx = true} : vector<16x1xf32> -> vector<16x1xf32>
    %57 = vector.broadcast %56 : vector<16x1xf32> to vector<16x16xf32>
    %58 = arith.mulf %53, %57 : vector<16x16xf32>
    %59 = arith.truncf %58 : vector<16x16xf32> to vector<16x16xbf16>
    %cst_20 = arith.constant dense<0.000000e+00> : vector<16x8xf32>
    %60 = tpu.matmul %59, %45, %cst_20 {dimension_numbers = #tpu.dot_dimension_numbers<[1], [0], [0], [1], [0, 0, 1, 1], [], []>} : vector<16x16xbf16>, vector<16x8xbf16>, vector<16x8xf32> -> vector<16x8xf32>
    %61 = vector.extract_strided_slice %18 {offsets = [0, 16], sizes = [16, 8], strides = [1, 1]} : vector<16x96xf32> to vector<16x8xf32>
    %62 = arith.truncf %61 : vector<16x8xf32> to vector<16x8xbf16>
    %63 = vector.extract_strided_slice %18 {offsets = [0, 48], sizes = [16, 8], strides = [1, 1]} : vector<16x96xf32> to vector<16x8xf32>
    %64 = arith.truncf %63 : vector<16x8xf32> to vector<16x8xbf16>
    %65 = vector.extract_strided_slice %18 {offsets = [0, 80], sizes = [16, 8], strides = [1, 1]} : vector<16x96xf32> to vector<16x8xf32>
    %66 = arith.truncf %65 : vector<16x8xf32> to vector<16x8xbf16>
    "tpu.trace_start"() <{level = 10 : i32, message = "qd,kd->qk"}> : () -> ()
    %cst_21 = arith.constant dense<0.000000e+00> : vector<16x16xf32>
    %67 = tpu.matmul %62, %64, %cst_21 {dimension_numbers = #tpu.dot_dimension_numbers<[1], [1], [0], [0], [0, 0, 1, 0], [], []>} : vector<16x8xbf16>, vector<16x8xbf16>, vector<16x16xf32> -> vector<16x16xf32>
    "tpu.trace_stop"() : () -> ()
    %68 = vector.broadcast %9 : vector<1x16xf32> to vector<16x16xf32>
    %69 = arith.addf %67, %68 : vector<16x16xf32>
    %cst_22 = arith.constant dense<0xFF800000> : vector<16xf32>
    %70 = vector.multi_reduction <maximumf>, %69, %cst_22 [1] : vector<16x16xf32> to vector<16xf32>
    %71 = vector.shape_cast %70 : vector<16xf32> to vector<16x1xf32>
    %72 = vector.broadcast %71 : vector<16x1xf32> to vector<16x16xf32>
    %73 = arith.subf %69, %72 : vector<16x16xf32>
    %74 = math.exp %73 : vector<16x16xf32>
    %cst_23 = arith.constant dense<0.000000e+00> : vector<16xf32>
    %75 = vector.multi_reduction <add>, %74, %cst_23 [1] : vector<16x16xf32> to vector<16xf32>
    %76 = vector.shape_cast %75 : vector<16xf32> to vector<16x1xf32>
    %77 = tpu.reciprocal %76 {approx = true} : vector<16x1xf32> -> vector<16x1xf32>
    %78 = vector.broadcast %77 : vector<16x1xf32> to vector<16x16xf32>
    %79 = arith.mulf %74, %78 : vector<16x16xf32>
    %80 = arith.truncf %79 : vector<16x16xf32> to vector<16x16xbf16>
    %cst_24 = arith.constant dense<0.000000e+00> : vector<16x8xf32>
    %81 = tpu.matmul %80, %66, %cst_24 {dimension_numbers = #tpu.dot_dimension_numbers<[1], [0], [0], [1], [0, 0, 1, 1], [], []>} : vector<16x16xbf16>, vector<16x8xbf16>, vector<16x8xf32> -> vector<16x8xf32>
    %82 = vector.extract_strided_slice %18 {offsets = [0, 24], sizes = [16, 8], strides = [1, 1]} : vector<16x96xf32> to vector<16x8xf32>
    %83 = arith.truncf %82 : vector<16x8xf32> to vector<16x8xbf16>
    %84 = vector.extract_strided_slice %18 {offsets = [0, 56], sizes = [16, 8], strides = [1, 1]} : vector<16x96xf32> to vector<16x8xf32>
    %85 = arith.truncf %84 : vector<16x8xf32> to vector<16x8xbf16>
    %86 = vector.extract_strided_slice %18 {offsets = [0, 88], sizes = [16, 8], strides = [1, 1]} : vector<16x96xf32> to vector<16x8xf32>
    %87 = arith.truncf %86 : vector<16x8xf32> to vector<16x8xbf16>
    "tpu.trace_start"() <{level = 10 : i32, message = "qd,kd->qk"}> : () -> ()
    %cst_25 = arith.constant dense<0.000000e+00> : vector<16x16xf32>
    %88 = tpu.matmul %83, %85, %cst_25 {dimension_numbers = #tpu.dot_dimension_numbers<[1], [1], [0], [0], [0, 0, 1, 0], [], []>} : vector<16x8xbf16>, vector<16x8xbf16>, vector<16x16xf32> -> vector<16x16xf32>
    "tpu.trace_stop"() : () -> ()
    %89 = vector.broadcast %9 : vector<1x16xf32> to vector<16x16xf32>
    %90 = arith.addf %88, %89 : vector<16x16xf32>
    %cst_26 = arith.constant dense<0xFF800000> : vector<16xf32>
    %91 = vector.multi_reduction <maximumf>, %90, %cst_26 [1] : vector<16x16xf32> to vector<16xf32>
    %92 = vector.shape_cast %91 : vector<16xf32> to vector<16x1xf32>
    %93 = vector.broadcast %92 : vector<16x1xf32> to vector<16x16xf32>
    %94 = arith.subf %90, %93 : vector<16x16xf32>
    %95 = math.exp %94 : vector<16x16xf32>
    %cst_27 = arith.constant dense<0.000000e+00> : vector<16xf32>
    %96 = vector.multi_reduction <add>, %95, %cst_27 [1] : vector<16x16xf32> to vector<16xf32>
    %97 = vector.shape_cast %96 : vector<16xf32> to vector<16x1xf32>
    %98 = tpu.reciprocal %97 {approx = true} : vector<16x1xf32> -> vector<16x1xf32>
    %99 = vector.broadcast %98 : vector<16x1xf32> to vector<16x16xf32>
    %100 = arith.mulf %95, %99 : vector<16x16xf32>
    %101 = arith.truncf %100 : vector<16x16xf32> to vector<16x16xbf16>
    %cst_28 = arith.constant dense<0.000000e+00> : vector<16x8xf32>
    %102 = tpu.matmul %101, %87, %cst_28 {dimension_numbers = #tpu.dot_dimension_numbers<[1], [0], [0], [1], [0, 0, 1, 1], [], []>} : vector<16x16xbf16>, vector<16x8xbf16>, vector<16x8xf32> -> vector<16x8xf32>
    %103 = tpu.concatenate %39, %60, %81, %102 in 1 : vector<16x8xf32>, vector<16x8xf32>, vector<16x8xf32>, vector<16x8xf32> -> vector<16x32xf32>
    %104 = arith.truncf %103 : vector<16x32xf32> to vector<16x32xbf16>
    %c0_29 = arith.constant 0 : index
    %c0_30 = arith.constant 0 : index
    %c0_31 = arith.constant 0 : index
    %105 = vector.load %arg9[%c0_29, %c0_30, %c0_31] : memref<1x32x32xbf16, #tpu.memory_space<vmem>>, vector<1x32x32xbf16>
    %106 = vector.shape_cast %105 : vector<1x32x32xbf16> to vector<32x32xbf16>
    %cst_32 = arith.constant dense<0.000000e+00> : vector<16x32xf32>
    %107 = tpu.matmul %104, %106, %cst_32 {dimension_numbers = #tpu.dot_dimension_numbers<[1], [0], [0], [1], [0, 0, 1, 1], [], []>} : vector<16x32xbf16>, vector<32x32xbf16>, vector<16x32xf32> -> vector<16x32xf32>
    %c0_33 = arith.constant 0 : index
    %c0_34 = arith.constant 0 : index
    %c0_35 = arith.constant 0 : index
    %108 = vector.load %arg10[%c0_33, %c0_34, %c0_35] : memref<1x1x32xf32, #tpu.memory_space<vmem>>, vector<1x1x32xf32>
    %109 = vector.shape_cast %108 : vector<1x1x32xf32> to vector<1x32xf32>
    %110 = vector.broadcast %109 : vector<1x32xf32> to vector<16x32xf32>
    %111 = arith.addf %107, %110 : vector<16x32xf32>
    %112 = arith.addf %10, %111 : vector<16x32xf32>
    %c0_36 = arith.constant 0 : index
    %c0_37 = arith.constant 0 : index
    %c0_38 = arith.constant 0 : index
    %113 = vector.load %arg11[%c0_36, %c0_37, %c0_38] : memref<1x1x32xf32, #tpu.memory_space<vmem>>, vector<1x1x32xf32>
    %114 = vector.shape_cast %113 : vector<1x1x32xf32> to vector<1x32xf32>
    %c0_39 = arith.constant 0 : index
    %c0_40 = arith.constant 0 : index
    %c0_41 = arith.constant 0 : index
    %115 = vector.load %arg12[%c0_39, %c0_40, %c0_41] : memref<1x1x32xf32, #tpu.memory_space<vmem>>, vector<1x1x32xf32>
    %116 = vector.shape_cast %115 : vector<1x1x32xf32> to vector<1x32xf32>
    %cst_42 = arith.constant dense<0.000000e+00> : vector<16xf32>
    %117 = vector.multi_reduction <add>, %112, %cst_42 [1] : vector<16x32xf32> to vector<16xf32>
    %118 = vector.shape_cast %117 : vector<16xf32> to vector<16x1xf32>
    %cst_43 = arith.constant 3.200000e+01 : f32
    %119 = vector.broadcast %cst_43 : f32 to vector<16x1xf32>
    %120 = arith.divf %118, %119 : vector<16x1xf32>
    %121 = vector.broadcast %120 : vector<16x1xf32> to vector<16x32xf32>
    %122 = arith.subf %112, %121 : vector<16x32xf32>
    %123 = arith.mulf %122, %122 : vector<16x32xf32>
    %cst_44 = arith.constant dense<0.000000e+00> : vector<16xf32>
    %124 = vector.multi_reduction <add>, %123, %cst_44 [1] : vector<16x32xf32> to vector<16xf32>
    %125 = vector.shape_cast %124 : vector<16xf32> to vector<16x1xf32>
    %cst_45 = arith.constant 3.200000e+01 : f32
    %126 = vector.broadcast %cst_45 : f32 to vector<16x1xf32>
    %127 = arith.divf %125, %126 : vector<16x1xf32>
    %128 = vector.broadcast %120 : vector<16x1xf32> to vector<16x32xf32>
    %129 = arith.subf %112, %128 : vector<16x32xf32>
    %cst_46 = arith.constant 9.99999974E-6 : f32
    %130 = vector.broadcast %cst_46 : f32 to vector<16x1xf32>
    %131 = arith.addf %127, %130 : vector<16x1xf32>
    %132 = math.rsqrt %131 : vector<16x1xf32>
    %133 = vector.broadcast %132 : vector<16x1xf32> to vector<16x32xf32>
    %134 = arith.mulf %129, %133 : vector<16x32xf32>
    %135 = vector.broadcast %114 : vector<1x32xf32> to vector<16x32xf32>
    %136 = arith.mulf %134, %135 : vector<16x32xf32>
    %137 = vector.broadcast %116 : vector<1x32xf32> to vector<16x32xf32>
    %138 = arith.addf %136, %137 : vector<16x32xf32>
    %139 = arith.truncf %138 : vector<16x32xf32> to vector<16x32xbf16>
    %c0_47 = arith.constant 0 : index
    %c0_48 = arith.constant 0 : index
    %c0_49 = arith.constant 0 : index
    %140 = vector.load %arg13[%c0_47, %c0_48, %c0_49] : memref<1x32x64xbf16, #tpu.memory_space<vmem>>, vector<1x32x64xbf16>
    %141 = vector.shape_cast %140 : vector<1x32x64xbf16> to vector<32x64xbf16>
    %cst_50 = arith.constant dense<0.000000e+00> : vector<16x64xf32>
    %142 = tpu.matmul %139, %141, %cst_50 {dimension_numbers = #tpu.dot_dimension_numbers<[1], [0], [0], [1], [0, 0, 1, 1], [], []>} : vector<16x32xbf16>, vector<32x64xbf16>, vector<16x64xf32> -> vector<16x64xf32>
    %c0_51 = arith.constant 0 : index
    %c0_52 = arith.constant 0 : index
    %c0_53 = arith.constant 0 : index
    %143 = vector.load %arg14[%c0_51, %c0_52, %c0_53] : memref<1x1x64xf32, #tpu.memory_space<vmem>>, vector<1x1x64xf32>
    %144 = vector.shape_cast %143 : vector<1x1x64xf32> to vector<1x64xf32>
    %145 = vector.broadcast %144 : vector<1x64xf32> to vector<16x64xf32>
    %146 = arith.addf %142, %145 : vector<16x64xf32>
    %147 = arith.mulf %146, %146 : vector<16x64xf32>
    %148 = arith.mulf %146, %147 : vector<16x64xf32>
    %cst_54 = arith.constant 4.471500e-02 : f32
    %149 = vector.broadcast %cst_54 : f32 to vector<16x64xf32>
    %150 = arith.mulf %149, %148 : vector<16x64xf32>
    %151 = arith.addf %146, %150 : vector<16x64xf32>
    %cst_55 = arith.constant 0.797884583 : f32
    %152 = vector.broadcast %cst_55 : f32 to vector<16x64xf32>
    %153 = arith.mulf %152, %151 : vector<16x64xf32>
    %154 = math.tanh %153 : vector<16x64xf32>
    %cst_56 = arith.constant 1.000000e+00 : f32
    %155 = vector.broadcast %cst_56 : f32 to vector<16x64xf32>
    %156 = arith.addf %155, %154 : vector<16x64xf32>
    %cst_57 = arith.constant 5.000000e-01 : f32
    %157 = vector.broadcast %cst_57 : f32 to vector<16x64xf32>
    %158 = arith.mulf %157, %156 : vector<16x64xf32>
    %159 = arith.mulf %146, %158 : vector<16x64xf32>
    %160 = arith.truncf %159 : vector<16x64xf32> to vector<16x64xbf16>
    %c0_58 = arith.constant 0 : index
    %c0_59 = arith.constant 0 : index
    %c0_60 = arith.constant 0 : index
    %161 = vector.load %arg15[%c0_58, %c0_59, %c0_60] : memref<1x64x32xbf16, #tpu.memory_space<vmem>>, vector<1x64x32xbf16>
    %162 = vector.shape_cast %161 : vector<1x64x32xbf16> to vector<64x32xbf16>
    %cst_61 = arith.constant dense<0.000000e+00> : vector<16x32xf32>
    %163 = tpu.matmul %160, %162, %cst_61 {dimension_numbers = #tpu.dot_dimension_numbers<[1], [0], [0], [1], [0, 0, 1, 1], [], []>} : vector<16x64xbf16>, vector<64x32xbf16>, vector<16x32xf32> -> vector<16x32xf32>
    %c0_62 = arith.constant 0 : index
    %c0_63 = arith.constant 0 : index
    %c0_64 = arith.constant 0 : index
    %164 = vector.load %arg16[%c0_62, %c0_63, %c0_64] : memref<1x1x32xf32, #tpu.memory_space<vmem>>, vector<1x1x32xf32>
    %165 = vector.shape_cast %164 : vector<1x1x32xf32> to vector<1x32xf32>
    %166 = vector.broadcast %165 : vector<1x32xf32> to vector<16x32xf32>
    %167 = arith.addf %163, %166 : vector<16x32xf32>
    %168 = arith.addf %138, %167 : vector<16x32xf32>
    %c0_65 = arith.constant 0 : index
    %c0_66 = arith.constant 0 : index
    %c0_67 = arith.constant 0 : index
    %169 = vector.load %arg17[%c0_65, %c0_66, %c0_67] : memref<1x1x32xf32, #tpu.memory_space<vmem>>, vector<1x1x32xf32>
    %170 = vector.shape_cast %169 : vector<1x1x32xf32> to vector<1x32xf32>
    %c0_68 = arith.constant 0 : index
    %c0_69 = arith.constant 0 : index
    %c0_70 = arith.constant 0 : index
    %171 = vector.load %arg18[%c0_68, %c0_69, %c0_70] : memref<1x1x32xf32, #tpu.memory_space<vmem>>, vector<1x1x32xf32>
    %172 = vector.shape_cast %171 : vector<1x1x32xf32> to vector<1x32xf32>
    %cst_71 = arith.constant dense<0.000000e+00> : vector<16xf32>
    %173 = vector.multi_reduction <add>, %168, %cst_71 [1] : vector<16x32xf32> to vector<16xf32>
    %174 = vector.shape_cast %173 : vector<16xf32> to vector<16x1xf32>
    %cst_72 = arith.constant 3.200000e+01 : f32
    %175 = vector.broadcast %cst_72 : f32 to vector<16x1xf32>
    %176 = arith.divf %174, %175 : vector<16x1xf32>
    %177 = vector.broadcast %176 : vector<16x1xf32> to vector<16x32xf32>
    %178 = arith.subf %168, %177 : vector<16x32xf32>
    %179 = arith.mulf %178, %178 : vector<16x32xf32>
    %cst_73 = arith.constant dense<0.000000e+00> : vector<16xf32>
    %180 = vector.multi_reduction <add>, %179, %cst_73 [1] : vector<16x32xf32> to vector<16xf32>
    %181 = vector.shape_cast %180 : vector<16xf32> to vector<16x1xf32>
    %cst_74 = arith.constant 3.200000e+01 : f32
    %182 = vector.broadcast %cst_74 : f32 to vector<16x1xf32>
    %183 = arith.divf %181, %182 : vector<16x1xf32>
    %184 = vector.broadcast %176 : vector<16x1xf32> to vector<16x32xf32>
    %185 = arith.subf %168, %184 : vector<16x32xf32>
    %cst_75 = arith.constant 9.99999974E-6 : f32
    %186 = vector.broadcast %cst_75 : f32 to vector<16x1xf32>
    %187 = arith.addf %183, %186 : vector<16x1xf32>
    %188 = math.rsqrt %187 : vector<16x1xf32>
    %189 = vector.broadcast %188 : vector<16x1xf32> to vector<16x32xf32>
    %190 = arith.mulf %185, %189 : vector<16x32xf32>
    %191 = vector.broadcast %170 : vector<1x32xf32> to vector<16x32xf32>
    %192 = arith.mulf %190, %191 : vector<16x32xf32>
    %193 = vector.broadcast %172 : vector<1x32xf32> to vector<16x32xf32>
    %194 = arith.addf %192, %193 : vector<16x32xf32>
    %c0_76 = arith.constant 0 : index
    %c0_77 = arith.constant 0 : index
    %195 = vector.load %arg25[%c0_76, %c0_77] : memref<16x32xf32, #tpu.memory_space<vmem>>, vector<16x32xf32>
    tpu.vector_store %arg25[%c0_76, %c0_77], %194 {strides = array<i32>} : memref<16x32xf32, #tpu.memory_space<vmem>>, vector<16x32xf32>,
    %c1_i32 = arith.constant 1 : i32
    %196 = arith.cmpi eq, %arg1, %c1_i32 : i32
    %197 = arith.extui %196 : i1 to i32
    %c0_i32_78 = arith.constant 0 : i32
    %198 = arith.cmpi ne, %197, %c0_i32_78 : i32
    scf.if %198 {
      %c0_79 = arith.constant 0 : index
      %c0_80 = arith.constant 0 : index
      %c0_81 = arith.constant 0 : index
      %199 = vector.load %arg4[%c0_79, %c0_80, %c0_81] : memref<1x1x4xi32, #tpu.memory_space<vmem>>, vector<1x1x4xi32>
      %200 = vector.shape_cast %199 : vector<1x1x4xi32> to vector<1x4xi32>
      %201 = tpu.iota {dimensions = array<i32: 0>} : vector<16x1xi32>
      %202 = tpu.iota {dimensions = array<i32: 1>} : vector<1x4xi32>
      %c0_i32_82 = arith.constant 0 : i32
      %203 = vector.broadcast %c0_i32_82 : i32 to vector<1x4xi32>
      %204 = arith.cmpi ne, %200, %203 : vector<1x4xi32>
      %c-1_i32 = arith.constant -1 : i32
      %205 = vector.broadcast %c-1_i32 : i32 to vector<1x4xi32>
      %206 = arith.select %204, %202, %205 : vector<1x4xi1>, vector<1x4xi32>
      %cst_83 = arith.constant dense<-2147483648> : vector<1xi32>
      %207 = vector.multi_reduction <maxsi>, %206, %cst_83 [1] : vector<1x4xi32> to vector<1xi32>
      %208 = vector.shape_cast %207 : vector<1xi32> to vector<1x1xi32>
      %209 = vector.broadcast %208 : vector<1x1xi32> to vector<16x1xi32>
      %210 = arith.cmpi sle, %201, %209 : vector<16x1xi32>
      %211 = arith.extui %210 : vector<16x1xi1> to vector<16x1xi32>
      %212 = arith.sitofp %211 : vector<16x1xi32> to vector<16x1xf32>
      %c1_i32_84 = arith.constant 1 : i32
      %213 = vector.broadcast %c1_i32_84 : i32 to vector<1x1xi32>
      %214 = arith.addi %208, %213 : vector<1x1xi32>
      %c1_i32_85 = arith.constant 1 : i32
      %215 = vector.broadcast %c1_i32_85 : i32 to vector<1x1xi32>
      %216 = arith.maxsi %214, %215 : vector<1x1xi32>
      %217 = arith.sitofp %216 : vector<1x1xi32> to vector<1x1xf32>
      %218 = vector.broadcast %212 : vector<16x1xf32> to vector<16x32xf32>
      %219 = arith.mulf %194, %218 : vector<16x32xf32>
      %cst_86 = arith.constant dense<0.000000e+00> : vector<32xf32>
      %220 = vector.multi_reduction <add>, %219, %cst_86 [0] : vector<16x32xf32> to vector<32xf32>
      %221 = vector.shape_cast %220 : vector<32xf32> to vector<1x32xf32>
      %222 = vector.broadcast %217 : vector<1x1xf32> to vector<1x32xf32>
      %223 = arith.divf %221, %222 : vector<1x32xf32>
      %c0_87 = arith.constant 0 : index
      %c0_88 = arith.constant 0 : index
      %224 = vector.load %arg19[%c0_87, %c0_88] : memref<32x8xf32, #tpu.memory_space<vmem>>, vector<32x8xf32>
      %cst_89 = arith.constant dense<0.000000e+00> : vector<1x8xf32>
      %225 = tpu.matmul %223, %224, %cst_89 {dimension_numbers = #tpu.dot_dimension_numbers<[1], [0], [0], [1], [0, 0, 1, 1], [], []>} : vector<1x32xf32>, vector<32x8xf32>, vector<1x8xf32> -> vector<1x8xf32>
      %c0_90 = arith.constant 0 : index
      %c0_91 = arith.constant 0 : index
      %226 = vector.load %arg20[%c0_90, %c0_91] : memref<1x8xf32, #tpu.memory_space<vmem>>, vector<1x8xf32>
      %227 = arith.addf %225, %226 : vector<1x8xf32>
      %cst_92 = arith.constant dense<0xFF800000> : vector<1xf32>
      %228 = vector.multi_reduction <maximumf>, %227, %cst_92 [1] : vector<1x8xf32> to vector<1xf32>
      %229 = vector.shape_cast %228 : vector<1xf32> to vector<1x1xf32>
      %230 = vector.broadcast %229 : vector<1x1xf32> to vector<1x8xf32>
      %231 = arith.subf %227, %230 : vector<1x8xf32>
      %232 = math.exp %231 : vector<1x8xf32>
      %cst_93 = arith.constant dense<0.000000e+00> : vector<1xf32>
      %233 = vector.multi_reduction <add>, %232, %cst_93 [1] : vector<1x8xf32> to vector<1xf32>
      %234 = vector.shape_cast %233 : vector<1xf32> to vector<1x1xf32>
      %235 = tpu.reciprocal %234 {approx = true} : vector<1x1xf32> -> vector<1x1xf32>
      %236 = vector.broadcast %235 : vector<1x1xf32> to vector<1x8xf32>
      %237 = arith.mulf %232, %236 : vector<1x8xf32>
      %c0_94 = arith.constant 0 : index
      %c0_95 = arith.constant 0 : index
      %238 = vector.load %arg21[%c0_94, %c0_95] : memref<8x32xf32, #tpu.memory_space<vmem>>, vector<8x32xf32>
      %cst_96 = arith.constant dense<0.000000e+00> : vector<1x32xf32>
      %239 = tpu.matmul %237, %238, %cst_96 {dimension_numbers = #tpu.dot_dimension_numbers<[1], [0], [0], [1], [0, 0, 1, 1], [], []>} : vector<1x8xf32>, vector<8x32xf32>, vector<1x32xf32> -> vector<1x32xf32>
      %240 = vector.extract_strided_slice %200 {offsets = [0, 3], sizes = [1, 1], strides = [1, 1]} : vector<1x4xi32> to vector<1x1xi32>
      %cst_97 = arith.constant 1.000000e+00 : f32
      %241 = vector.broadcast %cst_97 : f32 to vector<1x1xf32>
      %242 = vector.extract_strided_slice %200 {offsets = [0, 0], sizes = [1, 1], strides = [1, 1]} : vector<1x4xi32> to vector<1x1xi32>
      %c0_i32_98 = arith.constant 0 : i32
      %243 = vector.broadcast %c0_i32_98 : i32 to vector<1x1xi32>
      %244 = vector.broadcast %243 : vector<1x1xi32> to vector<16x1xi32>
      %245 = arith.cmpi sge, %201, %244 : vector<16x1xi32>
      %246 = vector.broadcast %242 : vector<1x1xi32> to vector<16x1xi32>
      %247 = arith.cmpi sle, %201, %246 : vector<16x1xi32>
      %248 = arith.andi %245, %247 : vector<16x1xi1>
      %249 = arith.extui %248 : vector<16x1xi1> to vector<16x1xi32>
      %250 = arith.sitofp %249 : vector<16x1xi32> to vector<16x1xf32>
      %251 = arith.subi %242, %243 : vector<1x1xi32>
      %c1_i32_99 = arith.constant 1 : i32
      %252 = vector.broadcast %c1_i32_99 : i32 to vector<1x1xi32>
      %253 = arith.addi %251, %252 : vector<1x1xi32>
      %c1_i32_100 = arith.constant 1 : i32
      %254 = vector.broadcast %c1_i32_100 : i32 to vector<1x1xi32>
      %255 = arith.maxsi %253, %254 : vector<1x1xi32>
      %256 = arith.sitofp %255 : vector<1x1xi32> to vector<1x1xf32>
      %257 = vector.broadcast %250 : vector<16x1xf32> to vector<16x32xf32>
      %258 = arith.mulf %194, %257 : vector<16x32xf32>
      %cst_101 = arith.constant dense<0.000000e+00> : vector<32xf32>
      %259 = vector.multi_reduction <add>, %258, %cst_101 [0] : vector<16x32xf32> to vector<32xf32>
      %260 = vector.shape_cast %259 : vector<32xf32> to vector<1x32xf32>
      %261 = vector.broadcast %241 : vector<1x1xf32> to vector<1x32xf32>
      %262 = arith.mulf %261, %260 : vector<1x32xf32>
      %263 = vector.broadcast %256 : vector<1x1xf32> to vector<1x32xf32>
      %264 = arith.divf %262, %263 : vector<1x32xf32>
      %c0_102 = arith.constant 0 : index
      %c0_103 = arith.constant 0 : index
      %265 = vector.load %arg22[%c0_102, %c0_103] : memref<1x32xf32, #tpu.memory_space<vmem>>, vector<1x32xf32>
      %266 = arith.mulf %264, %265 : vector<1x32xf32>
      %cst_104 = arith.constant dense<0.000000e+00> : vector<1xf32>
      %267 = vector.multi_reduction <add>, %266, %cst_104 [1] : vector<1x32xf32> to vector<1xf32>
      %268 = vector.shape_cast %267 : vector<1xf32> to vector<1x1xf32>
      %c0_105 = arith.constant 0 : index
      %c0_106 = arith.constant 0 : index
      %269 = vector.load %arg23[%c0_105, %c0_106] : memref<1x1xf32, #tpu.memory_space<vmem>>, vector<1x1xf32>
      %270 = arith.addf %268, %269 : vector<1x1xf32>
      %271 = arith.cmpi eq, %242, %240 : vector<1x1xi32>
      %272 = vector.extract_strided_slice %200 {offsets = [0, 1], sizes = [1, 1], strides = [1, 1]} : vector<1x4xi32> to vector<1x1xi32>
      %c0_i32_107 = arith.constant 0 : i32
      %273 = vector.broadcast %c0_i32_107 : i32 to vector<1x1xi32>
      %274 = arith.cmpi eq, %272, %273 : vector<1x1xi32>
      %275 = arith.ori %271, %274 : vector<1x1xi1>
      %276 = arith.extui %275 : vector<1x1xi1> to vector<1x1xi32>
      %277 = arith.sitofp %276 : vector<1x1xi32> to vector<1x1xf32>
      %cst_108 = arith.constant 1.000000e+00 : f32
      %278 = vector.broadcast %cst_108 : f32 to vector<1x1xf32>
      %279 = arith.subf %278, %277 : vector<1x1xf32>
      %280 = arith.mulf %241, %279 : vector<1x1xf32>
      %281 = vector.extract_strided_slice %200 {offsets = [0, 1], sizes = [1, 1], strides = [1, 1]} : vector<1x4xi32> to vector<1x1xi32>
      %282 = vector.extract_strided_slice %200 {offsets = [0, 0], sizes = [1, 1], strides = [1, 1]} : vector<1x4xi32> to vector<1x1xi32>
      %c1_i32_109 = arith.constant 1 : i32
      %283 = vector.broadcast %c1_i32_109 : i32 to vector<1x1xi32>
      %284 = arith.addi %282, %283 : vector<1x1xi32>
      %285 = vector.broadcast %284 : vector<1x1xi32> to vector<16x1xi32>
      %286 = arith.cmpi sge, %201, %285 : vector<16x1xi32>
      %287 = vector.broadcast %281 : vector<1x1xi32> to vector<16x1xi32>
      %288 = arith.cmpi sle, %201, %287 : vector<16x1xi32>
      %289 = arith.andi %286, %288 : vector<16x1xi1>
      %290 = arith.extui %289 : vector<16x1xi1> to vector<16x1xi32>
      %291 = arith.sitofp %290 : vector<16x1xi32> to vector<16x1xf32>
      %292 = arith.subi %281, %284 : vector<1x1xi32>
      %c1_i32_110 = arith.constant 1 : i32
      %293 = vector.broadcast %c1_i32_110 : i32 to vector<1x1xi32>
      %294 = arith.addi %292, %293 : vector<1x1xi32>
      %c1_i32_111 = arith.constant 1 : i32
      %295 = vector.broadcast %c1_i32_111 : i32 to vector<1x1xi32>
      %296 = arith.maxsi %294, %295 : vector<1x1xi32>
      %297 = arith.sitofp %296 : vector<1x1xi32> to vector<1x1xf32>
      %298 = vector.broadcast %291 : vector<16x1xf32> to vector<16x32xf32>
      %299 = arith.mulf %194, %298 : vector<16x32xf32>
      %cst_112 = arith.constant dense<0.000000e+00> : vector<32xf32>
      %300 = vector.multi_reduction <add>, %299, %cst_112 [0] : vector<16x32xf32> to vector<32xf32>
      %301 = vector.shape_cast %300 : vector<32xf32> to vector<1x32xf32>
      %302 = vector.broadcast %280 : vector<1x1xf32> to vector<1x32xf32>
      %303 = arith.mulf %302, %301 : vector<1x32xf32>
      %304 = vector.broadcast %297 : vector<1x1xf32> to vector<1x32xf32>
      %305 = arith.divf %303, %304 : vector<1x32xf32>
      %c0_113 = arith.constant 0 : index
      %c0_114 = arith.constant 0 : index
      %306 = vector.load %arg22[%c0_113, %c0_114] : memref<1x32xf32, #tpu.memory_space<vmem>>, vector<1x32xf32>
      %307 = arith.mulf %305, %306 : vector<1x32xf32>
      %cst_115 = arith.constant dense<0.000000e+00> : vector<1xf32>
      %308 = vector.multi_reduction <add>, %307, %cst_115 [1] : vector<1x32xf32> to vector<1xf32>
      %309 = vector.shape_cast %308 : vector<1xf32> to vector<1x1xf32>
      %c0_116 = arith.constant 0 : index
      %c0_117 = arith.constant 0 : index
      %310 = vector.load %arg23[%c0_116, %c0_117] : memref<1x1xf32, #tpu.memory_space<vmem>>, vector<1x1xf32>
      %311 = arith.addf %309, %310 : vector<1x1xf32>
      %312 = arith.cmpi eq, %281, %240 : vector<1x1xi32>
      %313 = vector.extract_strided_slice %200 {offsets = [0, 2], sizes = [1, 1], strides = [1, 1]} : vector<1x4xi32> to vector<1x1xi32>
      %c0_i32_118 = arith.constant 0 : i32
      %314 = vector.broadcast %c0_i32_118 : i32 to vector<1x1xi32>
      %315 = arith.cmpi eq, %313, %314 : vector<1x1xi32>
      %316 = arith.ori %312, %315 : vector<1x1xi1>
      %317 = arith.extui %316 : vector<1x1xi1> to vector<1x1xi32>
      %318 = arith.sitofp %317 : vector<1x1xi32> to vector<1x1xf32>
      %cst_119 = arith.constant 1.000000e+00 : f32
      %319 = vector.broadcast %cst_119 : f32 to vector<1x1xf32>
      %320 = arith.subf %319, %318 : vector<1x1xf32>
      %321 = arith.mulf %280, %320 : vector<1x1xf32>
      %322 = vector.extract_strided_slice %200 {offsets = [0, 2], sizes = [1, 1], strides = [1, 1]} : vector<1x4xi32> to vector<1x1xi32>
      %323 = vector.extract_strided_slice %200 {offsets = [0, 1], sizes = [1, 1], strides = [1, 1]} : vector<1x4xi32> to vector<1x1xi32>
      %c1_i32_120 = arith.constant 1 : i32
      %324 = vector.broadcast %c1_i32_120 : i32 to vector<1x1xi32>
      %325 = arith.addi %323, %324 : vector<1x1xi32>
      %326 = vector.broadcast %325 : vector<1x1xi32> to vector<16x1xi32>
      %327 = arith.cmpi sge, %201, %326 : vector<16x1xi32>
      %328 = vector.broadcast %322 : vector<1x1xi32> to vector<16x1xi32>
      %329 = arith.cmpi sle, %201, %328 : vector<16x1xi32>
      %330 = arith.andi %327, %329 : vector<16x1xi1>
      %331 = arith.extui %330 : vector<16x1xi1> to vector<16x1xi32>
      %332 = arith.sitofp %331 : vector<16x1xi32> to vector<16x1xf32>
      %333 = arith.subi %322, %325 : vector<1x1xi32>
      %c1_i32_121 = arith.constant 1 : i32
      %334 = vector.broadcast %c1_i32_121 : i32 to vector<1x1xi32>
      %335 = arith.addi %333, %334 : vector<1x1xi32>
      %c1_i32_122 = arith.constant 1 : i32
      %336 = vector.broadcast %c1_i32_122 : i32 to vector<1x1xi32>
      %337 = arith.maxsi %335, %336 : vector<1x1xi32>
      %338 = arith.sitofp %337 : vector<1x1xi32> to vector<1x1xf32>
      %339 = vector.broadcast %332 : vector<16x1xf32> to vector<16x32xf32>
      %340 = arith.mulf %194, %339 : vector<16x32xf32>
      %cst_123 = arith.constant dense<0.000000e+00> : vector<32xf32>
      %341 = vector.multi_reduction <add>, %340, %cst_123 [0] : vector<16x32xf32> to vector<32xf32>
      %342 = vector.shape_cast %341 : vector<32xf32> to vector<1x32xf32>
      %343 = vector.broadcast %321 : vector<1x1xf32> to vector<1x32xf32>
      %344 = arith.mulf %343, %342 : vector<1x32xf32>
      %345 = vector.broadcast %338 : vector<1x1xf32> to vector<1x32xf32>
      %346 = arith.divf %344, %345 : vector<1x32xf32>
      %c0_124 = arith.constant 0 : index
      %c0_125 = arith.constant 0 : index
      %347 = vector.load %arg22[%c0_124, %c0_125] : memref<1x32xf32, #tpu.memory_space<vmem>>, vector<1x32xf32>
      %348 = arith.mulf %346, %347 : vector<1x32xf32>
      %cst_126 = arith.constant dense<0.000000e+00> : vector<1xf32>
      %349 = vector.multi_reduction <add>, %348, %cst_126 [1] : vector<1x32xf32> to vector<1xf32>
      %350 = vector.shape_cast %349 : vector<1xf32> to vector<1x1xf32>
      %c0_127 = arith.constant 0 : index
      %c0_128 = arith.constant 0 : index
      %351 = vector.load %arg23[%c0_127, %c0_128] : memref<1x1xf32, #tpu.memory_space<vmem>>, vector<1x1xf32>
      %352 = arith.addf %350, %351 : vector<1x1xf32>
      %353 = arith.cmpi eq, %322, %240 : vector<1x1xi32>
      %354 = vector.extract_strided_slice %200 {offsets = [0, 3], sizes = [1, 1], strides = [1, 1]} : vector<1x4xi32> to vector<1x1xi32>
      %c0_i32_129 = arith.constant 0 : i32
      %355 = vector.broadcast %c0_i32_129 : i32 to vector<1x1xi32>
      %356 = arith.cmpi eq, %354, %355 : vector<1x1xi32>
      %357 = arith.ori %353, %356 : vector<1x1xi1>
      %358 = arith.extui %357 : vector<1x1xi1> to vector<1x1xi32>
      %359 = arith.sitofp %358 : vector<1x1xi32> to vector<1x1xf32>
      %cst_130 = arith.constant 1.000000e+00 : f32
      %360 = vector.broadcast %cst_130 : f32 to vector<1x1xf32>
      %361 = arith.subf %360, %359 : vector<1x1xf32>
      %362 = arith.mulf %321, %361 : vector<1x1xf32>
      %363 = vector.extract_strided_slice %200 {offsets = [0, 3], sizes = [1, 1], strides = [1, 1]} : vector<1x4xi32> to vector<1x1xi32>
      %364 = vector.extract_strided_slice %200 {offsets = [0, 2], sizes = [1, 1], strides = [1, 1]} : vector<1x4xi32> to vector<1x1xi32>
      %c1_i32_131 = arith.constant 1 : i32
      %365 = vector.broadcast %c1_i32_131 : i32 to vector<1x1xi32>
      %366 = arith.addi %364, %365 : vector<1x1xi32>
      %367 = vector.broadcast %366 : vector<1x1xi32> to vector<16x1xi32>
      %368 = arith.cmpi sge, %201, %367 : vector<16x1xi32>
      %369 = vector.broadcast %363 : vector<1x1xi32> to vector<16x1xi32>
      %370 = arith.cmpi sle, %201, %369 : vector<16x1xi32>
      %371 = arith.andi %368, %370 : vector<16x1xi1>
      %372 = arith.extui %371 : vector<16x1xi1> to vector<16x1xi32>
      %373 = arith.sitofp %372 : vector<16x1xi32> to vector<16x1xf32>
      %374 = arith.subi %363, %366 : vector<1x1xi32>
      %c1_i32_132 = arith.constant 1 : i32
      %375 = vector.broadcast %c1_i32_132 : i32 to vector<1x1xi32>
      %376 = arith.addi %374, %375 : vector<1x1xi32>
      %c1_i32_133 = arith.constant 1 : i32
      %377 = vector.broadcast %c1_i32_133 : i32 to vector<1x1xi32>
      %378 = arith.maxsi %376, %377 : vector<1x1xi32>
      %379 = arith.sitofp %378 : vector<1x1xi32> to vector<1x1xf32>
      %380 = vector.broadcast %373 : vector<16x1xf32> to vector<16x32xf32>
      %381 = arith.mulf %194, %380 : vector<16x32xf32>
      %cst_134 = arith.constant dense<0.000000e+00> : vector<32xf32>
      %382 = vector.multi_reduction <add>, %381, %cst_134 [0] : vector<16x32xf32> to vector<32xf32>
      %383 = vector.shape_cast %382 : vector<32xf32> to vector<1x32xf32>
      %384 = vector.broadcast %362 : vector<1x1xf32> to vector<1x32xf32>
      %385 = arith.mulf %384, %383 : vector<1x32xf32>
      %386 = vector.broadcast %379 : vector<1x1xf32> to vector<1x32xf32>
      %387 = arith.divf %385, %386 : vector<1x32xf32>
      %c0_135 = arith.constant 0 : index
      %c0_136 = arith.constant 0 : index
      %388 = vector.load %arg22[%c0_135, %c0_136] : memref<1x32xf32, #tpu.memory_space<vmem>>, vector<1x32xf32>
      %389 = arith.mulf %387, %388 : vector<1x32xf32>
      %cst_137 = arith.constant dense<0.000000e+00> : vector<1xf32>
      %390 = vector.multi_reduction <add>, %389, %cst_137 [1] : vector<1x32xf32> to vector<1xf32>
      %391 = vector.shape_cast %390 : vector<1xf32> to vector<1x1xf32>
      %c0_138 = arith.constant 0 : index
      %c0_139 = arith.constant 0 : index
      %392 = vector.load %arg23[%c0_138, %c0_139] : memref<1x1xf32, #tpu.memory_space<vmem>>, vector<1x1xf32>
      %393 = arith.addf %391, %392 : vector<1x1xf32>
      %394 = tpu.concatenate %264, %305, %346, %387 in 1 : vector<1x32xf32>, vector<1x32xf32>, vector<1x32xf32>, vector<1x32xf32> -> vector<1x128xf32>
      %395 = vector.extract_strided_slice %4 {offsets = [0, 16], sizes = [1, 4], strides = [1, 1]} : vector<1x128xf32> to vector<1x4xf32>
      %396 = tpu.concatenate %270, %311, %352, %393 in 1 : vector<1x1xf32>, vector<1x1xf32>, vector<1x1xf32>, vector<1x1xf32> -> vector<1x4xf32>
      %397 = arith.negf %396 : vector<1x4xf32>
      %398 = math.exp %397 : vector<1x4xf32>
      %cst_140 = arith.constant 1.000000e+00 : f32
      %399 = vector.broadcast %cst_140 : f32 to vector<1x4xf32>
      %400 = arith.addf %399, %398 : vector<1x4xf32>
      %401 = arith.divf %399, %400 : vector<1x4xf32>
      %402 = arith.mulf %401, %395 : vector<1x4xf32>
      %cst_141 = arith.constant 0.000000e+00 : f32
      %403 = vector.broadcast %cst_141 : f32 to vector<1x96xf32>
      %cst_142 = arith.constant 0.000000e+00 : f32
      %404 = vector.broadcast %cst_142 : f32 to vector<1x96xf32>
      %cst_143 = arith.constant 0.000000e+00 : f32
      %405 = vector.broadcast %cst_143 : f32 to vector<1x124xf32>
      %406 = tpu.concatenate %394, %223, %403, %239, %404, %402, %405 in 1 : vector<1x128xf32>, vector<1x32xf32>, vector<1x96xf32>, vector<1x32xf32>, vector<1x96xf32>, vector<1x4xf32>, vector<1x124xf32> -> vector<1x512xf32>
      %c0_144 = arith.constant 0 : index
      %c0_145 = arith.constant 0 : index
      %c0_146 = arith.constant 0 : index
      %407 = vector.load %arg24[%c0_144, %c0_145, %c0_146] : memref<1x1x512xf32, #tpu.memory_space<vmem>>, vector<1x1x512xf32>
      %408 = vector.shape_cast %407 : vector<1x1x512xf32> to vector<1x512xf32>
      %409 = vector.shape_cast %406 : vector<1x512xf32> to vector<1x1x512xf32>
      tpu.vector_store %arg24[%c0_144, %c0_145, %c0_146], %409 {strides = array<i32>} : memref<1x1x512xf32, #tpu.memory_space<vmem>>, vector<1x1x512xf32>,
    } else {
    }
    return
  }
  func.func @transform_0(%arg0: i32, %arg1: i32) -> (i32, i32, i32) {
    %c0_i32 = arith.constant 0 : i32
    %c0_i32_0 = arith.constant 0 : i32
    %c0_i32_1 = arith.constant 0 : i32
    return %arg0, %c0_i32, %c0_i32_0 : i32, i32, i32
  }
  func.func @transform_1(%arg0: i32, %arg1: i32) -> (i32, i32, i32) {
    %c0_i32 = arith.constant 0 : i32
    %c0_i32_0 = arith.constant 0 : i32
    %c0_i32_1 = arith.constant 0 : i32
    return %arg0, %c0_i32, %c0_i32_0 : i32, i32, i32
  }
  func.func @transform_2(%arg0: i32, %arg1: i32) -> (i32, i32, i32) {
    %c0_i32 = arith.constant 0 : i32
    %c0_i32_0 = arith.constant 0 : i32
    %c0_i32_1 = arith.constant 0 : i32
    return %arg0, %c0_i32, %c0_i32_0 : i32, i32, i32
  }
  func.func @transform_3(%arg0: i32, %arg1: i32) -> (i32, i32) {
    %c0_i32 = arith.constant 0 : i32
    %c0_i32_0 = arith.constant 0 : i32
    %c0_i32_1 = arith.constant 0 : i32
    return %c0_i32, %c0_i32_0 : i32, i32
  }
  func.func @transform_4(%arg0: i32, %arg1: i32) -> (i32, i32) {
    %c0_i32 = arith.constant 0 : i32
    %c0_i32_0 = arith.constant 0 : i32
    %c0_i32_1 = arith.constant 0 : i32
    return %c0_i32, %c0_i32_0 : i32, i32
  }
  func.func @transform_5(%arg0: i32, %arg1: i32) -> (i32, i32, i32) {
    %c0_i32 = arith.constant 0 : i32
    %c0_i32_0 = arith.constant 0 : i32
    %c0_i32_1 = arith.constant 0 : i32
    return %arg1, %c0_i32, %c0_i32_0 : i32, i32, i32
  }
  func.func @transform_6(%arg0: i32, %arg1: i32) -> (i32, i32, i32) {
    %c0_i32 = arith.constant 0 : i32
    %c0_i32_0 = arith.constant 0 : i32
    %c0_i32_1 = arith.constant 0 : i32
    return %arg1, %c0_i32, %c0_i32_0 : i32, i32, i32
  }
  func.func @transform_7(%arg0: i32, %arg1: i32) -> (i32, i32, i32) {
    %c0_i32 = arith.constant 0 : i32
    %c0_i32_0 = arith.constant 0 : i32
    %c0_i32_1 = arith.constant 0 : i32
    return %arg1, %c0_i32, %c0_i32_0 : i32, i32, i32
  }
  func.func @transform_8(%arg0: i32, %arg1: i32) -> (i32, i32, i32) {
    %c0_i32 = arith.constant 0 : i32
    %c0_i32_0 = arith.constant 0 : i32
    %c0_i32_1 = arith.constant 0 : i32
    return %arg1, %c0_i32, %c0_i32_0 : i32, i32, i32
  }
  func.func @transform_9(%arg0: i32, %arg1: i32) -> (i32, i32, i32) {
    %c0_i32 = arith.constant 0 : i32
    %c0_i32_0 = arith.constant 0 : i32
    %c0_i32_1 = arith.constant 0 : i32
    return %arg1, %c0_i32, %c0_i32_0 : i32, i32, i32
  }
  func.func @transform_10(%arg0: i32, %arg1: i32) -> (i32, i32, i32) {
    %c0_i32 = arith.constant 0 : i32
    %c0_i32_0 = arith.constant 0 : i32
    %c0_i32_1 = arith.constant 0 : i32
    return %arg1, %c0_i32, %c0_i32_0 : i32, i32, i32
  }
  func.func @transform_11(%arg0: i32, %arg1: i32) -> (i32, i32, i32) {
    %c0_i32 = arith.constant 0 : i32
    %c0_i32_0 = arith.constant 0 : i32
    %c0_i32_1 = arith.constant 0 : i32
    return %arg1, %c0_i32, %c0_i32_0 : i32, i32, i32
  }
  func.func @transform_12(%arg0: i32, %arg1: i32) -> (i32, i32, i32) {
    %c0_i32 = arith.constant 0 : i32
    %c0_i32_0 = arith.constant 0 : i32
    %c0_i32_1 = arith.constant 0 : i32
    return %arg1, %c0_i32, %c0_i32_0 : i32, i32, i32
  }
  func.func @transform_13(%arg0: i32, %arg1: i32) -> (i32, i32, i32) {
    %c0_i32 = arith.constant 0 : i32
    %c0_i32_0 = arith.constant 0 : i32
    %c0_i32_1 = arith.constant 0 : i32
    return %arg1, %c0_i32, %c0_i32_0 : i32, i32, i32
  }
  func.func @transform_14(%arg0: i32, %arg1: i32) -> (i32, i32, i32) {
    %c0_i32 = arith.constant 0 : i32
    %c0_i32_0 = arith.constant 0 : i32
    %c0_i32_1 = arith.constant 0 : i32
    return %arg1, %c0_i32, %c0_i32_0 : i32, i32, i32
  }
  func.func @transform_15(%arg0: i32, %arg1: i32) -> (i32, i32, i32) {
    %c0_i32 = arith.constant 0 : i32
    %c0_i32_0 = arith.constant 0 : i32
    %c0_i32_1 = arith.constant 0 : i32
    return %arg1, %c0_i32, %c0_i32_0 : i32, i32, i32
  }
  func.func @transform_16(%arg0: i32, %arg1: i32) -> (i32, i32, i32) {
    %c0_i32 = arith.constant 0 : i32
    %c0_i32_0 = arith.constant 0 : i32
    %c0_i32_1 = arith.constant 0 : i32
    return %arg1, %c0_i32, %c0_i32_0 : i32, i32, i32
  }
  func.func @transform_17(%arg0: i32, %arg1: i32) -> (i32, i32) {
    %c0_i32 = arith.constant 0 : i32
    %c0_i32_0 = arith.constant 0 : i32
    %c0_i32_1 = arith.constant 0 : i32
    return %c0_i32, %c0_i32_0 : i32, i32
  }
  func.func @transform_18(%arg0: i32, %arg1: i32) -> (i32, i32) {
    %c0_i32 = arith.constant 0 : i32
    %c0_i32_0 = arith.constant 0 : i32
    %c0_i32_1 = arith.constant 0 : i32
    return %c0_i32, %c0_i32_0 : i32, i32
  }
  func.func @transform_19(%arg0: i32, %arg1: i32) -> (i32, i32) {
    %c0_i32 = arith.constant 0 : i32
    %c0_i32_0 = arith.constant 0 : i32
    %c0_i32_1 = arith.constant 0 : i32
    return %c0_i32, %c0_i32_0 : i32, i32
  }
  func.func @transform_20(%arg0: i32, %arg1: i32) -> (i32, i32) {
    %c0_i32 = arith.constant 0 : i32
    %c0_i32_0 = arith.constant 0 : i32
    %c0_i32_1 = arith.constant 0 : i32
    return %c0_i32, %c0_i32_0 : i32, i32
  }
  func.func @transform_21(%arg0: i32, %arg1: i32) -> (i32, i32) {
    %c0_i32 = arith.constant 0 : i32
    %c0_i32_0 = arith.constant 0 : i32
    %c0_i32_1 = arith.constant 0 : i32
    return %c0_i32, %c0_i32_0 : i32, i32
  }
  func.func @transform_22(%arg0: i32, %arg1: i32) -> (i32, i32, i32) {
    %c0_i32 = arith.constant 0 : i32
    %c0_i32_0 = arith.constant 0 : i32
    %c0_i32_1 = arith.constant 0 : i32
    return %arg0, %c0_i32, %c0_i32_0 : i32, i32, i32
  }
}

</mosaic_0001>

<llo_original>
// kernel: summarizer_forward.1
$region0: #{summarizer_forward.1}
  #allocation0 [shape = 'u32[]', space=smem, size = 0x4, offset = 0x4, fixed_abs, tag = 'smem constant byte address 0x4 - core index']
  #allocation1 [shape = 'u32[144,128]{1,0:T(1,128)}', space=vmem, size = 0x12000, scoped, tag = 'internal scratch']
  #allocation2 [shape = 'f32[16,32]{1,0:T(8,128)}', space=vmem, size = 0x2000, scoped, tag = 'scratch operand']
  #allocation3 [shape = 'f32[1,1]{1,0:T(1,128)S(1)}', space=vmem, size = 0x200, scoped, tag = 'scoped memory for summarizer_forward.1']
  %s0 = inlined_call_operand.vmem [shape: f32[2,16,32], index: 0, kind: input, shape index: {}]
  %s1 = inlined_call_operand.vmem [shape: f32[2,1,128], index: 1, kind: input, shape index: {}]
  %s2 = inlined_call_operand.vmem [shape: s32[2,1,4], index: 2, kind: input, shape index: {}]
  %s3 = inlined_call_operand.vmem [shape: f32[1,32], index: 3, kind: input, shape index: {}]
  %s4 = inlined_call_operand.vmem [shape: f32[1,32], index: 4, kind: input, shape index: {}]
  %s5 = inlined_call_operand.vmem [shape: bf16[2,32,96], index: 5, kind: input, shape index: {}]
  %s6 = inlined_call_operand.vmem [shape: f32[2,1,96], index: 6, kind: input, shape index: {}]
  %s7 = inlined_call_operand.vmem [shape: bf16[2,32,32], index: 7, kind: input, shape index: {}]
  %s8 = inlined_call_operand.vmem [shape: f32[2,1,32], index: 8, kind: input, shape index: {}]
  %s9 = inlined_call_operand.vmem [shape: f32[2,1,32], index: 9, kind: input, shape index: {}]
  %s10 = inlined_call_operand.vmem [shape: f32[2,1,32], index: 10, kind: input, shape index: {}]
  %s11 = inlined_call_operand.vmem [shape: bf16[2,32,64], index: 11, kind: input, shape index: {}]
  %s12 = inlined_call_operand.vmem [shape: f32[2,1,64], index: 12, kind: input, shape index: {}]
  %s13 = inlined_call_operand.vmem [shape: bf16[2,64,32], index: 13, kind: input, shape index: {}]
  %s14 = inlined_call_operand.vmem [shape: f32[2,1,32], index: 14, kind: input, shape index: {}]
  %s15 = inlined_call_operand.vmem [shape: f32[2,1,32], index: 15, kind: input, shape index: {}]
  %s16 = inlined_call_operand.vmem [shape: f32[2,1,32], index: 16, kind: input, shape index: {}]
  %s17 = inlined_call_operand.vmem [shape: f32[32,8], index: 17, kind: input, shape index: {}]
  %s18 = inlined_call_operand.vmem [shape: f32[1,8], index: 18, kind: input, shape index: {}]
  %s19 = inlined_call_operand.vmem [shape: f32[8,32], index: 19, kind: input, shape index: {}]
  %s20 = inlined_call_operand.vmem [shape: f32[1,32], index: 20, kind: input, shape index: {}]
  %s21 = inlined_call_operand.<no memory space> [shape: f32[1,1], index: 21, kind: input, shape index: {}]
  %s22 = inlined_call_operand.vmem [shape: f32[2,1,512], index: 22, kind: output, shape index: {}]
  %s23 = sld [smem:[#allocation0]]
  $region129: #{summarizer_forward.1} parent=0
    _
  %s25 = ssub.s32 1, %s23
  %s26 = scalar_select 0, %s25, %s23
  %v27 = vstv %s21
  %28 = vst [vmem:[#allocation3] sm:$0x1] %v27
  loop: start=0, step=1, limit=6
  $region2: #{summarizer_forward.1} parent=0 // loop_pre_header
    _
  $region3: #{summarizer_forward.1} parent=0 // loop_header
    %s30 = sphi 0, %s34
    %p31 = scmp.ge.s32.totalorder %s30, 6
    %s37 = sphi 0, %s49
    %s38 = sphi 0, %s45
    %s39 = sphi 0, %s37
    %s40 = sphi 0, %s38
    %s41 = sphi 0, %s39
    %s42 = sphi 0, %s40
    %s52 = sphi 0, %s54
    %s55 = sphi 0, %s52
    %s56 = sphi 0, %s55
    %s72 = sphi 0, %s56
    %s78 = sphi 0, %s80
    %s81 = sphi 0, %s78
    %s82 = sphi 0, %s81
    %s98 = sphi 0, %s82
    %s104 = sphi 0, %s106
    %s107 = sphi 0, %s104
    %s108 = sphi 0, %s107
    %s124 = sphi 0, %s108
    %s128 = sphi 0, %s128
    %s130 = sphi 0, %s128
    %s131 = sphi 0, %s130
    %s145 = sphi 0, %s131
    %s149 = sphi 0, %s149
    %s151 = sphi 0, %s149
    %s152 = sphi 0, %s151
    %s166 = sphi 0, %s152
    %s172 = sphi 0, %s174
    %s175 = sphi 0, %s172
    %s176 = sphi 0, %s175
    %s192 = sphi 0, %s176
    %s198 = sphi 0, %s200
    %s201 = sphi 0, %s198
    %s202 = sphi 0, %s201
    %s218 = sphi 0, %s202
    %s224 = sphi 0, %s226
    %s227 = sphi 0, %s224
    %s228 = sphi 0, %s227
    %s244 = sphi 0, %s228
    %s250 = sphi 0, %s252
    %s253 = sphi 0, %s250
    %s254 = sphi 0, %s253
    %s270 = sphi 0, %s254
    %s276 = sphi 0, %s278
    %s279 = sphi 0, %s276
    %s280 = sphi 0, %s279
    %s296 = sphi 0, %s280
    %s302 = sphi 0, %s304
    %s305 = sphi 0, %s302
    %s306 = sphi 0, %s305
    %s322 = sphi 0, %s306
    %s328 = sphi 0, %s330
    %s331 = sphi 0, %s328
    %s332 = sphi 0, %s331
    %s348 = sphi 0, %s332
    %s354 = sphi 0, %s356
    %s357 = sphi 0, %s354
    %s358 = sphi 0, %s357
    %s374 = sphi 0, %s358
    %s380 = sphi 0, %s382
    %s383 = sphi 0, %s380
    %s384 = sphi 0, %s383
    %s400 = sphi 0, %s384
    %s406 = sphi 0, %s408
    %s409 = sphi 0, %s406
    %s410 = sphi 0, %s409
    %s426 = sphi 0, %s410
    %s432 = sphi 0, %s434
    %s435 = sphi 0, %s432
    %s436 = sphi 0, %s435
    %s452 = sphi 0, %s436
    %s458 = sphi 0, %s460
    %s461 = sphi 0, %s458
    %s462 = sphi 0, %s461
    %s478 = sphi 0, %s462
    %s482 = sphi 0, %s482
    %s484 = sphi 0, %s482
    %s485 = sphi 0, %s484
    %s499 = sphi 0, %s485
    %s503 = sphi 0, %s503
    %s505 = sphi 0, %s503
    %s506 = sphi 0, %s505
    %s520 = sphi 0, %s506
    %s524 = sphi 0, %s524
    %s526 = sphi 0, %s524
    %s527 = sphi 0, %s526
    %s541 = sphi 0, %s527
    %s545 = sphi 0, %s545
    %s547 = sphi 0, %s545
    %s548 = sphi 0, %s547
    %s562 = sphi 0, %s548
    %s566 = sphi 0, %s566
    %s568 = sphi 0, %s566
    %s569 = sphi 0, %s568
    %s583 = sphi 0, %s569
    %s589 = sphi 0, %s591
    %s592 = sphi 0, %s589
    %s593 = sphi 0, %s592
    %s609 = sphi 0, %s593
  $region4: #{summarizer_forward.1} parent=0 // loop_header_branch
    %33 = sbr.rel (%p31) target = $region8
  $region5: #{summarizer_forward.1} parent=0 // loop_body
    %s35 = ssub.s32 %s30, 1
    %s36 = ssub.s32 %s30, 2
    %s43 = sadd.s32 1, %s38
    %p44 = scmp.ge.s32.totalorder %s43, 2
    %s45 = scalar_select %p44, 0, %s43
    %s46 = sadd.s32 1, %s37
    %s47 = scalar_select %p44, %s46, %s37
    %p48 = scmp.ge.s32.totalorder %s47, 2
    %s49 = scalar_select %p48, 0, %s47
    %s50 = ssub.s32 %s37, %s49
    %p51 = scmp.eq.s32.totalorder %s50, 0
    %s53 = sadd.s32 %s52, 1
    %s54 = scalar_select %p51, %s52, %s53
    %p57 = pneg %p51
    %p58 = scmp.eq.s32.totalorder %s30, 3
    %p59 = por %p57, %p58
    %p60 = scmp.ne.s32.totalorder %s52, %s55
    %p61 = scmp.eq.s32.totalorder %s30, 0
    %p62 = por %p60, %p61
    %p63 = scmp.ne.s32.totalorder %s52, %s55
    %p64 = scmp.eq.s32.totalorder %s35, 3
    %p65 = por %p63, %p64
    %p66 = scmp.ne.s32.totalorder %s55, %s56
    %p67 = scmp.eq.s32.totalorder %s35, 0
    %p68 = por %p66, %p67
    %p69 = scmp.ne.s32.totalorder %s55, %s56
    %p70 = scmp.eq.s32.totalorder %s36, 3
    %p71 = por %p69, %p70
    %p73 = scmp.ne.s32.totalorder %s56, %s72
    %p74 = scmp.eq.s32.totalorder %s36, 0
    %p75 = por %p73, %p74
    %s76 = ssub.s32 %s37, %s49
    %p77 = scmp.eq.s32.totalorder %s76, 0
    %s79 = sadd.s32 %s78, 1
    %s80 = scalar_select %p77, %s78, %s79
    %p83 = pneg %p77
    %p84 = scmp.eq.s32.totalorder %s30, 3
    %p85 = por %p83, %p84
    %p86 = scmp.ne.s32.totalorder %s78, %s81
    %p87 = scmp.eq.s32.totalorder %s30, 0
    %p88 = por %p86, %p87
    %p89 = scmp.ne.s32.totalorder %s78, %s81
    %p90 = scmp.eq.s32.totalorder %s35, 3
    %p91 = por %p89, %p90
    %p92 = scmp.ne.s32.totalorder %s81, %s82
    %p93 = scmp.eq.s32.totalorder %s35, 0
    %p94 = por %p92, %p93
    %p95 = scmp.ne.s32.totalorder %s81, %s82
    %p96 = scmp.eq.s32.totalorder %s36, 3
    %p97 = por %p95, %p96
    %p99 = scmp.ne.s32.totalorder %s82, %s98
    %p100 = scmp.eq.s32.totalorder %s36, 0
    %p101 = por %p99, %p100
    %s102 = ssub.s32 %s37, %s49
    %p103 = scmp.eq.s32.totalorder %s102, 0
    %s105 = sadd.s32 %s104, 1
    %s106 = scalar_select %p103, %s104, %s105
    %p109 = pneg %p103
    %p110 = scmp.eq.s32.totalorder %s30, 3
    %p111 = por %p109, %p110
    %p112 = scmp.ne.s32.totalorder %s104, %s107
    %p113 = scmp.eq.s32.totalorder %s30, 0
    %p114 = por %p112, %p113
    %p115 = scmp.ne.s32.totalorder %s104, %s107
    %p116 = scmp.eq.s32.totalorder %s35, 3
    %p117 = por %p115, %p116
    %p118 = scmp.ne.s32.totalorder %s107, %s108
    %p119 = scmp.eq.s32.totalorder %s35, 0
    %p120 = por %p118, %p119
    %p121 = scmp.ne.s32.totalorder %s107, %s108
    %p122 = scmp.eq.s32.totalorder %s36, 3
    %p123 = por %p121, %p122
    %p125 = scmp.ne.s32.totalorder %s108, %s124
    %p126 = scmp.eq.s32.totalorder %s36, 0
    %p127 = por %p125, %p126
    %s129 = sadd.s32 %s128, 1
    %p132 = scmp.eq.s32.totalorder %s30, 3
    %p133 = scmp.ne.s32.totalorder %s128, %s130
    %p134 = scmp.eq.s32.totalorder %s30, 0
    %p135 = por %p133, %p134
    %p136 = scmp.ne.s32.totalorder %s128, %s130
    %p137 = scmp.eq.s32.totalorder %s35, 3
    %p138 = por %p136, %p137
    %p139 = scmp.ne.s32.totalorder %s130, %s131
    %p140 = scmp.eq.s32.totalorder %s35, 0
    %p141 = por %p139, %p140
    %p142 = scmp.ne.s32.totalorder %s130, %s131
    %p143 = scmp.eq.s32.totalorder %s36, 3
    %p144 = por %p142, %p143
    %p146 = scmp.ne.s32.totalorder %s131, %s145
    %p147 = scmp.eq.s32.totalorder %s36, 0
    %p148 = por %p146, %p147
    %s150 = sadd.s32 %s149, 1
    %p153 = scmp.eq.s32.totalorder %s30, 3
    %p154 = scmp.ne.s32.totalorder %s149, %s151
    %p155 = scmp.eq.s32.totalorder %s30, 0
    %p156 = por %p154, %p155
    %p157 = scmp.ne.s32.totalorder %s149, %s151
    %p158 = scmp.eq.s32.totalorder %s35, 3
    %p159 = por %p157, %p158
    %p160 = scmp.ne.s32.totalorder %s151, %s152
    %p161 = scmp.eq.s32.totalorder %s35, 0
    %p162 = por %p160, %p161
    %p163 = scmp.ne.s32.totalorder %s151, %s152
    %p164 = scmp.eq.s32.totalorder %s36, 3
    %p165 = por %p163, %p164
    %p167 = scmp.ne.s32.totalorder %s152, %s166
    %p168 = scmp.eq.s32.totalorder %s36, 0
    %p169 = por %p167, %p168
    %s170 = ssub.s32 %s38, %s45
    %p171 = scmp.eq.s32.totalorder %s170, 0
    %s173 = sadd.s32 %s172, 1
    %s174 = scalar_select %p171, %s172, %s173
    %p177 = pneg %p171
    %p178 = scmp.eq.s32.totalorder %s30, 3
    %p179 = por %p177, %p178
    %p180 = scmp.ne.s32.totalorder %s172, %s175
    %p181 = scmp.eq.s32.totalorder %s30, 0
    %p182 = por %p180, %p181
    %p183 = scmp.ne.s32.totalorder %s172, %s175
    %p184 = scmp.eq.s32.totalorder %s35, 3
    %p185 = por %p183, %p184
    %p186 = scmp.ne.s32.totalorder %s175, %s176
    %p187 = scmp.eq.s32.totalorder %s35, 0
    %p188 = por %p186, %p187
    %p189 = scmp.ne.s32.totalorder %s175, %s176
    %p190 = scmp.eq.s32.totalorder %s36, 3
    %p191 = por %p189, %p190
    %p193 = scmp.ne.s32.totalorder %s176, %s192
    %p194 = scmp.eq.s32.totalorder %s36, 0
    %p195 = por %p193, %p194
    %s196 = ssub.s32 %s38, %s45
    %p197 = scmp.eq.s32.totalorder %s196, 0
    %s199 = sadd.s32 %s198, 1
    %s200 = scalar_select %p197, %s198, %s199
    %p203 = pneg %p197
    %p204 = scmp.eq.s32.totalorder %s30, 3
    %p205 = por %p203, %p204
    %p206 = scmp.ne.s32.totalorder %s198, %s201
    %p207 = scmp.eq.s32.totalorder %s30, 0
    %p208 = por %p206, %p207
    %p209 = scmp.ne.s32.totalorder %s198, %s201
    %p210 = scmp.eq.s32.totalorder %s35, 3
    %p211 = por %p209, %p210
    %p212 = scmp.ne.s32.totalorder %s201, %s202
    %p213 = scmp.eq.s32.totalorder %s35, 0
    %p214 = por %p212, %p213
    %p215 = scmp.ne.s32.totalorder %s201, %s202
    %p216 = scmp.eq.s32.totalorder %s36, 3
    %p217 = por %p215, %p216
    %p219 = scmp.ne.s32.totalorder %s202, %s218
    %p220 = scmp.eq.s32.totalorder %s36, 0
    %p221 = por %p219, %p220
    %s222 = ssub.s32 %s38, %s45
    %p223 = scmp.eq.s32.totalorder %s222, 0
    %s225 = sadd.s32 %s224, 1
    %s226 = scalar_select %p223, %s224, %s225
    %p229 = pneg %p223
    %p230 = scmp.eq.s32.totalorder %s30, 3
    %p231 = por %p229, %p230
    %p232 = scmp.ne.s32.totalorder %s224, %s227
    %p233 = scmp.eq.s32.totalorder %s30, 0
    %p234 = por %p232, %p233
    %p235 = scmp.ne.s32.totalorder %s224, %s227
    %p236 = scmp.eq.s32.totalorder %s35, 3
    %p237 = por %p235, %p236
    %p238 = scmp.ne.s32.totalorder %s227, %s228
    %p239 = scmp.eq.s32.totalorder %s35, 0
    %p240 = por %p238, %p239
    %p241 = scmp.ne.s32.totalorder %s227, %s228
    %p242 = scmp.eq.s32.totalorder %s36, 3
    %p243 = por %p241, %p242
    %p245 = scmp.ne.s32.totalorder %s228, %s244
    %p246 = scmp.eq.s32.totalorder %s36, 0
    %p247 = por %p245, %p246
    %s248 = ssub.s32 %s38, %s45
    %p249 = scmp.eq.s32.totalorder %s248, 0
    %s251 = sadd.s32 %s250, 1
    %s252 = scalar_select %p249, %s250, %s251
    %p255 = pneg %p249
    %p256 = scmp.eq.s32.totalorder %s30, 3
    %p257 = por %p255, %p256
    %p258 = scmp.ne.s32.totalorder %s250, %s253
    %p259 = scmp.eq.s32.totalorder %s30, 0
    %p260 = por %p258, %p259
    %p261 = scmp.ne.s32.totalorder %s250, %s253
    %p262 = scmp.eq.s32.totalorder %s35, 3
    %p263 = por %p261, %p262
    %p264 = scmp.ne.s32.totalorder %s253, %s254
    %p265 = scmp.eq.s32.totalorder %s35, 0
    %p266 = por %p264, %p265
    %p267 = scmp.ne.s32.totalorder %s253, %s254
    %p268 = scmp.eq.s32.totalorder %s36, 3
    %p269 = por %p267, %p268
    %p271 = scmp.ne.s32.totalorder %s254, %s270
    %p272 = scmp.eq.s32.totalorder %s36, 0
    %p273 = por %p271, %p272
    %s274 = ssub.s32 %s38, %s45
    %p275 = scmp.eq.s32.totalorder %s274, 0
    %s277 = sadd.s32 %s276, 1
    %s278 = scalar_select %p275, %s276, %s277
    %p281 = pneg %p275
    %p282 = scmp.eq.s32.totalorder %s30, 3
    %p283 = por %p281, %p282
    %p284 = scmp.ne.s32.totalorder %s276, %s279
    %p285 = scmp.eq.s32.totalorder %s30, 0
    %p286 = por %p284, %p285
    %p287 = scmp.ne.s32.totalorder %s276, %s279
    %p288 = scmp.eq.s32.totalorder %s35, 3
    %p289 = por %p287, %p288
    %p290 = scmp.ne.s32.totalorder %s279, %s280
    %p291 = scmp.eq.s32.totalorder %s35, 0
    %p292 = por %p290, %p291
    %p293 = scmp.ne.s32.totalorder %s279, %s280
    %p294 = scmp.eq.s32.totalorder %s36, 3
    %p295 = por %p293, %p294
    %p297 = scmp.ne.s32.totalorder %s280, %s296
    %p298 = scmp.eq.s32.totalorder %s36, 0
    %p299 = por %p297, %p298
    %s300 = ssub.s32 %s38, %s45
    %p301 = scmp.eq.s32.totalorder %s300, 0
    %s303 = sadd.s32 %s302, 1
    %s304 = scalar_select %p301, %s302, %s303
    %p307 = pneg %p301
    %p308 = scmp.eq.s32.totalorder %s30, 3
    %p309 = por %p307, %p308
    %p310 = scmp.ne.s32.totalorder %s302, %s305
    %p311 = scmp.eq.s32.totalorder %s30, 0
    %p312 = por %p310, %p311
    %p313 = scmp.ne.s32.totalorder %s302, %s305
    %p314 = scmp.eq.s32.totalorder %s35, 3
    %p315 = por %p313, %p314
    %p316 = scmp.ne.s32.totalorder %s305, %s306
    %p317 = scmp.eq.s32.totalorder %s35, 0
    %p318 = por %p316, %p317
    %p319 = scmp.ne.s32.totalorder %s305, %s306
    %p320 = scmp.eq.s32.totalorder %s36, 3
    %p321 = por %p319, %p320
    %p323 = scmp.ne.s32.totalorder %s306, %s322
    %p324 = scmp.eq.s32.totalorder %s36, 0
    %p325 = por %p323, %p324
    %s326 = ssub.s32 %s38, %s45
    %p327 = scmp.eq.s32.totalorder %s326, 0
    %s329 = sadd.s32 %s328, 1
    %s330 = scalar_select %p327, %s328, %s329
    %p333 = pneg %p327
    %p334 = scmp.eq.s32.totalorder %s30, 3
    %p335 = por %p333, %p334
    %p336 = scmp.ne.s32.totalorder %s328, %s331
    %p337 = scmp.eq.s32.totalorder %s30, 0
    %p338 = por %p336, %p337
    %p339 = scmp.ne.s32.totalorder %s328, %s331
    %p340 = scmp.eq.s32.totalorder %s35, 3
    %p341 = por %p339, %p340
    %p342 = scmp.ne.s32.totalorder %s331, %s332
    %p343 = scmp.eq.s32.totalorder %s35, 0
    %p344 = por %p342, %p343
    %p345 = scmp.ne.s32.totalorder %s331, %s332
    %p346 = scmp.eq.s32.totalorder %s36, 3
    %p347 = por %p345, %p346
    %p349 = scmp.ne.s32.totalorder %s332, %s348
    %p350 = scmp.eq.s32.totalorder %s36, 0
    %p351 = por %p349, %p350
    %s352 = ssub.s32 %s38, %s45
    %p353 = scmp.eq.s32.totalorder %s352, 0
    %s355 = sadd.s32 %s354, 1
    %s356 = scalar_select %p353, %s354, %s355
    %p359 = pneg %p353
    %p360 = scmp.eq.s32.totalorder %s30, 3
    %p361 = por %p359, %p360
    %p362 = scmp.ne.s32.totalorder %s354, %s357
    %p363 = scmp.eq.s32.totalorder %s30, 0
    %p364 = por %p362, %p363
    %p365 = scmp.ne.s32.totalorder %s354, %s357
    %p366 = scmp.eq.s32.totalorder %s35, 3
    %p367 = por %p365, %p366
    %p368 = scmp.ne.s32.totalorder %s357, %s358
    %p369 = scmp.eq.s32.totalorder %s35, 0
    %p370 = por %p368, %p369
    %p371 = scmp.ne.s32.totalorder %s357, %s358
    %p372 = scmp.eq.s32.totalorder %s36, 3
    %p373 = por %p371, %p372
    %p375 = scmp.ne.s32.totalorder %s358, %s374
    %p376 = scmp.eq.s32.totalorder %s36, 0
    %p377 = por %p375, %p376
    %s378 = ssub.s32 %s38, %s45
    %p379 = scmp.eq.s32.totalorder %s378, 0
    %s381 = sadd.s32 %s380, 1
    %s382 = scalar_select %p379, %s380, %s381
    %p385 = pneg %p379
    %p386 = scmp.eq.s32.totalorder %s30, 3
    %p387 = por %p385, %p386
    %p388 = scmp.ne.s32.totalorder %s380, %s383
    %p389 = scmp.eq.s32.totalorder %s30, 0
    %p390 = por %p388, %p389
    %p391 = scmp.ne.s32.totalorder %s380, %s383
    %p392 = scmp.eq.s32.totalorder %s35, 3
    %p393 = por %p391, %p392
    %p394 = scmp.ne.s32.totalorder %s383, %s384
    %p395 = scmp.eq.s32.totalorder %s35, 0
    %p396 = por %p394, %p395
    %p397 = scmp.ne.s32.totalorder %s383, %s384
    %p398 = scmp.eq.s32.totalorder %s36, 3
    %p399 = por %p397, %p398
    %p401 = scmp.ne.s32.totalorder %s384, %s400
    %p402 = scmp.eq.s32.totalorder %s36, 0
    %p403 = por %p401, %p402
    %s404 = ssub.s32 %s38, %s45
    %p405 = scmp.eq.s32.totalorder %s404, 0
    %s407 = sadd.s32 %s406, 1
    %s408 = scalar_select %p405, %s406, %s407
    %p411 = pneg %p405
    %p412 = scmp.eq.s32.totalorder %s30, 3
    %p413 = por %p411, %p412
    %p414 = scmp.ne.s32.totalorder %s406, %s409
    %p415 = scmp.eq.s32.totalorder %s30, 0
    %p416 = por %p414, %p415
    %p417 = scmp.ne.s32.totalorder %s406, %s409
    %p418 = scmp.eq.s32.totalorder %s35, 3
    %p419 = por %p417, %p418
    %p420 = scmp.ne.s32.totalorder %s409, %s410
    %p421 = scmp.eq.s32.totalorder %s35, 0
    %p422 = por %p420, %p421
    %p423 = scmp.ne.s32.totalorder %s409, %s410
    %p424 = scmp.eq.s32.totalorder %s36, 3
    %p425 = por %p423, %p424
    %p427 = scmp.ne.s32.totalorder %s410, %s426
    %p428 = scmp.eq.s32.totalorder %s36, 0
    %p429 = por %p427, %p428
    %s430 = ssub.s32 %s38, %s45
    %p431 = scmp.eq.s32.totalorder %s430, 0
    %s433 = sadd.s32 %s432, 1
    %s434 = scalar_select %p431, %s432, %s433
    %p437 = pneg %p431
    %p438 = scmp.eq.s32.totalorder %s30, 3
    %p439 = por %p437, %p438
    %p440 = scmp.ne.s32.totalorder %s432, %s435
    %p441 = scmp.eq.s32.totalorder %s30, 0
    %p442 = por %p440, %p441
    %p443 = scmp.ne.s32.totalorder %s432, %s435
    %p444 = scmp.eq.s32.totalorder %s35, 3
    %p445 = por %p443, %p444
    %p446 = scmp.ne.s32.totalorder %s435, %s436
    %p447 = scmp.eq.s32.totalorder %s35, 0
    %p448 = por %p446, %p447
    %p449 = scmp.ne.s32.totalorder %s435, %s436
    %p450 = scmp.eq.s32.totalorder %s36, 3
    %p451 = por %p449, %p450
    %p453 = scmp.ne.s32.totalorder %s436, %s452
    %p454 = scmp.eq.s32.totalorder %s36, 0
    %p455 = por %p453, %p454
    %s456 = ssub.s32 %s38, %s45
    %p457 = scmp.eq.s32.totalorder %s456, 0
    %s459 = sadd.s32 %s458, 1
    %s460 = scalar_select %p457, %s458, %s459
    %p463 = pneg %p457
    %p464 = scmp.eq.s32.totalorder %s30, 3
    %p465 = por %p463, %p464
    %p466 = scmp.ne.s32.totalorder %s458, %s461
    %p467 = scmp.eq.s32.totalorder %s30, 0
    %p468 = por %p466, %p467
    %p469 = scmp.ne.s32.totalorder %s458, %s461
    %p470 = scmp.eq.s32.totalorder %s35, 3
    %p471 = por %p469, %p470
    %p472 = scmp.ne.s32.totalorder %s461, %s462
    %p473 = scmp.eq.s32.totalorder %s35, 0
    %p474 = por %p472, %p473
    %p475 = scmp.ne.s32.totalorder %s461, %s462
    %p476 = scmp.eq.s32.totalorder %s36, 3
    %p477 = por %p475, %p476
    %p479 = scmp.ne.s32.totalorder %s462, %s478
    %p480 = scmp.eq.s32.totalorder %s36, 0
    %p481 = por %p479, %p480
    %s483 = sadd.s32 %s482, 1
    %p486 = scmp.eq.s32.totalorder %s30, 3
    %p487 = scmp.ne.s32.totalorder %s482, %s484
    %p488 = scmp.eq.s32.totalorder %s30, 0
    %p489 = por %p487, %p488
    %p490 = scmp.ne.s32.totalorder %s482, %s484
    %p491 = scmp.eq.s32.totalorder %s35, 3
    %p492 = por %p490, %p491
    %p493 = scmp.ne.s32.totalorder %s484, %s485
    %p494 = scmp.eq.s32.totalorder %s35, 0
    %p495 = por %p493, %p494
    %p496 = scmp.ne.s32.totalorder %s484, %s485
    %p497 = scmp.eq.s32.totalorder %s36, 3
    %p498 = por %p496, %p497
    %p500 = scmp.ne.s32.totalorder %s485, %s499
    %p501 = scmp.eq.s32.totalorder %s36, 0
    %p502 = por %p500, %p501
    %s504 = sadd.s32 %s503, 1
    %p507 = scmp.eq.s32.totalorder %s30, 3
    %p508 = scmp.ne.s32.totalorder %s503, %s505
    %p509 = scmp.eq.s32.totalorder %s30, 0
    %p510 = por %p508, %p509
    %p511 = scmp.ne.s32.totalorder %s503, %s505
    %p512 = scmp.eq.s32.totalorder %s35, 3
    %p513 = por %p511, %p512
    %p514 = scmp.ne.s32.totalorder %s505, %s506
    %p515 = scmp.eq.s32.totalorder %s35, 0
    %p516 = por %p514, %p515
    %p517 = scmp.ne.s32.totalorder %s505, %s506
    %p518 = scmp.eq.s32.totalorder %s36, 3
    %p519 = por %p517, %p518
    %p521 = scmp.ne.s32.totalorder %s506, %s520
    %p522 = scmp.eq.s32.totalorder %s36, 0
    %p523 = por %p521, %p522
    %s525 = sadd.s32 %s524, 1
    %p528 = scmp.eq.s32.totalorder %s30, 3
    %p529 = scmp.ne.s32.totalorder %s524, %s526
    %p530 = scmp.eq.s32.totalorder %s30, 0
    %p531 = por %p529, %p530
    %p532 = scmp.ne.s32.totalorder %s524, %s526
    %p533 = scmp.eq.s32.totalorder %s35, 3
    %p534 = por %p532, %p533
    %p535 = scmp.ne.s32.totalorder %s526, %s527
    %p536 = scmp.eq.s32.totalorder %s35, 0
    %p537 = por %p535, %p536
    %p538 = scmp.ne.s32.totalorder %s526, %s527
    %p539 = scmp.eq.s32.totalorder %s36, 3
    %p540 = por %p538, %p539
    %p542 = scmp.ne.s32.totalorder %s527, %s541
    %p543 = scmp.eq.s32.totalorder %s36, 0
    %p544 = por %p542, %p543
    %s546 = sadd.s32 %s545, 1
    %p549 = scmp.eq.s32.totalorder %s30, 3
    %p550 = scmp.ne.s32.totalorder %s545, %s547
    %p551 = scmp.eq.s32.totalorder %s30, 0
    %p552 = por %p550, %p551
    %p553 = scmp.ne.s32.totalorder %s545, %s547
    %p554 = scmp.eq.s32.totalorder %s35, 3
    %p555 = por %p553, %p554
    %p556 = scmp.ne.s32.totalorder %s547, %s548
    %p557 = scmp.eq.s32.totalorder %s35, 0
    %p558 = por %p556, %p557
    %p559 = scmp.ne.s32.totalorder %s547, %s548
    %p560 = scmp.eq.s32.totalorder %s36, 3
    %p561 = por %p559, %p560
    %p563 = scmp.ne.s32.totalorder %s548, %s562
    %p564 = scmp.eq.s32.totalorder %s36, 0
    %p565 = por %p563, %p564
    %s567 = sadd.s32 %s566, 1
    %p570 = scmp.eq.s32.totalorder %s30, 3
    %p571 = scmp.ne.s32.totalorder %s566, %s568
    %p572 = scmp.eq.s32.totalorder %s30, 0
    %p573 = por %p571, %p572
    %p574 = scmp.ne.s32.totalorder %s566, %s568
    %p575 = scmp.eq.s32.totalorder %s35, 3
    %p576 = por %p574, %p575
    %p577 = scmp.ne.s32.totalorder %s568, %s569
    %p578 = scmp.eq.s32.totalorder %s35, 0
    %p579 = por %p577, %p578
    %p580 = scmp.ne.s32.totalorder %s568, %s569
    %p581 = scmp.eq.s32.totalorder %s36, 3
    %p582 = por %p580, %p581
    %p584 = scmp.ne.s32.totalorder %s569, %s583
    %p585 = scmp.eq.s32.totalorder %s36, 0
    %p586 = por %p584, %p585
    %s587 = ssub.s32 %s37, %s49
    %p588 = scmp.eq.s32.totalorder %s587, 0
    %s590 = sadd.s32 %s589, 1
    %s591 = scalar_select %p588, %s589, %s590
    %p594 = pneg %p588
    %p595 = scmp.eq.s32.totalorder %s30, 3
    %p596 = por %p594, %p595
    %p597 = scmp.ne.s32.totalorder %s589, %s592
    %p598 = scmp.eq.s32.totalorder %s30, 0
    %p599 = por %p597, %p598
    %p600 = scmp.ne.s32.totalorder %s589, %s592
    %p601 = scmp.eq.s32.totalorder %s35, 3
    %p602 = por %p600, %p601
    %p603 = scmp.ne.s32.totalorder %s592, %s593
    %p604 = scmp.eq.s32.totalorder %s35, 0
    %p605 = por %p603, %p604
    %p606 = scmp.ne.s32.totalorder %s592, %s593
    %p607 = scmp.eq.s32.totalorder %s36, 3
    %p608 = por %p606, %p607
    %p610 = scmp.ne.s32.totalorder %s593, %s609
    %p611 = scmp.eq.s32.totalorder %s36, 0
    %p612 = por %p610, %p611
    %p613 = scmp.le.s32.totalorder 1, %s30
    %p614 = scmp.lt.s32.totalorder %s30, 5
    %p615 = pnand %p613, %p614
    %p616 = pneg %p615
    // Predicated region
    $region9: #{summarizer_forward.1} parent=5 // pred_check
      _
    $region10: #{summarizer_forward.1} parent=5 // pred_check_branch
      %618 = sbr.rel (%p615) target = $region12
    $region11: #{summarizer_forward.1} parent=5 // pred_region
      %s619 = ssub.s32 %s30, 1
      // Predicated region
      $region13: #{summarizer_forward.1} parent=11 // pred_check
        %p620 = pneg %p141
      $region14: #{summarizer_forward.1} parent=11 // pred_check_branch
        %622 = sbr.rel (%p620) target = $region16
      $region15: #{summarizer_forward.1} parent=11 // pred_region
        _
      $region16: #{summarizer_forward.1} parent=11 // pred_fallthru
        _
      // Predicated region
      $region17: #{summarizer_forward.1} parent=11 // pred_check
        %p623 = pneg %p162
      $region18: #{summarizer_forward.1} parent=11 // pred_check_branch
        %625 = sbr.rel (%p623) target = $region20
      $region19: #{summarizer_forward.1} parent=11 // pred_region
        _
      $region20: #{summarizer_forward.1} parent=11 // pred_fallthru
        _
      // Predicated region
      $region21: #{summarizer_forward.1} parent=11 // pred_check
        %p626 = pneg %p495
      $region22: #{summarizer_forward.1} parent=11 // pred_check_branch
        %628 = sbr.rel (%p626) target = $region24
      $region23: #{summarizer_forward.1} parent=11 // pred_region
        _
      $region24: #{summarizer_forward.1} parent=11 // pred_fallthru
        _
      // Predicated region
      $region25: #{summarizer_forward.1} parent=11 // pred_check
        %p629 = pneg %p516
      $region26: #{summarizer_forward.1} parent=11 // pred_check_branch
        %631 = sbr.rel (%p629) target = $region28
      $region27: #{summarizer_forward.1} parent=11 // pred_region
        _
      $region28: #{summarizer_forward.1} parent=11 // pred_fallthru
        _
      // Predicated region
      $region29: #{summarizer_forward.1} parent=11 // pred_check
        %p632 = pneg %p537
      $region30: #{summarizer_forward.1} parent=11 // pred_check_branch
        %634 = sbr.rel (%p632) target = $region32
      $region31: #{summarizer_forward.1} parent=11 // pred_region
        _
      $region32: #{summarizer_forward.1} parent=11 // pred_fallthru
        _
      // Predicated region
      $region33: #{summarizer_forward.1} parent=11 // pred_check
        %p635 = pneg %p558
      $region34: #{summarizer_forward.1} parent=11 // pred_check_branch
        %637 = sbr.rel (%p635) target = $region36
      $region35: #{summarizer_forward.1} parent=11 // pred_region
        _
      $region36: #{summarizer_forward.1} parent=11 // pred_fallthru
        _
      // Predicated region
      $region37: #{summarizer_forward.1} parent=11 // pred_check
        %p638 = pneg %p579
      $region38: #{summarizer_forward.1} parent=11 // pred_check_branch
        %640 = sbr.rel (%p638) target = $region40
      $region39: #{summarizer_forward.1} parent=11 // pred_region
        _
      $region40: #{summarizer_forward.1} parent=11 // pred_fallthru
        _
    $region12: #{summarizer_forward.1} parent=5 // pred_fallthru
      _
    %p641 = scmp.lt.s32.totalorder %s30, 4
    // Predicated region
    $region41: #{summarizer_forward.1} parent=5 // pred_check
      %p642 = pneg %p641
    $region42: #{summarizer_forward.1} parent=5 // pred_check_branch
      %644 = sbr.rel (%p642) target = $region44
    $region43: #{summarizer_forward.1} parent=5 // pred_region
      // Predicated region
      $region45: #{summarizer_forward.1} parent=43 // pred_check
        %p645 = pneg %p62
      $region46: #{summarizer_forward.1} parent=43 // pred_check_branch
        %647 = sbr.rel (%p645) target = $region48
      $region47: #{summarizer_forward.1} parent=43 // pred_region
        %p648 = scmp.lt.s32.totalorder %s37, 1
        %s649 = scalar_select %p648, %s37, 1
        %s650 = smul.addr %s649, 2
        %s651 = smul.addr %s650, 8
        %s652 = scalar_lea.vmem %s0, %s651
      $region48: #{summarizer_forward.1} parent=43 // pred_fallthru
        _
      // Predicated region
      $region49: #{summarizer_forward.1} parent=43 // pred_check
        %p653 = pneg %p88
      $region50: #{summarizer_forward.1} parent=43 // pred_check_branch
        %655 = sbr.rel (%p653) target = $region52
      $region51: #{summarizer_forward.1} parent=43 // pred_region
        %p656 = scmp.lt.s32.totalorder %s37, 1
        %s657 = scalar_select %p656, %s37, 1
        %s658 = scalar_lea.vmem %s1, %s657
      $region52: #{summarizer_forward.1} parent=43 // pred_fallthru
        _
      // Predicated region
      $region53: #{summarizer_forward.1} parent=43 // pred_check
        %p659 = pneg %p114
      $region54: #{summarizer_forward.1} parent=43 // pred_check_branch
        %661 = sbr.rel (%p659) target = $region56
      $region55: #{summarizer_forward.1} parent=43 // pred_region
        %p662 = scmp.lt.s32.totalorder %s37, 1
        %s663 = scalar_select %p662, %s37, 1
        %s664 = scalar_lea.vmem %s2, %s663
      $region56: #{summarizer_forward.1} parent=43 // pred_fallthru
        _
      // Predicated region
      $region57: #{summarizer_forward.1} parent=43 // pred_check
        %p665 = pneg %p182
      $region58: #{summarizer_forward.1} parent=43 // pred_check_branch
        %667 = sbr.rel (%p665) target = $region60
      $region59: #{summarizer_forward.1} parent=43 // pred_region
        %p668 = scmp.lt.s32.totalorder %s38, 1
        %s669 = scalar_select %p668, %s38, 1
        %s670 = smul.addr %s669, 4
        %s671 = smul.addr %s670, 4
        %s672 = scalar_lea.vmem %s5, %s671
      $region60: #{summarizer_forward.1} parent=43 // pred_fallthru
        _
      // Predicated region
      $region61: #{summarizer_forward.1} parent=43 // pred_check
        %p673 = pneg %p208
      $region62: #{summarizer_forward.1} parent=43 // pred_check_branch
        %675 = sbr.rel (%p673) target = $region64
      $region63: #{summarizer_forward.1} parent=43 // pred_region
        %p676 = scmp.lt.s32.totalorder %s38, 1
        %s677 = scalar_select %p676, %s38, 1
        %s678 = scalar_lea.vmem %s6, %s677
      $region64: #{summarizer_forward.1} parent=43 // pred_fallthru
        _
      // Predicated region
      $region65: #{summarizer_forward.1} parent=43 // pred_check
        %p679 = pneg %p234
      $region66: #{summarizer_forward.1} parent=43 // pred_check_branch
        %681 = sbr.rel (%p679) target = $region68
      $region67: #{summarizer_forward.1} parent=43 // pred_region
        %p682 = scmp.lt.s32.totalorder %s38, 1
        %s683 = scalar_select %p682, %s38, 1
        %s684 = smul.addr %s683, 4
        %s685 = smul.addr %s684, 4
        %s686 = scalar_lea.vmem %s7, %s685
      $region68: #{summarizer_forward.1} parent=43 // pred_fallthru
        _
      // Predicated region
      $region69: #{summarizer_forward.1} parent=43 // pred_check
        %p687 = pneg %p260
      $region70: #{summarizer_forward.1} parent=43 // pred_check_branch
        %689 = sbr.rel (%p687) target = $region72
      $region71: #{summarizer_forward.1} parent=43 // pred_region
        %p690 = scmp.lt.s32.totalorder %s38, 1
        %s691 = scalar_select %p690, %s38, 1
        %s692 = scalar_lea.vmem %s8, %s691
      $region72: #{summarizer_forward.1} parent=43 // pred_fallthru
        _
      // Predicated region
      $region73: #{summarizer_forward.1} parent=43 // pred_check
        %p693 = pneg %p286
      $region74: #{summarizer_forward.1} parent=43 // pred_check_branch
        %695 = sbr.rel (%p693) target = $region76
      $region75: #{summarizer_forward.1} parent=43 // pred_region
        %p696 = scmp.lt.s32.totalorder %s38, 1
        %s697 = scalar_select %p696, %s38, 1
        %s698 = scalar_lea.vmem %s9, %s697
      $region76: #{summarizer_forward.1} parent=43 // pred_fallthru
        _
      // Predicated region
      $region77: #{summarizer_forward.1} parent=43 // pred_check
        %p699 = pneg %p312
      $region78: #{summarizer_forward.1} parent=43 // pred_check_branch
        %701 = sbr.rel (%p699) target = $region80
      $region79: #{summarizer_forward.1} parent=43 // pred_region
        %p702 = scmp.lt.s32.totalorder %s38, 1
        %s703 = scalar_select %p702, %s38, 1
        %s704 = scalar_lea.vmem %s10, %s703
      $region80: #{summarizer_forward.1} parent=43 // pred_fallthru
        _
      // Predicated region
      $region81: #{summarizer_forward.1} parent=43 // pred_check
        %p705 = pneg %p338
      $region82: #{summarizer_forward.1} parent=43 // pred_check_branch
        %707 = sbr.rel (%p705) target = $region84
      $region83: #{summarizer_forward.1} parent=43 // pred_region
        %p708 = scmp.lt.s32.totalorder %s38, 1
        %s709 = scalar_select %p708, %s38, 1
        %s710 = smul.addr %s709, 4
        %s711 = smul.addr %s710, 4
        %s712 = scalar_lea.vmem %s11, %s711
      $region84: #{summarizer_forward.1} parent=43 // pred_fallthru
        _
      // Predicated region
      $region85: #{summarizer_forward.1} parent=43 // pred_check
        %p713 = pneg %p364
      $region86: #{summarizer_forward.1} parent=43 // pred_check_branch
        %715 = sbr.rel (%p713) target = $region88
      $region87: #{summarizer_forward.1} parent=43 // pred_region
        %p716 = scmp.lt.s32.totalorder %s38, 1
        %s717 = scalar_select %p716, %s38, 1
        %s718 = scalar_lea.vmem %s12, %s717
      $region88: #{summarizer_forward.1} parent=43 // pred_fallthru
        _
      // Predicated region
      $region89: #{summarizer_forward.1} parent=43 // pred_check
        %p719 = pneg %p390
      $region90: #{summarizer_forward.1} parent=43 // pred_check_branch
        %721 = sbr.rel (%p719) target = $region92
      $region91: #{summarizer_forward.1} parent=43 // pred_region
        %p722 = scmp.lt.s32.totalorder %s38, 1
        %s723 = scalar_select %p722, %s38, 1
        %s724 = smul.addr %s723, 8
        %s725 = smul.addr %s724, 4
        %s726 = scalar_lea.vmem %s13, %s725
      $region92: #{summarizer_forward.1} parent=43 // pred_fallthru
        _
      // Predicated region
      $region93: #{summarizer_forward.1} parent=43 // pred_check
        %p727 = pneg %p416
      $region94: #{summarizer_forward.1} parent=43 // pred_check_branch
        %729 = sbr.rel (%p727) target = $region96
      $region95: #{summarizer_forward.1} parent=43 // pred_region
        %p730 = scmp.lt.s32.totalorder %s38, 1
        %s731 = scalar_select %p730, %s38, 1
        %s732 = scalar_lea.vmem %s14, %s731
      $region96: #{summarizer_forward.1} parent=43 // pred_fallthru
        _
      // Predicated region
      $region97: #{summarizer_forward.1} parent=43 // pred_check
        %p733 = pneg %p442
      $region98: #{summarizer_forward.1} parent=43 // pred_check_branch
        %735 = sbr.rel (%p733) target = $region100
      $region99: #{summarizer_forward.1} parent=43 // pred_region
        %p736 = scmp.lt.s32.totalorder %s38, 1
        %s737 = scalar_select %p736, %s38, 1
        %s738 = scalar_lea.vmem %s15, %s737
      $region100: #{summarizer_forward.1} parent=43 // pred_fallthru
        _
      // Predicated region
      $region101: #{summarizer_forward.1} parent=43 // pred_check
        %p739 = pneg %p468
      $region102: #{summarizer_forward.1} parent=43 // pred_check_branch
        %741 = sbr.rel (%p739) target = $region104
      $region103: #{summarizer_forward.1} parent=43 // pred_region
        %p742 = scmp.lt.s32.totalorder %s38, 1
        %s743 = scalar_select %p742, %s38, 1
        %s744 = scalar_lea.vmem %s16, %s743
      $region104: #{summarizer_forward.1} parent=43 // pred_fallthru
        _
    $region44: #{summarizer_forward.1} parent=5 // pred_fallthru
      _
    %p745 = scmp.le.s32.totalorder 1, %s30
    %p746 = scmp.lt.s32.totalorder %s30, 5
    %p747 = pnand %p745, %p746
    %p748 = pneg %p747
    // Predicated region
    $region105: #{summarizer_forward.1} parent=5 // pred_check
      _
    $region106: #{summarizer_forward.1} parent=5 // pred_check_branch
      %750 = sbr.rel (%p747) target = $region108
    $region107: #{summarizer_forward.1} parent=5 // pred_region
      %s751 = ssub.s32 %s30, 1
      %p752 = scmp.lt.s32.totalorder %s39, 1
      %s753 = scalar_select %p752, %s39, 1
      %s754 = smul.addr %s753, 2
      %s755 = smul.addr %s754, 8
      %s756 = scalar_lea.vmem %s0, %s755
      %p757 = pneg %p68
      %p758 = pneg %p65
      %p759 = scmp.lt.s32.totalorder %s39, 1
      %s760 = scalar_select %p759, %s39, 1
      %s761 = scalar_lea.vmem %s1, %s760
      %p762 = pneg %p94
      %p763 = pneg %p91
      %p764 = scmp.lt.s32.totalorder %s39, 1
      %s765 = scalar_select %p764, %s39, 1
      %s766 = scalar_lea.vmem %s2, %s765
      %p767 = pneg %p120
      %p768 = pneg %p117
      %p769 = pneg %p141
      %p770 = pneg %p138
      %p771 = pneg %p162
      %p772 = pneg %p159
      %p773 = scmp.lt.s32.totalorder %s40, 1
      %s774 = scalar_select %p773, %s40, 1
      %s775 = smul.addr %s774, 4
      %s776 = smul.addr %s775, 4
      %s777 = scalar_lea.vmem %s5, %s776
      %p778 = pneg %p188
      %p779 = pneg %p185
      %p780 = scmp.lt.s32.totalorder %s40, 1
      %s781 = scalar_select %p780, %s40, 1
      %s782 = scalar_lea.vmem %s6, %s781
      %p783 = pneg %p214
      %p784 = pneg %p211
      %p785 = scmp.lt.s32.totalorder %s40, 1
      %s786 = scalar_select %p785, %s40, 1
      %s787 = smul.addr %s786, 4
      %s788 = smul.addr %s787, 4
      %s789 = scalar_lea.vmem %s7, %s788
      %p790 = pneg %p240
      %p791 = pneg %p237
      %p792 = scmp.lt.s32.totalorder %s40, 1
      %s793 = scalar_select %p792, %s40, 1
      %s794 = scalar_lea.vmem %s8, %s793
      %p795 = pneg %p266
      %p796 = pneg %p263
      %p797 = scmp.lt.s32.totalorder %s40, 1
      %s798 = scalar_select %p797, %s40, 1
      %s799 = scalar_lea.vmem %s9, %s798
      %p800 = pneg %p292
      %p801 = pneg %p289
      %p802 = scmp.lt.s32.totalorder %s40, 1
      %s803 = scalar_select %p802, %s40, 1
      %s804 = scalar_lea.vmem %s10, %s803
      %p805 = pneg %p318
      %p806 = pneg %p315
      %p807 = scmp.lt.s32.totalorder %s40, 1
      %s808 = scalar_select %p807, %s40, 1
      %s809 = smul.addr %s808, 4
      %s810 = smul.addr %s809, 4
      %s811 = scalar_lea.vmem %s11, %s810
      %p812 = pneg %p344
      %p813 = pneg %p341
      %p814 = scmp.lt.s32.totalorder %s40, 1
      %s815 = scalar_select %p814, %s40, 1
      %s816 = scalar_lea.vmem %s12, %s815
      %p817 = pneg %p370
      %p818 = pneg %p367
      %p819 = scmp.lt.s32.totalorder %s40, 1
      %s820 = scalar_select %p819, %s40, 1
      %s821 = smul.addr %s820, 8
      %s822 = smul.addr %s821, 4
      %s823 = scalar_lea.vmem %s13, %s822
      %p824 = pneg %p396
      %p825 = pneg %p393
      %p826 = scmp.lt.s32.totalorder %s40, 1
      %s827 = scalar_select %p826, %s40, 1
      %s828 = scalar_lea.vmem %s14, %s827
      %p829 = pneg %p422
      %p830 = pneg %p419
      %p831 = scmp.lt.s32.totalorder %s40, 1
      %s832 = scalar_select %p831, %s40, 1
      %s833 = scalar_lea.vmem %s15, %s832
      %p834 = pneg %p448
      %p835 = pneg %p445
      %p836 = scmp.lt.s32.totalorder %s40, 1
      %s837 = scalar_select %p836, %s40, 1
      %s838 = scalar_lea.vmem %s16, %s837
      %p839 = pneg %p474
      %p840 = pneg %p471
      %p841 = pneg %p495
      %p842 = pneg %p492
      %p843 = pneg %p516
      %p844 = pneg %p513
      %p845 = pneg %p537
      %p846 = pneg %p534
      %p847 = pneg %p558
      %p848 = pneg %p555
      %p849 = pneg %p579
      %p850 = pneg %p576
      %p851 = pneg %p605
      %p852 = pneg %p602
      %p853 = scmp.lt.s32.totalorder %s39, 1
      %s854 = scalar_select %p853, %s39, 1
      %s855 = smul.addr %s854, 4
      %s856 = scalar_lea.vmem %s22, %s855
      %p857 = scmp.lt.s32.totalorder %s39, 1
      %s858 = scalar_select %p857, %s39, 1
      %s859 = smul.addr %s858, 2
      %s860 = smul.addr %s859, 8
      %s861 = scalar_lea.vmem %s0, %s860
      %p862 = scmp.lt.s32.totalorder %s39, 1
      %s863 = scalar_select %p862, %s39, 1
      %s864 = scalar_lea.vmem %s1, %s863
      %p865 = scmp.lt.s32.totalorder %s39, 1
      %s866 = scalar_select %p865, %s39, 1
      %s867 = scalar_lea.vmem %s2, %s866
      %p868 = scmp.lt.s32.totalorder %s40, 1
      %s869 = scalar_select %p868, %s40, 1
      %s870 = smul.addr %s869, 4
      %s871 = smul.addr %s870, 4
      %s872 = scalar_lea.vmem %s5, %s871
      %p873 = scmp.lt.s32.totalorder %s40, 1
      %s874 = scalar_select %p873, %s40, 1
      %s875 = scalar_lea.vmem %s6, %s874
      %p876 = scmp.lt.s32.totalorder %s40, 1
      %s877 = scalar_select %p876, %s40, 1
      %s878 = smul.addr %s877, 4
      %s879 = smul.addr %s878, 4
      %s880 = scalar_lea.vmem %s7, %s879
      %p881 = scmp.lt.s32.totalorder %s40, 1
      %s882 = scalar_select %p881, %s40, 1
      %s883 = scalar_lea.vmem %s8, %s882
      %p884 = scmp.lt.s32.totalorder %s40, 1
      %s885 = scalar_select %p884, %s40, 1
      %s886 = scalar_lea.vmem %s9, %s885
      %p887 = scmp.lt.s32.totalorder %s40, 1
      %s888 = scalar_select %p887, %s40, 1
      %s889 = scalar_lea.vmem %s10, %s888
      %p890 = scmp.lt.s32.totalorder %s40, 1
      %s891 = scalar_select %p890, %s40, 1
      %s892 = smul.addr %s891, 4
      %s893 = smul.addr %s892, 4
      %s894 = scalar_lea.vmem %s11, %s893
      %p895 = scmp.lt.s32.totalorder %s40, 1
      %s896 = scalar_select %p895, %s40, 1
      %s897 = scalar_lea.vmem %s12, %s896
      %p898 = scmp.lt.s32.totalorder %s40, 1
      %s899 = scalar_select %p898, %s40, 1
      %s900 = smul.addr %s899, 8
      %s901 = smul.addr %s900, 4
      %s902 = scalar_lea.vmem %s13, %s901
      %p903 = scmp.lt.s32.totalorder %s40, 1
      %s904 = scalar_select %p903, %s40, 1
      %s905 = scalar_lea.vmem %s14, %s904
      %p906 = scmp.lt.s32.totalorder %s40, 1
      %s907 = scalar_select %p906, %s40, 1
      %s908 = scalar_lea.vmem %s15, %s907
      %p909 = scmp.lt.s32.totalorder %s40, 1
      %s910 = scalar_select %p909, %s40, 1
      %s911 = scalar_lea.vmem %s16, %s910
      %p912 = scmp.lt.s32.totalorder %s39, 1
      %s913 = scalar_select %p912, %s39, 1
      %s914 = smul.addr %s913, 4
      %s915 = scalar_lea.vmem %s22, %s914
      %p917 = scmp.eq.s32.totalorder %s40, 0
      // Predicated region
      $region109: #{summarizer_forward.1} parent=107 // pred_check
        %p918 = pneg %p917
      $region110: #{summarizer_forward.1} parent=107 // pred_check_branch
        %920 = sbr.rel (%p918) target = $region112
      $region111: #{summarizer_forward.1} parent=107 // pred_region
        %v921 = vld [vmem:[%s861] sm:$0xff]
        %v922 = vld [vmem:[%s861 + $0x8] sm:$0xff]
        %v923 = vld [vmem:[%s3] sm:$0x1]
        %v924 = vld [vmem:[%s4] sm:$0x1]
        %vm925 = vcmask 261120
        %v926 = vsel %vm925, %v921, 0.0
        %927 = vadd.xlane.f32.xlu0 %v926
        %v928 = vpop.xlane.xlu0 %927
        %v929 = vsel %vm925, %v922, 0.0
        %930 = vadd.xlane.f32.xlu0 %v929
        %v931 = vpop.xlane.xlu0 %930
        %v932 = vrcp.pop 32.0
        %v933 = vmul.f32 %v928, %v932
        %v934 = vmul.f32 %v931, %v932
        %v935 = vsub.f32 %v921, %v933
        %v936 = vsub.f32 %v922, %v934
        %v937 = vmul.f32 %v935, %v935
        %v938 = vmul.f32 %v936, %v936
        %v939 = vsel %vm925, %v937, 0.0
        %940 = vadd.xlane.f32.xlu0 %v939
        %v941 = vpop.xlane.xlu0 %940
        %v942 = vsel %vm925, %v938, 0.0
        %943 = vadd.xlane.f32.xlu0 %v942
        %v944 = vpop.xlane.xlu0 %943
        %v945 = vmul.f32 %v941, %v932
        %v946 = vmul.f32 %v944, %v932
        %v947 = vadd.f32 %v945, 1e-05
        %v948 = vadd.f32 %v946, 1e-05
        %v949 = vrsqrt.pop %v947
        %v950 = vrsqrt.pop %v948
        %v951 = vmul.f32 %v935, %v949
        %v952 = vmul.f32 %v936, %v950
        %v954 = vlaneseq
        %v955 = vshrl.u32 %v954, 7
        %v956 = vsub.s32 0, %v955
        %v957 = vrot.slane %v923, %v956
        %v959 = vmul.f32 %v951, %v957
        %v960 = vmul.f32 %v952, %v957
        %v962 = vlaneseq
        %v963 = vshrl.u32 %v962, 7
        %v964 = vsub.s32 0, %v963
        %v965 = vrot.slane %v924, %v964
        %v967 = vadd.f32 %v959, %v965
        %v968 = vadd.f32 %v960, %v965
        %969 = vst.msk [vmem:[#allocation2] sm:$0xff] %vm925, %v967
        %970 = vst.msk [vmem:[#allocation2 + $0x8] sm:$0xff] %vm925, %v968
      $region112: #{summarizer_forward.1} parent=107 // pred_fallthru
        _
      %v971 = vld [vmem:[%s864] sm:$0x1]
      %v972 = vsub.f32 %v971, 1.0
      %v973 = vmul.f32 %v972, 1e+09
      %v974 = vld [vmem:[#allocation2] sm:$0xff]
      %v975 = vld [vmem:[#allocation2 + $0x8] sm:$0xff]
      %v976 = vpack.c.bf16 %v975, %v974
      %v977 = vld [vmem:[%s872] sm:$0xf]
      %v978 = vld [vmem:[%s872 + $0x4] sm:$0xf]
      %v979 = vld [vmem:[%s872 + $0x8] sm:$0xf]
      %v980 = vld [vmem:[%s872 + $0xc] sm:$0xf]
      %v981 = vld [vmem:[%s875] sm:$0x1]
      %v983 = vlaneseq
      %v984 = vshrl.u32 %v983, 7
      %v985 = vsub.s32 0, %v984
      %v986 = vrot.slane %v981, %v985
      %v992 = vunpack.c.l.b16 %v977
      %v993 = vunpack.c.l.b16 %v978
      %v994 = vunpack.c.l.b16 %v979
      %v995 = vunpack.c.l.b16 %v980
      %v996 = vpack.c.b16 %v993, %v992
      %v997 = vpack.c.b16 %v995, %v994
      %vm1000 = vcmask 261120
      %v1002 = vsel %vm1000, %v976, 0
      %1004 = vmatprep.subr.bf16.mxu0 0
      %1005 = vmatpush1.bf16.msra.mxu0 0
      %1006 = vmatprep.subr.bf16.mxu0 0
      %1007 = vmatpush1.bf16.msra.mxu0 0
      %1008 = vmatprep.subr.bf16.mxu0 0
      %1009 = vmatpush1.bf16.msra.mxu0 0
      %1010 = vmatprep.subr.bf16.mxu0 0
      %1011 = vmatpush1.bf16.msra.mxu0 0
      %1012 = vmatprep.subr.bf16.mxu0 0
      %1013 = vmatpush1.bf16.msra.mxu0 0
      %1014 = vmatprep.subr.bf16.mxu0 0
      %1015 = vmatpush1.bf16.msra.mxu0 0
      %1016 = vmatprep.subr.bf16.mxu0 0
      %1017 = vmatpush1.bf16.msra.mxu0 %v997
      %1018 = vmatprep.subr.bf16.mxu0 0
      %1019 = vmatpush1.bf16.msra.mxu0 %v996
      %1020 = vmatprep.subr.bf16.mxu0 0
      %1021 = vmatpush2.bf16.msra.mxu0 0
      %1022 = vmatprep.subr.bf16.mxu0 0
      %1023 = vmatpush2.bf16.msra.mxu0 0
      %1024 = vmatprep.subr.bf16.mxu0 0
      %1025 = vmatpush2.bf16.msra.mxu0 0
      %1026 = vmatprep.subr.bf16.mxu0 0
      %1027 = vmatpush2.bf16.msra.mxu0 0
      %1028 = vmatprep.subr.bf16.mxu0 0
      %1029 = vmatpush2.bf16.msra.mxu0 0
      %1030 = vmatprep.subr.bf16.mxu0 0
      %1031 = vmatpush2.bf16.msra.mxu0 0
      %1032 = vmatprep.subr.bf16.mxu0 0
      %1033 = vmatpush2.bf16.msra.mxu0 0
      %1034 = vmatprep.subr.bf16.mxu0 0
      %1035 = vmatpush2.bf16.msra.mxu0 0
      %1036 = vmatprep.mubr.bf16.mxu0 0
      %1037 = vmatmul.mubr.bf16.gmra.mxu0 %v1002
      %v1038 = vpop.f32.mrf.mxu0
      %v1039 = vadd.f32 %v986, %v1038
      %v1040 = vpop.f32.mrf.mxu0
      %v1041 = vpop.f32.mrf.mxu0
      %v1042 = vadd.f32 %v986, %v1041
      %v1043 = vpop.f32.mrf.mxu0
      %1044 = vdwg.mxu0
      %v1045 = vpack.c.bf16 %v1042, %v1039
      %v1047 = vlaneseq
      %v1048 = vshrl.u32 %v1047, 7
      %v1049 = vsub.s32 0, %v1048
      %v1050 = vrot.slane %v973, %v1049
      %1053 = vrot.lane.b32.xlu0 %v1045, 96
      %v1054 = vpop.permute.xlu0 %1053
      %vm1055 = vcmask 64512
      %v1057 = vsel %vm1055, %v1045, 0
      %v1060 = vsel %vm1055, %v1054, 0
      %1062 = vmatprep.subr.bf16.mxu0 0
      %1063 = vmatpush1.bf16.xpose.msra.mxu0 0
      %1064 = vmatprep.subr.bf16.mxu0 0
      %1065 = vmatpush1.bf16.xpose.msra.mxu0 0
      %1066 = vmatprep.subr.bf16.mxu0 0
      %1067 = vmatpush1.bf16.xpose.msra.mxu0 0
      %1068 = vmatprep.subr.bf16.mxu0 0
      %1069 = vmatpush1.bf16.xpose.msra.mxu0 0
      %1070 = vmatprep.subr.bf16.mxu0 0
      %1071 = vmatpush1.bf16.xpose.msra.mxu0 0
      %1072 = vmatprep.subr.bf16.mxu0 0
      %1073 = vmatpush1.bf16.xpose.msra.mxu0 0
      %1074 = vmatprep.subr.bf16.mxu0 0
      %1075 = vmatpush1.bf16.xpose.msra.mxu0 0
      %1076 = vmatprep.subr.bf16.mxu0 0
      %1077 = vmatpush1.bf16.xpose.msra.mxu0 %v1060
      %1078 = vmatprep.subr.bf16.mxu0 0
      %1079 = vmatpush2.bf16.xpose.msra.mxu0 0
      %1080 = vmatprep.subr.bf16.mxu0 0
      %1081 = vmatpush2.bf16.xpose.msra.mxu0 0
      %1082 = vmatprep.subr.bf16.mxu0 0
      %1083 = vmatpush2.bf16.xpose.msra.mxu0 0
      %1084 = vmatprep.subr.bf16.mxu0 0
      %1085 = vmatpush2.bf16.xpose.msra.mxu0 0
      %1086 = vmatprep.subr.bf16.mxu0 0
      %1087 = vmatpush2.bf16.xpose.msra.mxu0 0
      %1088 = vmatprep.subr.bf16.mxu0 0
      %1089 = vmatpush2.bf16.xpose.msra.mxu0 0
      %1090 = vmatprep.subr.bf16.mxu0 0
      %1091 = vmatpush2.bf16.xpose.msra.mxu0 0
      %1092 = vmatprep.subr.bf16.mxu0 0
      %1093 = vmatpush2.bf16.xpose.msra.mxu0 0
      %1094 = vmatprep.mubr.bf16.mxu0 0
      %1095 = vmatmul.mubr.bf16.gmra.mxu0 %v1057
      %v1096 = vpop.f32.mrf.mxu0
      %v1097 = vadd.f32 %v1050, %v1096
      %v1098 = vpop.f32.mrf.mxu0
      %v1099 = vpop.f32.mrf.mxu0
      %v1100 = vadd.f32 %v1050, %v1099
      %v1101 = vpop.f32.mrf.mxu0
      %1102 = vdwg.mxu0
      %vm1103 = vcmask 130048
      %v1104 = vsel %vm1103, %v1097, -inf
      %1105 = vmax.xlane.f32.xlu0 %v1104
      %v1106 = vpop.xlane.xlu0 %1105
      %v1107 = vsel %vm1103, %v1100, -inf
      %1108 = vmax.xlane.f32.xlu0 %v1107
      %v1109 = vpop.xlane.xlu0 %1108
      %v1110 = vsub.f32 %v1097, %v1106
      %v1111 = vsub.f32 %v1100, %v1109
      %v1112 = vmul.f32 %v1110, 1.442695
      %v1113 = vpow.pop %v1112
      %v1114 = vmul.f32 %v1111, 1.442695
      %v1115 = vpow.pop %v1114
      %v1116 = vsel %vm1103, %v1113, 0.0
      %1117 = vadd.xlane.f32.xlu0 %v1116
      %v1118 = vpop.xlane.xlu0 %1117
      %v1119 = vsel %vm1103, %v1115, 0.0
      %1120 = vadd.xlane.f32.xlu0 %v1119
      %v1121 = vpop.xlane.xlu0 %1120
      %v1122 = vrcp.pop %v1118
      %v1123 = vrcp.pop %v1121
      %v1124 = vmul.f32 %v1113, %v1122
      %v1125 = vmul.f32 %v1115, %v1123
      %v1126 = vpack.c.bf16 %v1125, %v1124
      %1127 = vrot.lane.b32.xlu0 %v1045, 64
      %v1128 = vpop.permute.xlu0 %1127
      %v1131 = vsel %vm1103, %v1126, 0
      %1133 = vmatprep.subr.bf16.mxu0 0
      %1134 = vmatpush1.bf16.msra.mxu0 0
      %1135 = vmatprep.subr.bf16.mxu0 0
      %1136 = vmatpush1.bf16.msra.mxu0 0
      %1137 = vmatprep.subr.bf16.mxu0 0
      %1138 = vmatpush1.bf16.msra.mxu0 0
      %1139 = vmatprep.subr.bf16.mxu0 0
      %1140 = vmatpush1.bf16.msra.mxu0 0
      %1141 = vmatprep.subr.bf16.mxu0 0
      %1142 = vmatpush1.bf16.msra.mxu0 0
      %1143 = vmatprep.subr.bf16.mxu0 0
      %1144 = vmatpush1.bf16.msra.mxu0 0
      %1145 = vmatprep.subr.bf16.mxu0 0
      %1146 = vmatpush1.bf16.msra.mxu0 0
      %1147 = vmatprep.subr.bf16.mxu0 0
      %1148 = vmatpush1.bf16.msra.mxu0 %v1128
      %1149 = vmatprep.subr.bf16.mxu0 0
      %1150 = vmatpush2.bf16.msra.mxu0 0
      %1151 = vmatprep.subr.bf16.mxu0 0
      %1152 = vmatpush2.bf16.msra.mxu0 0
      %1153 = vmatprep.subr.bf16.mxu0 0
      %1154 = vmatpush2.bf16.msra.mxu0 0
      %1155 = vmatprep.subr.bf16.mxu0 0
      %1156 = vmatpush2.bf16.msra.mxu0 0
      %1157 = vmatprep.subr.bf16.mxu0 0
      %1158 = vmatpush2.bf16.msra.mxu0 0
      %1159 = vmatprep.subr.bf16.mxu0 0
      %1160 = vmatpush2.bf16.msra.mxu0 0
      %1161 = vmatprep.subr.bf16.mxu0 0
      %1162 = vmatpush2.bf16.msra.mxu0 0
      %1163 = vmatprep.subr.bf16.mxu0 0
      %1164 = vmatpush2.bf16.msra.mxu0 0
      %1165 = vmatprep.mubr.bf16.mxu0 0
      %1166 = vmatmul.mubr.bf16.gmra.mxu0 %v1131
      %v1167 = vpop.f32.mrf.mxu0
      %v1168 = vadd.f32 0.0, %v1167
      %v1169 = vpop.f32.mrf.mxu0
      %v1170 = vpop.f32.mrf.mxu0
      %v1171 = vadd.f32 0.0, %v1170
      %v1172 = vpop.f32.mrf.mxu0
      %1173 = vdwg.mxu0
      %1174 = vrot.lane.b32.xlu0 %v1045, 120
      %v1175 = vpop.permute.xlu0 %1174
      %1176 = vrot.lane.b32.xlu0 %v1045, 88
      %v1177 = vpop.permute.xlu0 %1176
      %v1179 = vsel %vm1055, %v1175, 0
      %v1182 = vsel %vm1055, %v1177, 0
      %1184 = vmatprep.subr.bf16.mxu0 0
      %1185 = vmatpush1.bf16.xpose.msra.mxu0 0
      %1186 = vmatprep.subr.bf16.mxu0 0
      %1187 = vmatpush1.bf16.xpose.msra.mxu0 0
      %1188 = vmatprep.subr.bf16.mxu0 0
      %1189 = vmatpush1.bf16.xpose.msra.mxu0 0
      %1190 = vmatprep.subr.bf16.mxu0 0
      %1191 = vmatpush1.bf16.xpose.msra.mxu0 0
      %1192 = vmatprep.subr.bf16.mxu0 0
      %1193 = vmatpush1.bf16.xpose.msra.mxu0 0
      %1194 = vmatprep.subr.bf16.mxu0 0
      %1195 = vmatpush1.bf16.xpose.msra.mxu0 0
      %1196 = vmatprep.subr.bf16.mxu0 0
      %1197 = vmatpush1.bf16.xpose.msra.mxu0 0
      %1198 = vmatprep.subr.bf16.mxu0 0
      %1199 = vmatpush1.bf16.xpose.msra.mxu0 %v1182
      %1200 = vmatprep.subr.bf16.mxu0 0
      %1201 = vmatpush2.bf16.xpose.msra.mxu0 0
      %1202 = vmatprep.subr.bf16.mxu0 0
      %1203 = vmatpush2.bf16.xpose.msra.mxu0 0
      %1204 = vmatprep.subr.bf16.mxu0 0
      %1205 = vmatpush2.bf16.xpose.msra.mxu0 0
      %1206 = vmatprep.subr.bf16.mxu0 0
      %1207 = vmatpush2.bf16.xpose.msra.mxu0 0
      %1208 = vmatprep.subr.bf16.mxu0 0
      %1209 = vmatpush2.bf16.xpose.msra.mxu0 0
      %1210 = vmatprep.subr.bf16.mxu0 0
      %1211 = vmatpush2.bf16.xpose.msra.mxu0 0
      %1212 = vmatprep.subr.bf16.mxu0 0
      %1213 = vmatpush2.bf16.xpose.msra.mxu0 0
      %1214 = vmatprep.subr.bf16.mxu0 0
      %1215 = vmatpush2.bf16.xpose.msra.mxu0 0
      %1216 = vmatprep.mubr.bf16.mxu0 0
      %1217 = vmatmul.mubr.bf16.gmra.mxu0 %v1179
      %v1218 = vpop.f32.mrf.mxu0
      %v1219 = vadd.f32 %v1050, %v1218
      %v1220 = vpop.f32.mrf.mxu0
      %v1221 = vpop.f32.mrf.mxu0
      %v1222 = vadd.f32 %v1050, %v1221
      %v1223 = vpop.f32.mrf.mxu0
      %1224 = vdwg.mxu0
      %v1225 = vsel %vm1103, %v1219, -inf
      %1226 = vmax.xlane.f32.xlu0 %v1225
      %v1227 = vpop.xlane.xlu0 %1226
      %v1228 = vsel %vm1103, %v1222, -inf
      %1229 = vmax.xlane.f32.xlu0 %v1228
      %v1230 = vpop.xlane.xlu0 %1229
      %v1231 = vsub.f32 %v1219, %v1227
      %v1232 = vsub.f32 %v1222, %v1230
      %v1233 = vmul.f32 %v1231, 1.442695
      %v1234 = vpow.pop %v1233
      %v1235 = vmul.f32 %v1232, 1.442695
      %v1236 = vpow.pop %v1235
      %v1237 = vsel %vm1103, %v1234, 0.0
      %1238 = vadd.xlane.f32.xlu0 %v1237
      %v1239 = vpop.xlane.xlu0 %1238
      %v1240 = vsel %vm1103, %v1236, 0.0
      %1241 = vadd.xlane.f32.xlu0 %v1240
      %v1242 = vpop.xlane.xlu0 %1241
      %v1243 = vrcp.pop %v1239
      %v1244 = vrcp.pop %v1242
      %v1245 = vmul.f32 %v1234, %v1243
      %v1246 = vmul.f32 %v1236, %v1244
      %v1247 = vpack.c.bf16 %v1246, %v1245
      %1248 = vrot.lane.b32.xlu0 %v1045, 56
      %v1249 = vpop.permute.xlu0 %1248
      %v1252 = vsel %vm1103, %v1247, 0
      %1254 = vmatprep.subr.bf16.mxu0 0
      %1255 = vmatpush1.bf16.msra.mxu0 0
      %1256 = vmatprep.subr.bf16.mxu0 0
      %1257 = vmatpush1.bf16.msra.mxu0 0
      %1258 = vmatprep.subr.bf16.mxu0 0
      %1259 = vmatpush1.bf16.msra.mxu0 0
      %1260 = vmatprep.subr.bf16.mxu0 0
      %1261 = vmatpush1.bf16.msra.mxu0 0
      %1262 = vmatprep.subr.bf16.mxu0 0
      %1263 = vmatpush1.bf16.msra.mxu0 0
      %1264 = vmatprep.subr.bf16.mxu0 0
      %1265 = vmatpush1.bf16.msra.mxu0 0
      %1266 = vmatprep.subr.bf16.mxu0 0
      %1267 = vmatpush1.bf16.msra.mxu0 0
      %1268 = vmatprep.subr.bf16.mxu0 0
      %1269 = vmatpush1.bf16.msra.mxu0 %v1249
      %1270 = vmatprep.subr.bf16.mxu0 0
      %1271 = vmatpush2.bf16.msra.mxu0 0
      %1272 = vmatprep.subr.bf16.mxu0 0
      %1273 = vmatpush2.bf16.msra.mxu0 0
      %1274 = vmatprep.subr.bf16.mxu0 0
      %1275 = vmatpush2.bf16.msra.mxu0 0
      %1276 = vmatprep.subr.bf16.mxu0 0
      %1277 = vmatpush2.bf16.msra.mxu0 0
      %1278 = vmatprep.subr.bf16.mxu0 0
      %1279 = vmatpush2.bf16.msra.mxu0 0
      %1280 = vmatprep.subr.bf16.mxu0 0
      %1281 = vmatpush2.bf16.msra.mxu0 0
      %1282 = vmatprep.subr.bf16.mxu0 0
      %1283 = vmatpush2.bf16.msra.mxu0 0
      %1284 = vmatprep.subr.bf16.mxu0 0
      %1285 = vmatpush2.bf16.msra.mxu0 0
      %1286 = vmatprep.mubr.bf16.mxu0 0
      %1287 = vmatmul.mubr.bf16.gmra.mxu0 %v1252
      %v1288 = vpop.f32.mrf.mxu0
      %v1289 = vadd.f32 0.0, %v1288
      %v1290 = vpop.f32.mrf.mxu0
      %v1291 = vpop.f32.mrf.mxu0
      %v1292 = vadd.f32 0.0, %v1291
      %v1293 = vpop.f32.mrf.mxu0
      %1294 = vdwg.mxu0
      %1295 = vrot.lane.b32.xlu0 %v1045, 112
      %v1296 = vpop.permute.xlu0 %1295
      %1297 = vrot.lane.b32.xlu0 %v1045, 80
      %v1298 = vpop.permute.xlu0 %1297
      %v1300 = vsel %vm1055, %v1296, 0
      %v1303 = vsel %vm1055, %v1298, 0
      %1305 = vmatprep.subr.bf16.mxu0 0
      %1306 = vmatpush1.bf16.xpose.msra.mxu0 0
      %1307 = vmatprep.subr.bf16.mxu0 0
      %1308 = vmatpush1.bf16.xpose.msra.mxu0 0
      %1309 = vmatprep.subr.bf16.mxu0 0
      %1310 = vmatpush1.bf16.xpose.msra.mxu0 0
      %1311 = vmatprep.subr.bf16.mxu0 0
      %1312 = vmatpush1.bf16.xpose.msra.mxu0 0
      %1313 = vmatprep.subr.bf16.mxu0 0
      %1314 = vmatpush1.bf16.xpose.msra.mxu0 0
      %1315 = vmatprep.subr.bf16.mxu0 0
      %1316 = vmatpush1.bf16.xpose.msra.mxu0 0
      %1317 = vmatprep.subr.bf16.mxu0 0
      %1318 = vmatpush1.bf16.xpose.msra.mxu0 0
      %1319 = vmatprep.subr.bf16.mxu0 0
      %1320 = vmatpush1.bf16.xpose.msra.mxu0 %v1303
      %1321 = vmatprep.subr.bf16.mxu0 0
      %1322 = vmatpush2.bf16.xpose.msra.mxu0 0
      %1323 = vmatprep.subr.bf16.mxu0 0
      %1324 = vmatpush2.bf16.xpose.msra.mxu0 0
      %1325 = vmatprep.subr.bf16.mxu0 0
      %1326 = vmatpush2.bf16.xpose.msra.mxu0 0
      %1327 = vmatprep.subr.bf16.mxu0 0
      %1328 = vmatpush2.bf16.xpose.msra.mxu0 0
      %1329 = vmatprep.subr.bf16.mxu0 0
      %1330 = vmatpush2.bf16.xpose.msra.mxu0 0
      %1331 = vmatprep.subr.bf16.mxu0 0
      %1332 = vmatpush2.bf16.xpose.msra.mxu0 0
      %1333 = vmatprep.subr.bf16.mxu0 0
      %1334 = vmatpush2.bf16.xpose.msra.mxu0 0
      %1335 = vmatprep.subr.bf16.mxu0 0
      %1336 = vmatpush2.bf16.xpose.msra.mxu0 0
      %1337 = vmatprep.mubr.bf16.mxu0 0
      %1338 = vmatmul.mubr.bf16.gmra.mxu0 %v1300
      %v1339 = vpop.f32.mrf.mxu0
      %v1340 = vadd.f32 %v1050, %v1339
      %v1341 = vpop.f32.mrf.mxu0
      %v1342 = vpop.f32.mrf.mxu0
      %v1343 = vadd.f32 %v1050, %v1342
      %v1344 = vpop.f32.mrf.mxu0
      %1345 = vdwg.mxu0
      %v1346 = vsel %vm1103, %v1340, -inf
      %1347 = vmax.xlane.f32.xlu0 %v1346
      %v1348 = vpop.xlane.xlu0 %1347
      %v1349 = vsel %vm1103, %v1343, -inf
      %1350 = vmax.xlane.f32.xlu0 %v1349
      %v1351 = vpop.xlane.xlu0 %1350
      %v1352 = vsub.f32 %v1340, %v1348
      %v1353 = vsub.f32 %v1343, %v1351
      %v1354 = vmul.f32 %v1352, 1.442695
      %v1355 = vpow.pop %v1354
      %v1356 = vmul.f32 %v1353, 1.442695
      %v1357 = vpow.pop %v1356
      %v1358 = vsel %vm1103, %v1355, 0.0
      %1359 = vadd.xlane.f32.xlu0 %v1358
      %v1360 = vpop.xlane.xlu0 %1359
      %v1361 = vsel %vm1103, %v1357, 0.0
      %1362 = vadd.xlane.f32.xlu0 %v1361
      %v1363 = vpop.xlane.xlu0 %1362
      %v1364 = vrcp.pop %v1360
      %v1365 = vrcp.pop %v1363
      %v1366 = vmul.f32 %v1355, %v1364
      %v1367 = vmul.f32 %v1357, %v1365
      %v1368 = vpack.c.bf16 %v1367, %v1366
      %1369 = vrot.lane.b32.xlu0 %v1045, 48
      %v1370 = vpop.permute.xlu0 %1369
      %v1373 = vsel %vm1103, %v1368, 0
      %1375 = vmatprep.subr.bf16.mxu0 0
      %1376 = vmatpush1.bf16.msra.mxu0 0
      %1377 = vmatprep.subr.bf16.mxu0 0
      %1378 = vmatpush1.bf16.msra.mxu0 0
      %1379 = vmatprep.subr.bf16.mxu0 0
      %1380 = vmatpush1.bf16.msra.mxu0 0
      %1381 = vmatprep.subr.bf16.mxu0 0
      %1382 = vmatpush1.bf16.msra.mxu0 0
      %1383 = vmatprep.subr.bf16.mxu0 0
      %1384 = vmatpush1.bf16.msra.mxu0 0
      %1385 = vmatprep.subr.bf16.mxu0 0
      %1386 = vmatpush1.bf16.msra.mxu0 0
      %1387 = vmatprep.subr.bf16.mxu0 0
      %1388 = vmatpush1.bf16.msra.mxu0 0
      %1389 = vmatprep.subr.bf16.mxu0 0
      %1390 = vmatpush1.bf16.msra.mxu0 %v1370
      %1391 = vmatprep.subr.bf16.mxu0 0
      %1392 = vmatpush2.bf16.msra.mxu0 0
      %1393 = vmatprep.subr.bf16.mxu0 0
      %1394 = vmatpush2.bf16.msra.mxu0 0
      %1395 = vmatprep.subr.bf16.mxu0 0
      %1396 = vmatpush2.bf16.msra.mxu0 0
      %1397 = vmatprep.subr.bf16.mxu0 0
      %1398 = vmatpush2.bf16.msra.mxu0 0
      %1399 = vmatprep.subr.bf16.mxu0 0
      %1400 = vmatpush2.bf16.msra.mxu0 0
      %1401 = vmatprep.subr.bf16.mxu0 0
      %1402 = vmatpush2.bf16.msra.mxu0 0
      %1403 = vmatprep.subr.bf16.mxu0 0
      %1404 = vmatpush2.bf16.msra.mxu0 0
      %1405 = vmatprep.subr.bf16.mxu0 0
      %1406 = vmatpush2.bf16.msra.mxu0 0
      %1407 = vmatprep.mubr.bf16.mxu0 0
      %1408 = vmatmul.mubr.bf16.gmra.mxu0 %v1373
      %v1409 = vpop.f32.mrf.mxu0
      %v1410 = vadd.f32 0.0, %v1409
      %v1411 = vpop.f32.mrf.mxu0
      %v1412 = vpop.f32.mrf.mxu0
      %v1413 = vadd.f32 0.0, %v1412
      %v1414 = vpop.f32.mrf.mxu0
      %1415 = vdwg.mxu0
      %1416 = vrot.lane.b32.xlu0 %v1045, 104
      %v1417 = vpop.permute.xlu0 %1416
      %1418 = vrot.lane.b32.xlu0 %v1045, 72
      %v1419 = vpop.permute.xlu0 %1418
      %v1421 = vsel %vm1055, %v1417, 0
      %v1424 = vsel %vm1055, %v1419, 0
      %1426 = vmatprep.subr.bf16.mxu0 0
      %1427 = vmatpush1.bf16.xpose.msra.mxu0 0
      %1428 = vmatprep.subr.bf16.mxu0 0
      %1429 = vmatpush1.bf16.xpose.msra.mxu0 0
      %1430 = vmatprep.subr.bf16.mxu0 0
      %1431 = vmatpush1.bf16.xpose.msra.mxu0 0
      %1432 = vmatprep.subr.bf16.mxu0 0
      %1433 = vmatpush1.bf16.xpose.msra.mxu0 0
      %1434 = vmatprep.subr.bf16.mxu0 0
      %1435 = vmatpush1.bf16.xpose.msra.mxu0 0
      %1436 = vmatprep.subr.bf16.mxu0 0
      %1437 = vmatpush1.bf16.xpose.msra.mxu0 0
      %1438 = vmatprep.subr.bf16.mxu0 0
      %1439 = vmatpush1.bf16.xpose.msra.mxu0 0
      %1440 = vmatprep.subr.bf16.mxu0 0
      %1441 = vmatpush1.bf16.xpose.msra.mxu0 %v1424
      %1442 = vmatprep.subr.bf16.mxu0 0
      %1443 = vmatpush2.bf16.xpose.msra.mxu0 0
      %1444 = vmatprep.subr.bf16.mxu0 0
      %1445 = vmatpush2.bf16.xpose.msra.mxu0 0
      %1446 = vmatprep.subr.bf16.mxu0 0
      %1447 = vmatpush2.bf16.xpose.msra.mxu0 0
      %1448 = vmatprep.subr.bf16.mxu0 0
      %1449 = vmatpush2.bf16.xpose.msra.mxu0 0
      %1450 = vmatprep.subr.bf16.mxu0 0
      %1451 = vmatpush2.bf16.xpose.msra.mxu0 0
      %1452 = vmatprep.subr.bf16.mxu0 0
      %1453 = vmatpush2.bf16.xpose.msra.mxu0 0
      %1454 = vmatprep.subr.bf16.mxu0 0
      %1455 = vmatpush2.bf16.xpose.msra.mxu0 0
      %1456 = vmatprep.subr.bf16.mxu0 0
      %1457 = vmatpush2.bf16.xpose.msra.mxu0 0
      %1458 = vmatprep.mubr.bf16.mxu0 0
      %1459 = vmatmul.mubr.bf16.gmra.mxu0 %v1421
      %v1460 = vpop.f32.mrf.mxu0
      %v1461 = vadd.f32 %v1050, %v1460
      %v1462 = vpop.f32.mrf.mxu0
      %v1463 = vpop.f32.mrf.mxu0
      %v1464 = vadd.f32 %v1050, %v1463
      %v1465 = vpop.f32.mrf.mxu0
      %1466 = vdwg.mxu0
      %v1467 = vsel %vm1103, %v1461, -inf
      %1468 = vmax.xlane.f32.xlu0 %v1467
      %v1469 = vpop.xlane.xlu0 %1468
      %v1470 = vsel %vm1103, %v1464, -inf
      %1471 = vmax.xlane.f32.xlu0 %v1470
      %v1472 = vpop.xlane.xlu0 %1471
      %v1473 = vsub.f32 %v1461, %v1469
      %v1474 = vsub.f32 %v1464, %v1472
      %v1475 = vmul.f32 %v1473, 1.442695
      %v1476 = vpow.pop %v1475
      %v1477 = vmul.f32 %v1474, 1.442695
      %v1478 = vpow.pop %v1477
      %v1479 = vsel %vm1103, %v1476, 0.0
      %1480 = vadd.xlane.f32.xlu0 %v1479
      %v1481 = vpop.xlane.xlu0 %1480
      %v1482 = vsel %vm1103, %v1478, 0.0
      %1483 = vadd.xlane.f32.xlu0 %v1482
      %v1484 = vpop.xlane.xlu0 %1483
      %v1485 = vrcp.pop %v1481
      %v1486 = vrcp.pop %v1484
      %v1487 = vmul.f32 %v1476, %v1485
      %v1488 = vmul.f32 %v1478, %v1486
      %v1489 = vpack.c.bf16 %v1488, %v1487
      %1490 = vrot.lane.b32.xlu0 %v1045, 40
      %v1491 = vpop.permute.xlu0 %1490
      %v1494 = vsel %vm1103, %v1489, 0
      %1496 = vmatprep.subr.bf16.mxu0 0
      %1497 = vmatpush1.bf16.msra.mxu0 0
      %1498 = vmatprep.subr.bf16.mxu0 0
      %1499 = vmatpush1.bf16.msra.mxu0 0
      %1500 = vmatprep.subr.bf16.mxu0 0
      %1501 = vmatpush1.bf16.msra.mxu0 0
      %1502 = vmatprep.subr.bf16.mxu0 0
      %1503 = vmatpush1.bf16.msra.mxu0 0
      %1504 = vmatprep.subr.bf16.mxu0 0
      %1505 = vmatpush1.bf16.msra.mxu0 0
      %1506 = vmatprep.subr.bf16.mxu0 0
      %1507 = vmatpush1.bf16.msra.mxu0 0
      %1508 = vmatprep.subr.bf16.mxu0 0
      %1509 = vmatpush1.bf16.msra.mxu0 0
      %1510 = vmatprep.subr.bf16.mxu0 0
      %1511 = vmatpush1.bf16.msra.mxu0 %v1491
      %1512 = vmatprep.subr.bf16.mxu0 0
      %1513 = vmatpush2.bf16.msra.mxu0 0
      %1514 = vmatprep.subr.bf16.mxu0 0
      %1515 = vmatpush2.bf16.msra.mxu0 0
      %1516 = vmatprep.subr.bf16.mxu0 0
      %1517 = vmatpush2.bf16.msra.mxu0 0
      %1518 = vmatprep.subr.bf16.mxu0 0
      %1519 = vmatpush2.bf16.msra.mxu0 0
      %1520 = vmatprep.subr.bf16.mxu0 0
      %1521 = vmatpush2.bf16.msra.mxu0 0
      %1522 = vmatprep.subr.bf16.mxu0 0
      %1523 = vmatpush2.bf16.msra.mxu0 0
      %1524 = vmatprep.subr.bf16.mxu0 0
      %1525 = vmatpush2.bf16.msra.mxu0 0
      %1526 = vmatprep.subr.bf16.mxu0 0
      %1527 = vmatpush2.bf16.msra.mxu0 0
      %1528 = vmatprep.mubr.bf16.mxu0 0
      %1529 = vmatmul.mubr.bf16.gmra.mxu0 %v1494
      %v1530 = vpop.f32.mrf.mxu0
      %v1531 = vadd.f32 0.0, %v1530
      %v1532 = vpop.f32.mrf.mxu0
      %v1533 = vpop.f32.mrf.mxu0
      %v1534 = vadd.f32 0.0, %v1533
      %v1535 = vpop.f32.mrf.mxu0
      %1536 = vdwg.mxu0
      %1539 = vrot.lane.b32.xlu0 %v1289, 8
      %v1540 = vpop.permute.xlu0 %1539
      %1541 = vrot.lane.b32.xlu0 %v1292, 8
      %v1542 = vpop.permute.xlu0 %1541
      %1547 = vrot.lane.b32.xlu0 %v1410, 16
      %v1548 = vpop.permute.xlu0 %1547
      %1549 = vrot.lane.b32.xlu0 %v1413, 16
      %v1550 = vpop.permute.xlu0 %1549
      %1555 = vrot.lane.b32.xlu0 %v1531, 24
      %v1556 = vpop.permute.xlu0 %1555
      %1557 = vrot.lane.b32.xlu0 %v1534, 24
      %v1558 = vpop.permute.xlu0 %1557
      %v1561 = vsel %vm1055, %v1168, %v1540
      %v1562 = vsel %vm1055, %v1171, %v1542
      %v1563 = vsel %vm1103, %v1561, %v1548
      %v1564 = vsel %vm1103, %v1562, %v1550
      %vm1565 = vcmask 195584
      %v1566 = vsel %vm1565, %v1563, %v1556
      %v1567 = vsel %vm1565, %v1564, %v1558
      %v1568 = vpack.c.bf16 %v1567, %v1566
      %v1569 = vld [vmem:[%s880] sm:$0xf]
      %v1570 = vld [vmem:[%s880 + $0x4] sm:$0xf]
      %v1571 = vld [vmem:[%s880 + $0x8] sm:$0xf]
      %v1572 = vld [vmem:[%s880 + $0xc] sm:$0xf]
      %v1573 = vld [vmem:[%s883] sm:$0x1]
      %v1575 = vlaneseq
      %v1576 = vshrl.u32 %v1575, 7
      %v1577 = vsub.s32 0, %v1576
      %v1578 = vrot.slane %v1573, %v1577
      %v1584 = vunpack.c.l.b16 %v1569
      %v1585 = vunpack.c.l.b16 %v1570
      %v1586 = vunpack.c.l.b16 %v1571
      %v1587 = vunpack.c.l.b16 %v1572
      %v1588 = vpack.c.b16 %v1585, %v1584
      %v1589 = vpack.c.b16 %v1587, %v1586
      %v1593 = vsel %vm1000, %v1568, 0
      %1595 = vmatprep.subr.bf16.mxu0 0
      %1596 = vmatpush1.bf16.msra.mxu0 0
      %1597 = vmatprep.subr.bf16.mxu0 0
      %1598 = vmatpush1.bf16.msra.mxu0 0
      %1599 = vmatprep.subr.bf16.mxu0 0
      %1600 = vmatpush1.bf16.msra.mxu0 0
      %1601 = vmatprep.subr.bf16.mxu0 0
      %1602 = vmatpush1.bf16.msra.mxu0 0
      %1603 = vmatprep.subr.bf16.mxu0 0
      %1604 = vmatpush1.bf16.msra.mxu0 0
      %1605 = vmatprep.subr.bf16.mxu0 0
      %1606 = vmatpush1.bf16.msra.mxu0 0
      %1607 = vmatprep.subr.bf16.mxu0 0
      %1608 = vmatpush1.bf16.msra.mxu0 %v1589
      %1609 = vmatprep.subr.bf16.mxu0 0
      %1610 = vmatpush1.bf16.msra.mxu0 %v1588
      %1611 = vmatprep.subr.bf16.mxu0 0
      %1612 = vmatpush2.bf16.msra.mxu0 0
      %1613 = vmatprep.subr.bf16.mxu0 0
      %1614 = vmatpush2.bf16.msra.mxu0 0
      %1615 = vmatprep.subr.bf16.mxu0 0
      %1616 = vmatpush2.bf16.msra.mxu0 0
      %1617 = vmatprep.subr.bf16.mxu0 0
      %1618 = vmatpush2.bf16.msra.mxu0 0
      %1619 = vmatprep.subr.bf16.mxu0 0
      %1620 = vmatpush2.bf16.msra.mxu0 0
      %1621 = vmatprep.subr.bf16.mxu0 0
      %1622 = vmatpush2.bf16.msra.mxu0 0
      %1623 = vmatprep.subr.bf16.mxu0 0
      %1624 = vmatpush2.bf16.msra.mxu0 0
      %1625 = vmatprep.subr.bf16.mxu0 0
      %1626 = vmatpush2.bf16.msra.mxu0 0
      %1627 = vmatprep.mubr.bf16.mxu0 0
      %1628 = vmatmul.mubr.bf16.gmra.mxu0 %v1593
      %v1629 = vpop.f32.mrf.mxu0
      %v1630 = vadd.f32 %v1578, %v1629
      %v1631 = vpop.f32.mrf.mxu0
      %v1632 = vpop.f32.mrf.mxu0
      %v1633 = vadd.f32 %v1578, %v1632
      %v1634 = vpop.f32.mrf.mxu0
      %1635 = vdwg.mxu0
      %v1636 = vadd.f32 %v974, %v1630
      %v1637 = vadd.f32 %v975, %v1633
      %v1638 = vld [vmem:[%s886] sm:$0x1]
      %v1639 = vld [vmem:[%s889] sm:$0x1]
      %v1640 = vsel %vm1000, %v1636, 0.0
      %1641 = vadd.xlane.f32.xlu0 %v1640
      %v1642 = vpop.xlane.xlu0 %1641
      %v1643 = vsel %vm1000, %v1637, 0.0
      %1644 = vadd.xlane.f32.xlu0 %v1643
      %v1645 = vpop.xlane.xlu0 %1644
      %v1646 = vrcp.pop 32.0
      %v1647 = vmul.f32 %v1642, %v1646
      %v1648 = vmul.f32 %v1645, %v1646
      %v1649 = vsub.f32 %v1636, %v1647
      %v1650 = vsub.f32 %v1637, %v1648
      %v1651 = vmul.f32 %v1649, %v1649
      %v1652 = vmul.f32 %v1650, %v1650
      %v1653 = vsel %vm1000, %v1651, 0.0
      %1654 = vadd.xlane.f32.xlu0 %v1653
      %v1655 = vpop.xlane.xlu0 %1654
      %v1656 = vsel %vm1000, %v1652, 0.0
      %1657 = vadd.xlane.f32.xlu0 %v1656
      %v1658 = vpop.xlane.xlu0 %1657
      %v1659 = vmul.f32 %v1655, %v1646
      %v1660 = vmul.f32 %v1658, %v1646
      %v1661 = vadd.f32 %v1659, 1e-05
      %v1662 = vadd.f32 %v1660, 1e-05
      %v1663 = vrsqrt.pop %v1661
      %v1664 = vrsqrt.pop %v1662
      %v1665 = vmul.f32 %v1649, %v1663
      %v1666 = vmul.f32 %v1650, %v1664
      %v1668 = vlaneseq
      %v1669 = vshrl.u32 %v1668, 7
      %v1670 = vsub.s32 0, %v1669
      %v1671 = vrot.slane %v1638, %v1670
      %v1673 = vmul.f32 %v1665, %v1671
      %v1674 = vmul.f32 %v1666, %v1671
      %v1676 = vlaneseq
      %v1677 = vshrl.u32 %v1676, 7
      %v1678 = vsub.s32 0, %v1677
      %v1679 = vrot.slane %v1639, %v1678
      %v1681 = vadd.f32 %v1673, %v1679
      %v1682 = vadd.f32 %v1674, %v1679
      %v1683 = vpack.c.bf16 %v1682, %v1681
      %v1684 = vld [vmem:[%s894] sm:$0xf]
      %v1685 = vld [vmem:[%s894 + $0x4] sm:$0xf]
      %v1686 = vld [vmem:[%s894 + $0x8] sm:$0xf]
      %v1687 = vld [vmem:[%s894 + $0xc] sm:$0xf]
      %v1688 = vld [vmem:[%s897] sm:$0x1]
      %v1690 = vlaneseq
      %v1691 = vshrl.u32 %v1690, 7
      %v1692 = vsub.s32 0, %v1691
      %v1693 = vrot.slane %v1688, %v1692
      %v1699 = vunpack.c.l.b16 %v1684
      %v1700 = vunpack.c.l.b16 %v1685
      %v1701 = vunpack.c.l.b16 %v1686
      %v1702 = vunpack.c.l.b16 %v1687
      %v1703 = vpack.c.b16 %v1700, %v1699
      %v1704 = vpack.c.b16 %v1702, %v1701
      %v1708 = vsel %vm1000, %v1683, 0
      %1710 = vmatprep.subr.bf16.mxu0 0
      %1711 = vmatpush1.bf16.msra.mxu0 0
      %1712 = vmatprep.subr.bf16.mxu0 0
      %1713 = vmatpush1.bf16.msra.mxu0 0
      %1714 = vmatprep.subr.bf16.mxu0 0
      %1715 = vmatpush1.bf16.msra.mxu0 0
      %1716 = vmatprep.subr.bf16.mxu0 0
      %1717 = vmatpush1.bf16.msra.mxu0 0
      %1718 = vmatprep.subr.bf16.mxu0 0
      %1719 = vmatpush1.bf16.msra.mxu0 0
      %1720 = vmatprep.subr.bf16.mxu0 0
      %1721 = vmatpush1.bf16.msra.mxu0 0
      %1722 = vmatprep.subr.bf16.mxu0 0
      %1723 = vmatpush1.bf16.msra.mxu0 %v1704
      %1724 = vmatprep.subr.bf16.mxu0 0
      %1725 = vmatpush1.bf16.msra.mxu0 %v1703
      %1726 = vmatprep.subr.bf16.mxu0 0
      %1727 = vmatpush2.bf16.msra.mxu0 0
      %1728 = vmatprep.subr.bf16.mxu0 0
      %1729 = vmatpush2.bf16.msra.mxu0 0
      %1730 = vmatprep.subr.bf16.mxu0 0
      %1731 = vmatpush2.bf16.msra.mxu0 0
      %1732 = vmatprep.subr.bf16.mxu0 0
      %1733 = vmatpush2.bf16.msra.mxu0 0
      %1734 = vmatprep.subr.bf16.mxu0 0
      %1735 = vmatpush2.bf16.msra.mxu0 0
      %1736 = vmatprep.subr.bf16.mxu0 0
      %1737 = vmatpush2.bf16.msra.mxu0 0
      %1738 = vmatprep.subr.bf16.mxu0 0
      %1739 = vmatpush2.bf16.msra.mxu0 0
      %1740 = vmatprep.subr.bf16.mxu0 0
      %1741 = vmatpush2.bf16.msra.mxu0 0
      %1742 = vmatprep.mubr.bf16.mxu0 0
      %1743 = vmatmul.mubr.bf16.gmra.mxu0 %v1708
      %v1744 = vpop.f32.mrf.mxu0
      %v1745 = vadd.f32 %v1693, %v1744
      %v1746 = vpop.f32.mrf.mxu0
      %v1747 = vpop.f32.mrf.mxu0
      %v1748 = vadd.f32 %v1693, %v1747
      %v1749 = vpop.f32.mrf.mxu0
      %1750 = vdwg.mxu0
      %v1751 = vmul.f32 %v1745, %v1745
      %v1752 = vmul.f32 %v1748, %v1748
      %v1753 = vmul.f32 %v1745, %v1751
      %v1754 = vmul.f32 %v1748, %v1752
      %v1755 = vmul.f32 %v1753, 0.044715
      %v1756 = vmul.f32 %v1754, 0.044715
      %v1757 = vadd.f32 %v1745, %v1755
      %v1758 = vadd.f32 %v1748, %v1756
      %v1759 = vmul.f32 %v1757, 0.7978846
      %v1760 = vmul.f32 %v1758, 0.7978846
      %v1761 = vtanh.pop %v1759
      %v1762 = vtanh.pop %v1760
      %v1763 = vadd.f32 %v1761, 1.0
      %v1764 = vadd.f32 %v1762, 1.0
      %v1765 = vmul.f32 %v1763, 0.5
      %v1766 = vmul.f32 %v1764, 0.5
      %v1767 = vmul.f32 %v1745, %v1765
      %v1768 = vmul.f32 %v1748, %v1766
      %v1769 = vpack.c.bf16 %v1768, %v1767
      %v1770 = vld [vmem:[%s902] sm:$0xf]
      %v1771 = vld [vmem:[%s902 + $0x4] sm:$0xf]
      %v1772 = vld [vmem:[%s902 + $0x8] sm:$0xf]
      %v1773 = vld [vmem:[%s902 + $0xc] sm:$0xf]
      %v1774 = vld [vmem:[%s902 + $0x10] sm:$0xf]
      %v1775 = vld [vmem:[%s902 + $0x14] sm:$0xf]
      %v1776 = vld [vmem:[%s902 + $0x18] sm:$0xf]
      %v1777 = vld [vmem:[%s902 + $0x1c] sm:$0xf]
      %v1778 = vld [vmem:[%s905] sm:$0x1]
      %v1780 = vlaneseq
      %v1781 = vshrl.u32 %v1780, 7
      %v1782 = vsub.s32 0, %v1781
      %v1783 = vrot.slane %v1778, %v1782
      %v1793 = vunpack.c.l.b16 %v1770
      %v1794 = vunpack.c.l.b16 %v1771
      %v1795 = vunpack.c.l.b16 %v1772
      %v1796 = vunpack.c.l.b16 %v1773
      %v1797 = vunpack.c.l.b16 %v1774
      %v1798 = vunpack.c.l.b16 %v1775
      %v1799 = vunpack.c.l.b16 %v1776
      %v1800 = vunpack.c.l.b16 %v1777
      %v1801 = vpack.c.b16 %v1794, %v1793
      %v1802 = vpack.c.b16 %v1796, %v1795
      %v1803 = vpack.c.b16 %v1798, %v1797
      %v1804 = vpack.c.b16 %v1800, %v1799
      %vm1809 = vcmask 523264
      %v1811 = vsel %vm1809, %v1769, 0
      %1813 = vmatprep.subr.bf16.mxu0 0
      %1814 = vmatpush1.bf16.msra.mxu0 0
      %1815 = vmatprep.subr.bf16.mxu0 0
      %1816 = vmatpush1.bf16.msra.mxu0 0
      %1817 = vmatprep.subr.bf16.mxu0 0
      %1818 = vmatpush1.bf16.msra.mxu0 0
      %1819 = vmatprep.subr.bf16.mxu0 0
      %1820 = vmatpush1.bf16.msra.mxu0 0
      %1821 = vmatprep.subr.bf16.mxu0 0
      %1822 = vmatpush1.bf16.msra.mxu0 %v1804
      %1823 = vmatprep.subr.bf16.mxu0 0
      %1824 = vmatpush1.bf16.msra.mxu0 %v1803
      %1825 = vmatprep.subr.bf16.mxu0 0
      %1826 = vmatpush1.bf16.msra.mxu0 %v1802
      %1827 = vmatprep.subr.bf16.mxu0 0
      %1828 = vmatpush1.bf16.msra.mxu0 %v1801
      %1829 = vmatprep.subr.bf16.mxu0 0
      %1830 = vmatpush2.bf16.msra.mxu0 0
      %1831 = vmatprep.subr.bf16.mxu0 0
      %1832 = vmatpush2.bf16.msra.mxu0 0
      %1833 = vmatprep.subr.bf16.mxu0 0
      %1834 = vmatpush2.bf16.msra.mxu0 0
      %1835 = vmatprep.subr.bf16.mxu0 0
      %1836 = vmatpush2.bf16.msra.mxu0 0
      %1837 = vmatprep.subr.bf16.mxu0 0
      %1838 = vmatpush2.bf16.msra.mxu0 0
      %1839 = vmatprep.subr.bf16.mxu0 0
      %1840 = vmatpush2.bf16.msra.mxu0 0
      %1841 = vmatprep.subr.bf16.mxu0 0
      %1842 = vmatpush2.bf16.msra.mxu0 0
      %1843 = vmatprep.subr.bf16.mxu0 0
      %1844 = vmatpush2.bf16.msra.mxu0 0
      %1845 = vmatprep.mubr.bf16.mxu0 0
      %1846 = vmatmul.mubr.bf16.gmra.mxu0 %v1811
      %v1847 = vpop.f32.mrf.mxu0
      %v1848 = vadd.f32 %v1783, %v1847
      %v1849 = vpop.f32.mrf.mxu0
      %v1850 = vpop.f32.mrf.mxu0
      %v1851 = vadd.f32 %v1783, %v1850
      %v1852 = vpop.f32.mrf.mxu0
      %1853 = vdwg.mxu0
      %v1854 = vadd.f32 %v1681, %v1848
      %v1855 = vadd.f32 %v1682, %v1851
      %v1856 = vld [vmem:[%s908] sm:$0x1]
      %v1857 = vld [vmem:[%s911] sm:$0x1]
      %v1858 = vsel %vm1000, %v1854, 0.0
      %1859 = vadd.xlane.f32.xlu0 %v1858
      %v1860 = vpop.xlane.xlu0 %1859
      %v1861 = vsel %vm1000, %v1855, 0.0
      %1862 = vadd.xlane.f32.xlu0 %v1861
      %v1863 = vpop.xlane.xlu0 %1862
      %v1864 = vmul.f32 %v1860, %v1646
      %v1865 = vmul.f32 %v1863, %v1646
      %v1866 = vsub.f32 %v1854, %v1864
      %v1867 = vsub.f32 %v1855, %v1865
      %v1868 = vmul.f32 %v1866, %v1866
      %v1869 = vmul.f32 %v1867, %v1867
      %v1870 = vsel %vm1000, %v1868, 0.0
      %1871 = vadd.xlane.f32.xlu0 %v1870
      %v1872 = vpop.xlane.xlu0 %1871
      %v1873 = vsel %vm1000, %v1869, 0.0
      %1874 = vadd.xlane.f32.xlu0 %v1873
      %v1875 = vpop.xlane.xlu0 %1874
      %v1876 = vmul.f32 %v1872, %v1646
      %v1877 = vmul.f32 %v1875, %v1646
      %v1878 = vadd.f32 %v1876, 1e-05
      %v1879 = vadd.f32 %v1877, 1e-05
      %v1880 = vrsqrt.pop %v1878
      %v1881 = vrsqrt.pop %v1879
      %v1882 = vmul.f32 %v1866, %v1880
      %v1883 = vmul.f32 %v1867, %v1881
      %v1885 = vlaneseq
      %v1886 = vshrl.u32 %v1885, 7
      %v1887 = vsub.s32 0, %v1886
      %v1888 = vrot.slane %v1856, %v1887
      %v1890 = vmul.f32 %v1882, %v1888
      %v1891 = vmul.f32 %v1883, %v1888
      %v1893 = vlaneseq
      %v1894 = vshrl.u32 %v1893, 7
      %v1895 = vsub.s32 0, %v1894
      %v1896 = vrot.slane %v1857, %v1895
      %v1898 = vadd.f32 %v1890, %v1896
      %v1899 = vadd.f32 %v1891, %v1896
      %1900 = vst.msk [vmem:[#allocation2] sm:$0xff] %vm1000, %v1898
      %1901 = vst.msk [vmem:[#allocation2 + $0x8] sm:$0xff] %vm1000, %v1899
      %p1902 = scmp.eq.s32.totalorder %s40, 1
      // Predicated region
      $region113: #{summarizer_forward.1} parent=107 // pred_check
        %p1903 = pneg %p1902
      $region114: #{summarizer_forward.1} parent=107 // pred_check_branch
        %1905 = sbr.rel (%p1903) target = $region116
      $region115: #{summarizer_forward.1} parent=107 // pred_region
        %v1906 = vld [vmem:[%s867] sm:$0x1]
        %v1907 = vlaneseq
        %v1908 = vshrl.u32 %v1907, 7
        %v1909 = vadd.s32 %v1908, 8
        %v1910 = vlaneseq
        %v1911 = vand.u32 %v1910, 127
        %vm1912 = vcmp.ne.s32.totalorder %v1906, 0
        %v1913 = vsel %vm1912, %v1911, 4294967295
        %vm1914 = vcmask 24576
        %v1915 = vsel %vm1914, %v1913, 2147483648
        %v1916 = vand.u32 %v1915, 65535
        %v1917 = vshra.s32 %v1915, 16
        %v1918 = vcvt.s32.f32 %v1916
        %v1919 = vcvt.s32.f32 %v1917
        %1920 = vmax.xlane.f32.xlu0 %v1919
        %v1921 = vpop.xlane.xlu0 %1920
        %vm1922 = vcmp.eq.f32.partialorder %v1919, %v1921
        %v1923 = vsel %vm1922, %v1918, -inf
        %1924 = vmax.xlane.f32.xlu0 %v1923
        %v1925 = vpop.xlane.xlu0 %1924
        %v1926 = vcvt.f32.s32 %v1925
        %v1927 = vcvt.f32.s32 %v1921
        %v1928 = vshll.u32 %v1927, 16
        %v1929 = vadd.s32 %v1928, %v1926
        %v1930 = vlaneseq
        %v1931 = vshrl.u32 %v1930, 7
        %v1932 = vsub.s32 0, %v1931
        %v1933 = vrot.slane %v1929, %v1932
        %vm1934 = vcmp.le.s32.totalorder %v1908, %v1933
        %vm1935 = vcmp.le.s32.totalorder %v1909, %v1933
        %v1936 = vsel %vm1934, 1, 0
        %v1937 = vsel %vm1935, 1, 0
        %v1938 = vcvt.s32.f32 %v1936
        %v1939 = vcvt.s32.f32 %v1937
        %v1940 = vadd.s32 %v1929, 1
        %vm1941 = vcmp.gt.s32.totalorder %v1940, 1
        %v1942 = vsel %vm1941, %v1940, 1
        %v1943 = vcvt.s32.f32 %v1942
        %v1944 = vmul.f32 %v1898, %v1938
        %v1945 = vmul.f32 %v1899, %v1939
        %v1946 = vsel %vm1000, %v1944, 0.0
        %v1947 = vsel %vm1000, %v1945, 0.0
        %v1948 = vadd.f32 %v1946, %v1947
        %v1949 = vrot.slane %v1948, 4
        %v1950 = vadd.f32 %v1948, %v1949
        %v1951 = vrot.slane %v1950, 2
        %v1952 = vadd.f32 %v1950, %v1951
        %v1953 = vrot.slane %v1952, 1
        %v1954 = vadd.f32 %v1952, %v1953
        %v1955 = vrcp.pop %v1943
        %v1956 = vmul.f32 %v1954, %v1955
        %v1957 = vld [vmem:[%s17] sm:$0xff]
        %v1958 = vld [vmem:[%s17 + $0x8] sm:$0xff]
        %v1959 = vld [vmem:[%s17 + $0x10] sm:$0xff]
        %v1960 = vld [vmem:[%s17 + $0x18] sm:$0xff]
        %v1961 = vld [vmem:[%s18] sm:$0x1]
        %v1963 = vsel %vm1000, %v1956, 0
        %1965 = vmatprep.subr.mxu0 0.0
        %1966 = vmatpush1.msra.mxu0 0.0
        %1967 = vmatprep.subr.mxu0 0.0
        %1968 = vmatpush1.msra.mxu0 0.0
        %1969 = vmatprep.subr.mxu0 0.0
        %1970 = vmatpush1.msra.mxu0 0.0
        %1971 = vmatprep.subr.mxu0 0.0
        %1972 = vmatpush1.msra.mxu0 0.0
        %1973 = vmatprep.subr.mxu0 0.0
        %1974 = vmatpush1.msra.mxu0 0.0
        %1975 = vmatprep.subr.mxu0 0.0
        %1976 = vmatpush1.msra.mxu0 0.0
        %1977 = vmatprep.subr.mxu0 0.0
        %1978 = vmatpush1.msra.mxu0 0.0
        %1979 = vmatprep.subr.mxu0 0.0
        %1980 = vmatpush1.msra.mxu0 0.0
        %1981 = vmatprep.subr.mxu0 0.0
        %1982 = vmatpush1.msra.mxu0 0.0
        %1983 = vmatprep.subr.mxu0 0.0
        %1984 = vmatpush1.msra.mxu0 0.0
        %1985 = vmatprep.subr.mxu0 0.0
        %1986 = vmatpush1.msra.mxu0 0.0
        %1987 = vmatprep.subr.mxu0 0.0
        %1988 = vmatpush1.msra.mxu0 0.0
        %1989 = vmatprep.subr.mxu0 0.0
        %1990 = vmatpush1.msra.mxu0 %v1960
        %1991 = vmatprep.subr.mxu0 0.0
        %1992 = vmatpush1.msra.mxu0 %v1959
        %1993 = vmatprep.subr.mxu0 0.0
        %1994 = vmatpush1.msra.mxu0 %v1958
        %1995 = vmatprep.subr.mxu0 0.0
        %1996 = vmatpush1.msra.mxu0 %v1957
        %1997 = vmatprep.subr.mxu0 0.0
        %1998 = vmatpush2.msra.mxu0 0.0
        %1999 = vmatprep.subr.mxu0 0.0
        %2000 = vmatpush2.msra.mxu0 0.0
        %2001 = vmatprep.subr.mxu0 0.0
        %2002 = vmatpush2.msra.mxu0 0.0
        %2003 = vmatprep.subr.mxu0 0.0
        %2004 = vmatpush2.msra.mxu0 0.0
        %2005 = vmatprep.subr.mxu0 0.0
        %2006 = vmatpush2.msra.mxu0 0.0
        %2007 = vmatprep.subr.mxu0 0.0
        %2008 = vmatpush2.msra.mxu0 0.0
        %2009 = vmatprep.subr.mxu0 0.0
        %2010 = vmatpush2.msra.mxu0 0.0
        %2011 = vmatprep.subr.mxu0 0.0
        %2012 = vmatpush2.msra.mxu0 0.0
        %2013 = vmatprep.subr.mxu0 0.0
        %2014 = vmatpush2.msra.mxu0 0.0
        %2015 = vmatprep.subr.mxu0 0.0
        %2016 = vmatpush2.msra.mxu0 0.0
        %2017 = vmatprep.subr.mxu0 0.0
        %2018 = vmatpush2.msra.mxu0 0.0
        %2019 = vmatprep.subr.mxu0 0.0
        %2020 = vmatpush2.msra.mxu0 0.0
        %2021 = vmatprep.subr.mxu0 0.0
        %2022 = vmatpush2.msra.mxu0 0.0
        %2023 = vmatprep.subr.mxu0 0.0
        %2024 = vmatpush2.msra.mxu0 0.0
        %2025 = vmatprep.subr.mxu0 0.0
        %2026 = vmatpush2.msra.mxu0 0.0
        %2027 = vmatprep.subr.mxu0 0.0
        %2028 = vmatpush2.msra.mxu0 0.0
        %2029 = vmatprep.mubr.f32.mxu0 0.0
        %2030 = vmatmul.mubr.f32.gmra.mxu0 %v1963
        %v2031 = vpop.f32.mrf.mxu0
        %v2032 = vadd.f32 %v1961, %v2031
        %v2033 = vpop.f32.mrf.mxu0
        %2034 = vdwg.mxu0
        %vm2035 = vcmask 57344
        %v2036 = vsel %vm2035, %v2032, -inf
        %2037 = vmax.xlane.f32.xlu0 %v2036
        %v2038 = vpop.xlane.xlu0 %2037
        %v2039 = vsub.f32 %v2032, %v2038
        %v2040 = vmul.f32 %v2039, 1.442695
        %v2041 = vpow.pop %v2040
        %v2042 = vsel %vm2035, %v2041, 0.0
        %2043 = vadd.xlane.f32.xlu0 %v2042
        %v2044 = vpop.xlane.xlu0 %2043
        %v2045 = vrcp.pop %v2044
        %v2046 = vmul.f32 %v2041, %v2045
        %v2047 = vld [vmem:[%s19] sm:$0xff]
        %v2049 = vsel %vm1055, %v2046, 0
        %2051 = vmatprep.subr.mxu0 0.0
        %2052 = vmatpush1.msra.mxu0 0.0
        %2053 = vmatprep.subr.mxu0 0.0
        %2054 = vmatpush1.msra.mxu0 0.0
        %2055 = vmatprep.subr.mxu0 0.0
        %2056 = vmatpush1.msra.mxu0 0.0
        %2057 = vmatprep.subr.mxu0 0.0
        %2058 = vmatpush1.msra.mxu0 0.0
        %2059 = vmatprep.subr.mxu0 0.0
        %2060 = vmatpush1.msra.mxu0 0.0
        %2061 = vmatprep.subr.mxu0 0.0
        %2062 = vmatpush1.msra.mxu0 0.0
        %2063 = vmatprep.subr.mxu0 0.0
        %2064 = vmatpush1.msra.mxu0 0.0
        %2065 = vmatprep.subr.mxu0 0.0
        %2066 = vmatpush1.msra.mxu0 0.0
        %2067 = vmatprep.subr.mxu0 0.0
        %2068 = vmatpush1.msra.mxu0 0.0
        %2069 = vmatprep.subr.mxu0 0.0
        %2070 = vmatpush1.msra.mxu0 0.0
        %2071 = vmatprep.subr.mxu0 0.0
        %2072 = vmatpush1.msra.mxu0 0.0
        %2073 = vmatprep.subr.mxu0 0.0
        %2074 = vmatpush1.msra.mxu0 0.0
        %2075 = vmatprep.subr.mxu0 0.0
        %2076 = vmatpush1.msra.mxu0 0.0
        %2077 = vmatprep.subr.mxu0 0.0
        %2078 = vmatpush1.msra.mxu0 0.0
        %2079 = vmatprep.subr.mxu0 0.0
        %2080 = vmatpush1.msra.mxu0 0.0
        %2081 = vmatprep.subr.mxu0 0.0
        %2082 = vmatpush1.msra.mxu0 %v2047
        %2083 = vmatprep.subr.mxu0 0.0
        %2084 = vmatpush2.msra.mxu0 0.0
        %2085 = vmatprep.subr.mxu0 0.0
        %2086 = vmatpush2.msra.mxu0 0.0
        %2087 = vmatprep.subr.mxu0 0.0
        %2088 = vmatpush2.msra.mxu0 0.0
        %2089 = vmatprep.subr.mxu0 0.0
        %2090 = vmatpush2.msra.mxu0 0.0
        %2091 = vmatprep.subr.mxu0 0.0
        %2092 = vmatpush2.msra.mxu0 0.0
        %2093 = vmatprep.subr.mxu0 0.0
        %2094 = vmatpush2.msra.mxu0 0.0
        %2095 = vmatprep.subr.mxu0 0.0
        %2096 = vmatpush2.msra.mxu0 0.0
        %2097 = vmatprep.subr.mxu0 0.0
        %2098 = vmatpush2.msra.mxu0 0.0
        %2099 = vmatprep.subr.mxu0 0.0
        %2100 = vmatpush2.msra.mxu0 0.0
        %2101 = vmatprep.subr.mxu0 0.0
        %2102 = vmatpush2.msra.mxu0 0.0
        %2103 = vmatprep.subr.mxu0 0.0
        %2104 = vmatpush2.msra.mxu0 0.0
        %2105 = vmatprep.subr.mxu0 0.0
        %2106 = vmatpush2.msra.mxu0 0.0
        %2107 = vmatprep.subr.mxu0 0.0
        %2108 = vmatpush2.msra.mxu0 0.0
        %2109 = vmatprep.subr.mxu0 0.0
        %2110 = vmatpush2.msra.mxu0 0.0
        %2111 = vmatprep.subr.mxu0 0.0
        %2112 = vmatpush2.msra.mxu0 0.0
        %2113 = vmatprep.subr.mxu0 0.0
        %2114 = vmatpush2.msra.mxu0 0.0
        %2115 = vmatprep.mubr.f32.mxu0 0.0
        %2116 = vmatmul.mubr.f32.gmra.mxu0 %v2049
        %v2117 = vpop.f32.mrf.mxu0
        %v2118 = vadd.f32 0.0, %v2117
        %v2119 = vpop.f32.mrf.mxu0
        %2120 = vdwg.mxu0
        %vm2121 = vcmp.ge.s32.totalorder %v1908, 0
        %vm2122 = vcmp.ge.s32.totalorder %v1909, 0
        %v2123 = vlaneseq
        %v2124 = vshrl.u32 %v2123, 7
        %v2125 = vsub.s32 0, %v2124
        %v2126 = vrot.slane %v1906, %v2125
        %vm2127 = vcmp.le.s32.totalorder %v1908, %v2126
        %vm2128 = vcmp.le.s32.totalorder %v1909, %v2126
        %vm2129 = vmand %vm2121, %vm2127
        %vm2130 = vmand %vm2122, %vm2128
        %v2131 = vsel %vm2129, 1, 0
        %v2132 = vsel %vm2130, 1, 0
        %v2133 = vcvt.s32.f32 %v2131
        %v2134 = vcvt.s32.f32 %v2132
        %v2135 = vadd.s32 %v1906, 1
        %vm2136 = vcmp.gt.s32.totalorder %v2135, 1
        %v2137 = vsel %vm2136, %v2135, 1
        %v2138 = vcvt.s32.f32 %v2137
        %2140 = vset.pattern.permute.xlu0 0
        %2141 = vperm.xlu0 %2140, %v2133
        %v2142 = vpop.permute.xlu0 %2141
        %2145 = vset.pattern.permute.xlu0 0
        %2146 = vperm.xlu0 %2145, %v2134
        %v2147 = vpop.permute.xlu0 %2146
        %v2149 = vmul.f32 %v1898, %v2142
        %v2150 = vmul.f32 %v1899, %v2147
        %v2151 = vsel %vm1000, %v2149, 0.0
        %v2152 = vsel %vm1000, %v2150, 0.0
        %v2153 = vadd.f32 %v2151, %v2152
        %v2154 = vrot.slane %v2153, 4
        %v2155 = vadd.f32 %v2153, %v2154
        %v2156 = vrot.slane %v2155, 2
        %v2157 = vadd.f32 %v2155, %v2156
        %v2158 = vrot.slane %v2157, 1
        %v2159 = vadd.f32 %v2157, %v2158
        %2161 = vset.pattern.permute.xlu0 0
        %2162 = vperm.xlu0 %2161, %v2138
        %v2163 = vpop.permute.xlu0 %2162
        %v2165 = vlaneseq
        %v2166 = vshrl.u32 %v2165, 7
        %v2167 = vsub.s32 0, %v2166
        %v2168 = vrot.slane %v2163, %v2167
        %v2169 = vrcp.pop %v2168
        %v2170 = vmul.f32 %v2159, %v2169
        %v2171 = vld [vmem:[%s20] sm:$0x1]
        %v2172 = vmul.f32 %v2170, %v2171
        %vm2173 = vcmask 253952
        %v2174 = vsel %vm2173, %v2172, 0.0
        %2175 = vadd.xlane.f32.xlu0 %v2174
        %v2176 = vpop.xlane.xlu0 %2175
        %v2177 = vld [vmem:[#allocation3] sm:$0x1]
        %v2178 = vadd.f32 %v2176, %v2177
        %2179 = vrot.lane.b32.xlu0 %v1906, 125
        %v2180 = vpop.permute.xlu0 %2179
        %vm2181 = vcmp.eq.s32.totalorder %v1906, %v2180
        %vm2182 = vcmp.eq.s32.totalorder %v1906, 0
        %v2183 = vsel %vm2182, 1, 0
        %2184 = vrot.lane.b32.xlu0 %v2183, 127
        %v2185 = vpop.permute.xlu0 %2184
        %vm2186 = vcmp.ne.s32.totalorder %v2185, 0
        %vm2187 = vmor %vm2181, %vm2186
        %v2188 = vsel %vm2187, 1, 0
        %v2189 = vcvt.s32.f32 %v2188
        %v2190 = vsub.f32 1.0, %v2189
        %v2191 = vlaneseq
        %v2192 = vshrl.u32 %v2191, 7
        %v2193 = vsub.s32 0, %v2192
        %v2194 = vrot.slane %v2135, %v2193
        %vm2195 = vcmp.ge.s32.totalorder %v1908, %v2194
        %vm2196 = vcmp.ge.s32.totalorder %v1909, %v2194
        %v2197 = vsel %vm2127, 1, 0
        %v2198 = vsel %vm2128, 1, 0
        %2199 = vrot.lane.b32.xlu0 %v2197, 127
        %v2200 = vpop.permute.xlu0 %2199
        %2201 = vrot.lane.b32.xlu0 %v2198, 127
        %v2202 = vpop.permute.xlu0 %2201
        %vm2203 = vcmp.ne.s32.totalorder %v2200, 0
        %vm2204 = vcmp.ne.s32.totalorder %v2202, 0
        %vm2205 = vmand %vm2195, %vm2203
        %vm2206 = vmand %vm2196, %vm2204
        %v2207 = vsel %vm2205, 1, 0
        %v2208 = vsel %vm2206, 1, 0
        %v2209 = vcvt.s32.f32 %v2207
        %v2210 = vcvt.s32.f32 %v2208
        %2211 = vrot.lane.b32.xlu0 %v2135, 1
        %v2212 = vpop.permute.xlu0 %2211
        %v2213 = vsub.s32 %v1906, %v2212
        %v2214 = vadd.s32 %v2213, 1
        %vm2215 = vcmp.gt.s32.totalorder %v2214, 1
        %v2216 = vsel %vm2215, %v2214, 1
        %v2217 = vcvt.s32.f32 %v2216
        %2219 = vset.pattern.permute.xlu0 0
        %2220 = vperm.xlu0 %2219, %v2209
        %v2221 = vpop.permute.xlu0 %2220
        %2224 = vset.pattern.permute.xlu0 0
        %2225 = vperm.xlu0 %2224, %v2210
        %v2226 = vpop.permute.xlu0 %2225
        %v2228 = vmul.f32 %v1898, %v2221
        %v2229 = vmul.f32 %v1899, %v2226
        %v2230 = vsel %vm1000, %v2228, 0.0
        %v2231 = vsel %vm1000, %v2229, 0.0
        %v2232 = vadd.f32 %v2230, %v2231
        %v2233 = vrot.slane %v2232, 4
        %v2234 = vadd.f32 %v2232, %v2233
        %v2235 = vrot.slane %v2234, 2
        %v2236 = vadd.f32 %v2234, %v2235
        %v2237 = vrot.slane %v2236, 1
        %v2238 = vadd.f32 %v2236, %v2237
        %2240 = vset.pattern.permute.xlu0 0
        %2241 = vperm.xlu0 %2240, %v2190
        %v2242 = vpop.permute.xlu0 %2241
        %v2244 = vlaneseq
        %v2245 = vshrl.u32 %v2244, 7
        %v2246 = vsub.s32 0, %v2245
        %v2247 = vrot.slane %v2242, %v2246
        %v2248 = vmul.f32 %v2247, %v2238
        %2250 = vset.pattern.permute.xlu0 1
        %2251 = vperm.xlu0 %2250, %v2217
        %v2252 = vpop.permute.xlu0 %2251
        %v2254 = vlaneseq
        %v2255 = vshrl.u32 %v2254, 7
        %v2256 = vsub.s32 0, %v2255
        %v2257 = vrot.slane %v2252, %v2256
        %v2258 = vrcp.pop %v2257
        %v2259 = vmul.f32 %v2248, %v2258
        %v2260 = vmul.f32 %v2259, %v2171
        %v2261 = vsel %vm2173, %v2260, 0.0
        %2262 = vadd.xlane.f32.xlu0 %v2261
        %v2263 = vpop.xlane.xlu0 %2262
        %v2264 = vadd.f32 %v2263, %v2177
        %2265 = vrot.lane.b32.xlu0 %v1906, 126
        %v2266 = vpop.permute.xlu0 %2265
        %vm2267 = vcmp.eq.s32.totalorder %v1906, %v2266
        %vm2268 = vmor %vm2267, %vm2186
        %v2269 = vsel %vm2268, 1, 0
        %v2270 = vcvt.s32.f32 %v2269
        %v2271 = vsub.f32 1.0, %v2270
        %2273 = vrot.lane.b32.xlu0 %v2271, 127
        %v2274 = vpop.permute.xlu0 %2273
        %v2276 = vmul.f32 %v2190, %v2274
        %2277 = vset.pattern.permute.xlu0 1
        %2278 = vperm.xlu0 %2277, %v2209
        %v2279 = vpop.permute.xlu0 %2278
        %2281 = vset.pattern.permute.xlu0 1
        %2282 = vperm.xlu0 %2281, %v2210
        %v2283 = vpop.permute.xlu0 %2282
        %v2285 = vmul.f32 %v1898, %v2279
        %v2286 = vmul.f32 %v1899, %v2283
        %v2287 = vsel %vm1000, %v2285, 0.0
        %v2288 = vsel %vm1000, %v2286, 0.0
        %v2289 = vadd.f32 %v2287, %v2288
        %v2290 = vrot.slane %v2289, 4
        %v2291 = vadd.f32 %v2289, %v2290
        %v2292 = vrot.slane %v2291, 2
        %v2293 = vadd.f32 %v2291, %v2292
        %v2294 = vrot.slane %v2293, 1
        %v2295 = vadd.f32 %v2293, %v2294
        %2297 = vset.pattern.permute.xlu0 0
        %2298 = vperm.xlu0 %2297, %v2276
        %v2299 = vpop.permute.xlu0 %2298
        %v2301 = vlaneseq
        %v2302 = vshrl.u32 %v2301, 7
        %v2303 = vsub.s32 0, %v2302
        %v2304 = vrot.slane %v2299, %v2303
        %v2305 = vmul.f32 %v2304, %v2295
        %2306 = vset.pattern.permute.xlu0 2
        %2307 = vperm.xlu0 %2306, %v2217
        %v2308 = vpop.permute.xlu0 %2307
        %v2310 = vlaneseq
        %v2311 = vshrl.u32 %v2310, 7
        %v2312 = vsub.s32 0, %v2311
        %v2313 = vrot.slane %v2308, %v2312
        %v2314 = vrcp.pop %v2313
        %v2315 = vmul.f32 %v2305, %v2314
        %v2316 = vmul.f32 %v2315, %v2171
        %v2317 = vsel %vm2173, %v2316, 0.0
        %2318 = vadd.xlane.f32.xlu0 %v2317
        %v2319 = vpop.xlane.xlu0 %2318
        %v2320 = vadd.f32 %v2319, %v2177
        %2321 = vrot.lane.b32.xlu0 %v1906, 127
        %v2322 = vpop.permute.xlu0 %2321
        %vm2323 = vcmp.eq.s32.totalorder %v1906, %v2322
        %vm2324 = vmor %vm2323, %vm2186
        %v2325 = vsel %vm2324, 1, 0
        %v2326 = vcvt.s32.f32 %v2325
        %v2327 = vsub.f32 1.0, %v2326
        %2329 = vrot.lane.b32.xlu0 %v2327, 126
        %v2330 = vpop.permute.xlu0 %2329
        %v2332 = vmul.f32 %v2276, %v2330
        %2333 = vset.pattern.permute.xlu0 2
        %2334 = vperm.xlu0 %2333, %v2209
        %v2335 = vpop.permute.xlu0 %2334
        %2337 = vset.pattern.permute.xlu0 2
        %2338 = vperm.xlu0 %2337, %v2210
        %v2339 = vpop.permute.xlu0 %2338
        %v2341 = vmul.f32 %v1898, %v2335
        %v2342 = vmul.f32 %v1899, %v2339
        %v2343 = vsel %vm1000, %v2341, 0.0
        %v2344 = vsel %vm1000, %v2342, 0.0
        %v2345 = vadd.f32 %v2343, %v2344
        %v2346 = vrot.slane %v2345, 4
        %v2347 = vadd.f32 %v2345, %v2346
        %v2348 = vrot.slane %v2347, 2
        %v2349 = vadd.f32 %v2347, %v2348
        %v2350 = vrot.slane %v2349, 1
        %v2351 = vadd.f32 %v2349, %v2350
        %2353 = vset.pattern.permute.xlu0 0
        %2354 = vperm.xlu0 %2353, %v2332
        %v2355 = vpop.permute.xlu0 %2354
        %v2357 = vlaneseq
        %v2358 = vshrl.u32 %v2357, 7
        %v2359 = vsub.s32 0, %v2358
        %v2360 = vrot.slane %v2355, %v2359
        %v2361 = vmul.f32 %v2360, %v2351
        %2362 = vset.pattern.permute.xlu0 3
        %2363 = vperm.xlu0 %2362, %v2217
        %v2364 = vpop.permute.xlu0 %2363
        %v2366 = vlaneseq
        %v2367 = vshrl.u32 %v2366, 7
        %v2368 = vsub.s32 0, %v2367
        %v2369 = vrot.slane %v2364, %v2368
        %v2370 = vrcp.pop %v2369
        %v2371 = vmul.f32 %v2361, %v2370
        %v2372 = vmul.f32 %v2371, %v2171
        %v2373 = vsel %vm2173, %v2372, 0.0
        %2374 = vadd.xlane.f32.xlu0 %v2373
        %v2375 = vpop.xlane.xlu0 %2374
        %v2376 = vadd.f32 %v2375, %v2177
        %2378 = vrot.lane.b32.xlu0 %v2259, 32
        %v2379 = vpop.permute.xlu0 %2378
        %2382 = vrot.lane.b32.xlu0 %v2315, 64
        %v2383 = vpop.permute.xlu0 %2382
        %2386 = vrot.lane.b32.xlu0 %v2371, 96
        %v2387 = vpop.permute.xlu0 %2386
        %v2389 = vsel %vm1000, %v2170, %v2379
        %v2390 = vsel %vm1809, %v2389, %v2383
        %vm2391 = vcmask 785408
        %v2392 = vsel %vm2391, %v2390, %v2387
        %2394 = vrot.lane.b32.xlu0 %v2264, 1
        %v2395 = vpop.permute.xlu0 %2394
        %2398 = vrot.lane.b32.xlu0 %v2320, 2
        %v2399 = vpop.permute.xlu0 %2398
        %2402 = vrot.lane.b32.xlu0 %v2376, 3
        %v2403 = vpop.permute.xlu0 %2402
        %vm2405 = vcmask 7168
        %v2406 = vsel %vm2405, %v2178, %v2395
        %vm2407 = vcmask 15360
        %v2408 = vsel %vm2407, %v2406, %v2399
        %vm2409 = vcmask 23552
        %v2410 = vsel %vm2409, %v2408, %v2403
        %v2411 = vxor.u32 %v2410, 2147483648
        %v2412 = vmul.f32 %v2411, 1.442695
        %v2413 = vpow.pop %v2412
        %v2414 = vadd.f32 %v2413, 1.0
        %v2415 = vrcp.pop %v2414
        %v2416 = vmul.f32 1.0, %v2415
        %v2418 = vlaneseq
        %v2419 = vshrl.u32 %v2418, 7
        %v2420 = vsub.s32 0, %v2419
        %v2421 = vrot.slane %v971, %v2420
        %2422 = vrot.lane.b32.xlu0 %v2421, 112
        %v2423 = vpop.permute.xlu0 %2422
        %v2425 = vmul.f32 %v2416, %v2423
        %v2426 = vsel %vm1000, %v1956, 0.0
        %v2427 = vsel %vm1000, %v2118, 0.0
        %vm2428 = vcmask 31744
        %v2429 = vsel %vm2428, %v2425, 0.0
        %v2434 = vcombine.low %v2392, %v2426
        %v2435 = vcombine.low %v2427, %v2429
        %v2437 = vunpack.c.l.s4 1966171168
        %v2438 = vunpack.c.0.s8 %v2437
        %v2439 = vlaneseq
        %v2440 = vshrl.u32 %v2439, 7
        %v2441 = vsub.s32 %v2438, %v2440
        %v2442 = vrot.slane %v2434, %v2441
        %v2444 = vunpack.c.l.s4 1966171168
        %v2445 = vunpack.c.0.s8 %v2444
        %v2446 = vlaneseq
        %v2447 = vshrl.u32 %v2446, 7
        %v2448 = vsub.s32 %v2445, %v2447
        %v2449 = vrot.slane %v2435, %v2448
        %v2450 = vcombine.low %v2442, %v2449
        %v2452 = vunpack.c.l.s4 1966171168
        %v2453 = vunpack.c.0.s8 %v2452
        %v2454 = vlaneseq
        %v2455 = vshrl.u32 %v2454, 7
        %v2456 = vsub.s32 %v2453, %v2455
        %v2457 = vrot.slane %v2450, %v2456
        %v2459 = vlaneseq
        %vm2460 = vcmp.ge.s32.totalorder %v2459, 0
        %vm2461 = vcmp.lt.s32.totalorder %v2459, 512
        %vm2462 = vmand %vm2460, %vm2461
        %2463 = vst.msk [vmem:[%s915] sm:$0xf] %vm2462, %v2457
      $region116: #{summarizer_forward.1} parent=107 // pred_fallthru
        _
      %p2464 = scmp.lt.s32.totalorder %s39, 1
      %s2465 = scalar_select %p2464, %s39, 1
      %s2466 = smul.addr %s2465, 4
      %s2467 = scalar_lea.vmem %s22, %s2466
      // Predicated region
      $region117: #{summarizer_forward.1} parent=107 // pred_check
        %p2468 = pneg %p602
      $region118: #{summarizer_forward.1} parent=107 // pred_check_branch
        %2470 = sbr.rel (%p2468) target = $region120
      $region119: #{summarizer_forward.1} parent=107 // pred_region
        _
      $region120: #{summarizer_forward.1} parent=107 // pred_fallthru
        _
    $region108: #{summarizer_forward.1} parent=5 // pred_fallthru
      _
    %p2471 = scmp.le.s32.totalorder 2, %s30
    // Predicated region
    $region121: #{summarizer_forward.1} parent=5 // pred_check
      %p2472 = pneg %p2471
    $region122: #{summarizer_forward.1} parent=5 // pred_check_branch
      %2474 = sbr.rel (%p2472) target = $region124
    $region123: #{summarizer_forward.1} parent=5 // pred_region
      %s2475 = ssub.s32 %s30, 2
      // Predicated region
      $region125: #{summarizer_forward.1} parent=123 // pred_check
        %p2476 = pneg %p608
      $region126: #{summarizer_forward.1} parent=123 // pred_check_branch
        %2478 = sbr.rel (%p2476) target = $region128
      $region127: #{summarizer_forward.1} parent=123 // pred_region
        %p2479 = scmp.lt.s32.totalorder %s41, 1
        %s2480 = scalar_select %p2479, %s41, 1
        %s2481 = smul.addr %s2480, 4
        %s2482 = scalar_lea.vmem %s22, %s2481
      $region128: #{summarizer_forward.1} parent=123 // pred_fallthru
        _
    $region124: #{summarizer_forward.1} parent=5 // pred_fallthru
      _
  $region6: #{summarizer_forward.1} parent=0 // loop_footer
    %s34 = sadd.s32 1, %s30
  $region7: #{summarizer_forward.1} parent=0 // loop_footer_branch
    %29 = sbr.rel target = $region3
  $region8: #{summarizer_forward.1} parent=0 // loop_exit
    _

</llo_original>
